<compile_context>
chip_gen: v5e
topology: v5e:2x2
jax: 0.10.0
libtpu: 0.0.40
codegen_flags: <defaults>
</compile_context>

<pallas_src>
import functools

import jax
import jax.numpy as jnp
from jax.experimental import pallas as pl
from jax.experimental.pallas import tpu as pltpu


# ------------------------------- helpers --------------------------------------

def _round_up(x, m):
    return -(-x // m) * m


def _pick_tile(size, max_t, align=128):
    """Largest multiple of `align` <= max_t that divides `size`; else pad `size`."""
    upper = (min(max_t, max(size, align)) // align) * align
    for t in range(upper, align - 1, -align):
        if size % t == 0:
            return t, size
    t = min(max_t, _round_up(size, align))
    return t, _round_up(size, t)


# ----------------------------- Linear (hot path) -------------------------------

def _linear_kernel(x_ref, wt_ref, b_ref, o_ref):
    """out = x @ W^T + b.  bf16 operands, f32 output tile resident across the K axis."""
    k = pl.program_id(2)

    @pl.when(k == 0)
    def _():
        o_ref[...] = jnp.broadcast_to(b_ref[...], o_ref.shape)

    o_ref[...] += jnp.dot(x_ref[...], wt_ref[...],
                          preferred_element_type=jnp.float32)


def _choose_tm(B, tm_max=1024):
    """(tm, b_pad): full-B block if small, else a divisor of B (no pad), else min-waste pad."""
    if B <= tm_max:
        return B, B
    for t in range(tm_max, 127, -128):          # divisor of B -> no XLA pad pass over x
        if B % t == 0:
            return t, B
    best_t, best_pad = tm_max, _round_up(B, tm_max)
    for t in range(tm_max, 127, -128):          # otherwise minimize padded waste
        bp = _round_up(B, t)
        if bp < best_pad:
            best_t, best_pad = t, bp
    return best_t, best_pad


def pallas_linear(x2d, wt_pad, bias_pad, *, n_label, f_valid, tk):
    """x2d: (B, F) f32 or bf16.  wt_pad: (F_pad, N_pad) bf16 (pre-transposed, padded).
    bias_pad: (1, N_pad) f32.  Returns (B, n_label) f32."""
    B, F = x2d.shape
    assert F == f_valid, (F, f_valid)
    f_pad, n_pad = wt_pad.shape

    # bf16 activations: halves x HBM traffic and the x VMEM tile; fuses with padding.
    if x2d.dtype != jnp.bfloat16:
        x2d = x2d.astype(jnp.bfloat16)

    tm, b_pad = _choose_tm(B)
    pad_f, pad_b = f_pad - F, b_pad - B
    if pad_f or pad_b:
        x2d = jnp.pad(x2d, ((0, pad_b), (0, pad_f)))

    m_tiles = b_pad // tm
    # Full-width N when M already gives >=2 parallel grid points; otherwise split N in
    # two so dual-TensorCore chips (v7x) still get two parallel tiles at tiny extra cost.
    if m_tiles >= 2 or n_pad % 256 != 0:
        tn = n_pad
    else:
        tn = n_pad // 2

    grid = (b_pad // tm, n_pad // tn, f_pad // tk)

    # Double-buffered bf16 inputs + double-buffered f32 output tile (+ headroom).
    vmem_need = 2 * (tm * tk + tk * tn) * 2 + 2 * tm * tn * 4 + 2 * tn * 4
    vmem_limit = int(min(max(vmem_need + (8 << 20), 32 << 20), 48 << 20))

    out = pl.pallas_call(
        _linear_kernel,
        out_shape=jax.ShapeDtypeStruct((b_pad, n_pad), jnp.float32),
        grid_spec=pltpu.PrefetchScalarGridSpec(
            num_scalar_prefetch=0,
            grid=grid,
            in_specs=[
                pl.BlockSpec((tm, tk), lambda m, n, k: (m, k)),    # x tile (bf16)
                pl.BlockSpec((tk, tn), lambda m, n, k: (k, n)),    # W^T tile (bf16)
                pl.BlockSpec((1, tn), lambda m, n, k: (0, n)),     # bias tile (f32)
            ],
            out_specs=pl.BlockSpec((tm, tn), lambda m, n, k: (m, n)),
        ),
        compiler_params=pltpu.CompilerParams(
            dimension_semantics=("parallel", "parallel", "arbitrary"),
            vmem_limit_bytes=vmem_limit),
    )(x2d, wt_pad, bias_pad)
    return out[:B, :n_label]


# -------------------- Adaptive avg/max pool (layer < 5 path) -------------------

def _avg_pool_kernel(x_ref, m_ref, o_ref, *, inv_area):
    # x: (tbc, H*W) f32, lane-dense rows.  Bin reduction = ONE MXU matmul against a
    # 0/1 bf16 bin matrix; the 1/(bh*bw) scale is applied in f32 in the epilogue.
    acc = jnp.dot(x_ref[...].astype(jnp.bfloat16), m_ref[...],
                  preferred_element_type=jnp.float32)
    o_ref[...] = (acc * inv_area).astype(o_ref.dtype)


def _max_pool_kernel(x_ref, o_ref, *, ps, bh, bw):
    # MXU can't do max: sublane-reduce rows per bin, then lane-reduce columns per bin.
    x = x_ref[...]                                               # (tbc, H, W) f32
    cols = []
    for i in range(ps):
        xr = jnp.max(x[:, i * bh:(i + 1) * bh, :], axis=1)       # (tbc, W)
        for j in range(ps):
            cols.append(jnp.max(xr[:, j * bw:(j + 1) * bw], axis=-1, keepdims=True))
    o_ref[...] = jnp.concatenate(cols, axis=-1).astype(o_ref.dtype)   # (tbc, ps*ps)


def _choose_rows(bc, per_row_bytes, budget=4 << 20):
    """(tbc, bc_pad): ~budget-sized tiles; prefer a divisor of bc (no pad pass over x)."""
    target = max(8, budget // per_row_bytes)
    if bc <= target:
        return bc, bc
    t = (min(target, bc) // 8) * 8
    while t >= 8:
        if bc % t == 0:
            return t, bc
        t -= 8
    t = (target // 8) * 8
    return t, _round_up(bc, t)


def pallas_adaptive_pool(x, pool_size, op):
    """AdaptiveAvg/MaxPool2d NCHW -> (B, C, ps, ps) bf16, uniform bins only."""
    B, C, H, W = x.shape
    ps = pool_size
    # TODO(synk): non-uniform adaptive bins (H or W not divisible by pool_size) are not
    # expressible with a single static block shape; only the uniform case is implemented.
    assert H % ps == 0 and W % ps == 0, "only uniform adaptive bins supported"
    bh, bw = H // ps, W // ps
    BC, PP, HW = B * C, ps * ps, H * W
    cparams = pltpu.CompilerParams(dimension_semantics=("parallel",))

    if op == "avg":
        x2 = x.reshape(BC, HW)                     # free row-major reshape, lane-dense rows
        tbc, bc_pad = _choose_rows(BC, _round_up(HW, 128) * 4)
        if bc_pad > BC:
            x2 = jnp.pad(x2, ((0, bc_pad - BC), (0, 0)))
        # 0/1 bin matrix: column i*ps+j selects spatial bin (i, j).
        bin_id = (jnp.arange(H)[:, None] // bh) * ps + (jnp.arange(W)[None, :] // bw)
        bin_mat = (bin_id.reshape(HW, 1) == jnp.arange(PP)[None, :]).astype(jnp.bfloat16)
        out = pl.pallas_call(
            functools.partial(_avg_pool_kernel, inv_area=1.0 / (bh * bw)),
            out_shape=jax.ShapeDtypeStruct((bc_pad, PP), jnp.bfloat16),
            grid_spec=pltpu.PrefetchScalarGridSpec(
                num_scalar_prefetch=0,
                grid=(bc_pad // tbc,),
                in_specs=[pl.BlockSpec((tbc, HW), lambda i: (i, 0)),
                          pl.BlockSpec((HW, PP), lambda i: (0, 0))],
                out_specs=pl.BlockSpec((tbc, PP), lambda i: (i, 0)),
            ),
            compiler_params=cparams,
        )(x2, bin_mat)
    elif op == "max":
        x3 = x.reshape(BC, H, W)
        tbc, bc_pad = _choose_rows(BC, _round_up(H, 8) * _round_up(W, 128) * 4)
        if bc_pad > BC:
            x3 = jnp.pad(x3, ((0, bc_pad - BC), (0, 0), (0, 0)))
        out = pl.pallas_call(
            functools.partial(_max_pool_kernel, ps=ps, bh=bh, bw=bw),
            out_shape=jax.ShapeDtypeStruct((bc_pad, PP), jnp.bfloat16),
            grid_spec=pltpu.PrefetchScalarGridSpec(
                num_scalar_prefetch=0,
                grid=(bc_pad // tbc,),
                in_specs=[pl.BlockSpec((tbc, H, W), lambda i: (i, 0, 0))],
                out_specs=pl.BlockSpec((tbc, PP), lambda i: (i, 0)),
            ),
            compiler_params=cparams,
        )(x3)
    else:
        raise ValueError("pool op must be 'avg' or 'max'")
    return out[:BC].reshape(B, C, ps, ps)


# --------------------------------- Module port ---------------------------------

class LinearClassifierResNet:
    _CFG = {1: (8, 128), 2: (6, 256), 3: (4, 512),
            4: (3, 1024), 5: (7, 2048), 6: (1, 2048)}

    def __init__(self, layer=6, n_label=1000, pool_type='avg', width=1, key=None):
        if layer not in self._CFG:
            raise NotImplementedError('layer not supported: {}'.format(layer))
        pool_size, base = self._CFG[layer]
        self.layer = layer
        self.pool_size = pool_size
        self.pool_type = pool_type
        n_channels = base * width
        in_features = n_channels * pool_size * pool_size
        self.in_features = in_features
        self.n_label = n_label
        if key is None:
            key = jax.random.PRNGKey(0)

        # matches initilize(): weight ~ N(0, 0.01), bias = 0  (torch layout (n_label, F))
        w = 0.01 * jax.random.normal(key, (n_label, in_features), jnp.float32)
        self.weight = w
        self.bias = jnp.zeros((n_label,), jnp.float32)

        # ---- kernel-side parameters: pad + pre-transpose + bf16-cast ONCE ----
        n_pad = _round_up(n_label, 128)                  # lane-dense output (1000 -> 1024)
        self.tk, f_pad = _pick_tile(in_features, 2048)   # K tile (<=2048), never full-F
        self.f_pad, self.n_pad = f_pad, n_pad

        wt = jnp.zeros((f_pad, n_pad), jnp.float32)
        wt = wt.at[:in_features, :n_label].set(w.T)
        self.wt_bf16 = wt.astype(jnp.bfloat16)           # (F_pad, N_pad) pre-transposed
        self.bias_pad = jnp.zeros((1, n_pad), jnp.float32).at[0, :n_label].set(self.bias)

    def __call__(self, x):
        if self.layer < 5 and self.pool_type in ('avg', 'max'):
            x = pallas_adaptive_pool(x, self.pool_size, self.pool_type)   # bf16 pooled
        xf = x.reshape(x.shape[0], -1)    # Flatten (== torch .view(B, -1)), free
        return pallas_linear(xf, self.wt_bf16, self.bias_pad,
                             n_label=self.n_label, f_valid=self.in_features,
                             tk=self.tk)


# ------------------------------------ Demo --------------------------------------

if __name__ == "__main__":
    key = jax.random.PRNGKey(0)
    kx, kw, kx2, kw2 = jax.random.split(key, 4)
    n_label = 1000

    # ---- layer=6 (default): Flatten + Linear, input (B, 2048, 1, 1) ----
    model = LinearClassifierResNet(layer=6, n_label=n_label, pool_type='avg',
                                   width=1, key=kw)
    x = jax.random.normal(kx, (2, 2048, 1, 1), dtype=jnp.float32)
    out = jax.block_until_ready(model(x))
    assert out.shape == (2, n_label), out.shape

    # reference with the same bf16 quantization (kernel accumulates in f32)
    xf = x.reshape(2, -1)
    x_q = xf.astype(jnp.bfloat16).astype(jnp.float32)
    w_q = model.wt_bf16.astype(jnp.float32)[:model.in_features, :n_label]
    ref = x_q @ w_q + model.bias
    assert jnp.allclose(out, ref, atol=5e-3, rtol=5e-3), \
        float(jnp.max(jnp.abs(out - ref)))

    # ---- layer=3: AdaptiveAvgPool2d((4,4)) + Flatten + Linear ----
    model3 = LinearClassifierResNet(layer=3, n_label=n_label, pool_type='avg',
                                    width=1, key=kw2)
    x3 = jax.random.normal(kx2, (2, 512, 8, 8), dtype=jnp.float32)
    out3 = jax.block_until_ready(model3(x3))
    assert out3.shape == (2, n_label), out3.shape

    x3_q = x3.astype(jnp.bfloat16).astype(jnp.float32)
    pooled = x3_q.reshape(2, 512, 4, 2, 4, 2).mean(axis=(3, 5)).reshape(2, -1)
    p_q = pooled.astype(jnp.bfloat16).astype(jnp.float32)
    w3_q = model3.wt_bf16.astype(jnp.float32)[:model3.in_features, :n_label]
    ref3 = p_q @ w3_q + model3.bias
    assert jnp.allclose(out3, ref3, atol=5e-3, rtol=5e-3), \
        float(jnp.max(jnp.abs(out3 - ref3)))

    # ---- layer=3, max-pool path ----
    model3m = LinearClassifierResNet(layer=3, n_label=n_label, pool_type='max',
                                     width=1, key=kw2)
    out3m = jax.block_until_ready(model3m(x3))
    assert out3m.shape == (2, n_label), out3m.shape

    pooled_m = x3.reshape(2, 512, 4, 2, 4, 2).max(axis=(3, 5)).reshape(2, -1)
    pm_q = pooled_m.astype(jnp.bfloat16).astype(jnp.float32)
    refm = pm_q @ w3_q + model3m.bias
    assert jnp.allclose(out3m, refm, atol=5e-3, rtol=5e-3), \
        float(jnp.max(jnp.abs(out3m - refm)))

    print("KERNEL_OK")
</pallas_src>

<mosaic_0001>
module attributes {stable_mosaic.version = 11 : i64} {
  func.func @_linear_kernel(%arg0: i32, %arg1: i32, %arg2: i32, %arg3: memref<2x2048xbf16, #tpu.memory_space<vmem>>, %arg4: memref<2048x512xbf16, #tpu.memory_space<vmem>>, %arg5: memref<1x512xf32, #tpu.memory_space<vmem>>, %arg6: memref<2x512xf32, #tpu.memory_space<vmem>>) attributes {dimension_semantics = [#tpu.dimension_semantics<parallel>, #tpu.dimension_semantics<parallel>, #tpu.dimension_semantics<arbitrary>], iteration_bounds = array<i64: 1, 2, 1>, scalar_prefetch = 0 : i64, scratch_operands = 0 : i64, tpu.core_type = #tpu.core_type<tc>, window_params = [{transform_indices = @transform_0, window_bounds = array<i64: 2, 2048>}, {transform_indices = @transform_1, window_bounds = array<i64: 2048, 512>}, {transform_indices = @transform_2, window_bounds = array<i64: 1, 512>}, {transform_indices = @transform_3, window_bounds = array<i64: 2, 512>}]} {
    %c0_i32 = arith.constant 0 : i32
    %0 = arith.cmpi eq, %arg2, %c0_i32 : i32
    %1 = arith.extui %0 : i1 to i32
    %c0_i32_0 = arith.constant 0 : i32
    %2 = arith.cmpi ne, %1, %c0_i32_0 : i32
    scf.if %2 {
      %c0_8 = arith.constant 0 : index
      %c0_9 = arith.constant 0 : index
      %9 = vector.load %arg5[%c0_8, %c0_9] : memref<1x512xf32, #tpu.memory_space<vmem>>, vector<1x512xf32>
      %10 = vector.shape_cast %9 : vector<1x512xf32> to vector<1x512xf32>
      %11 = vector.broadcast %10 : vector<1x512xf32> to vector<2x512xf32>
      %c0_10 = arith.constant 0 : index
      %c0_11 = arith.constant 0 : index
      %12 = vector.load %arg6[%c0_10, %c0_11] : memref<2x512xf32, #tpu.memory_space<vmem>>, vector<2x512xf32>
      tpu.vector_store %arg6[%c0_10, %c0_11], %11 {strides = array<i32>} : memref<2x512xf32, #tpu.memory_space<vmem>>, vector<2x512xf32>,
    } else {
    }
    %c0 = arith.constant 0 : index
    %c0_1 = arith.constant 0 : index
    %3 = vector.load %arg6[%c0, %c0_1] : memref<2x512xf32, #tpu.memory_space<vmem>>, vector<2x512xf32>
    %c0_2 = arith.constant 0 : index
    %c0_3 = arith.constant 0 : index
    %4 = vector.load %arg3[%c0_2, %c0_3] : memref<2x2048xbf16, #tpu.memory_space<vmem>>, vector<2x2048xbf16>
    %c0_4 = arith.constant 0 : index
    %c0_5 = arith.constant 0 : index
    %5 = vector.load %arg4[%c0_4, %c0_5] : memref<2048x512xbf16, #tpu.memory_space<vmem>>, vector<2048x512xbf16>
    %cst = arith.constant dense<0.000000e+00> : vector<2x512xf32>
    %6 = tpu.matmul %4, %5, %cst {dimension_numbers = #tpu.dot_dimension_numbers<[1], [0], [0], [1], [0, 0, 1, 1], [], []>} : vector<2x2048xbf16>, vector<2048x512xbf16>, vector<2x512xf32> -> vector<2x512xf32>
    %7 = arith.addf %3, %6 : vector<2x512xf32>
    %c0_6 = arith.constant 0 : index
    %c0_7 = arith.constant 0 : index
    %8 = vector.load %arg6[%c0_6, %c0_7] : memref<2x512xf32, #tpu.memory_space<vmem>>, vector<2x512xf32>
    tpu.vector_store %arg6[%c0_6, %c0_7], %7 {strides = array<i32>} : memref<2x512xf32, #tpu.memory_space<vmem>>, vector<2x512xf32>,
    return
  }
  func.func @transform_0(%arg0: i32, %arg1: i32, %arg2: i32) -> (i32, i32) {
    %c0_i32 = arith.constant 0 : i32
    return %arg0, %arg2 : i32, i32
  }
  func.func @transform_1(%arg0: i32, %arg1: i32, %arg2: i32) -> (i32, i32) {
    %c0_i32 = arith.constant 0 : i32
    return %arg2, %arg1 : i32, i32
  }
  func.func @transform_2(%arg0: i32, %arg1: i32, %arg2: i32) -> (i32, i32) {
    %c0_i32 = arith.constant 0 : i32
    %c0_i32_0 = arith.constant 0 : i32
    return %c0_i32, %arg1 : i32, i32
  }
  func.func @transform_3(%arg0: i32, %arg1: i32, %arg2: i32) -> (i32, i32) {
    %c0_i32 = arith.constant 0 : i32
    return %arg0, %arg1 : i32, i32
  }
}

</mosaic_0001>

<llo_original>
// kernel: tpu_custom_call.1
$region0: #{tpu_custom_call.1}
  #allocation0 [shape = 'u32[]', space=smem, size = 0x4, offset = 0x4, fixed_abs, tag = 'smem constant byte address 0x4 - core index']
  #allocation1 [shape = 'u32[72,128]{1,0:T(1,128)}', space=vmem, size = 0x9000, scoped, tag = 'internal scratch']
  %s0 = inlined_call_operand.hbm [shape: bf16[2,2048], index: 0, kind: input, shape index: {}]
  %s1 = inlined_call_operand.hbm [shape: bf16[2048,1024], index: 1, kind: input, shape index: {}]
  %s2 = inlined_call_operand.hbm [shape: f32[1,1024], index: 2, kind: input, shape index: {}]
  %s3 = inlined_call_operand.hbm [shape: f32[2,1024], index: 3, kind: output, shape index: {}]
  %s4 = sld [smem:[#allocation0]]
  $region61: #{tpu_custom_call.1} parent=0
    _
  %s6 = ssub.s32 1, %s4
  %s7 = scalar_select 0, %s6, %s4
  $region1: #{tpu_custom_call.1} parent=0
    #allocation2 [shape = 'u8[8192]{0}', space=vmem, size = 0x2000, scoped, tag = 'input window, operand 0, single buffered']
    #allocation3 [shape = 's32[2]{0}', space=sflag, size = 0x8, scoped, tag = 'scoped memory for tpu_custom_call.1']
    #allocation4 [shape = 's32[2]{0}', space=sflag, size = 0x8, scoped, tag = 'scoped memory for tpu_custom_call.1']
    #allocation5 [shape = 'u8[4194304]{0}', space=vmem, size = 0x400000, scoped, tag = 'input window, operand 1']
    #allocation6 [shape = 's32[2]{0}', space=sflag, size = 0x8, scoped, tag = 'scoped memory for tpu_custom_call.1']
    #allocation7 [shape = 'u8[4096]{0}', space=vmem, size = 0x1000, scoped, tag = 'input window, operand 2']
    #allocation8 [shape = 'u8[8192]{0}', space=vmem, size = 0x2000, scoped, tag = 'output window, operand 0']
    %8 = vsyncpa [#allocation3], 0
    %9 = vsyncpa [#allocation6], 0
    %s10 = scalar_lea.sflag [#allocation6], 1
    %11 = vsyncpa %s10, 0
    %12 = vsyncpa [#allocation4], 0
    %s13 = scalar_lea.sflag [#allocation4], 1
    %14 = vsyncpa %s13, 0
    loop: start=0, step=1, limit=4
    $region2: #{tpu_custom_call.1} parent=1 // loop_pre_header
      _
    $region3: #{tpu_custom_call.1} parent=1 // loop_header
      %s16 = sphi 0, %s20
      %p17 = scmp.ge.s32.totalorder %s16, 4
      %s23 = sphi 0, %s42
      %s24 = sphi 0, %s38
      %s25 = sphi 0, %s34
      %s26 = sphi 0, %s23
      %s27 = sphi 0, %s24
      %s28 = sphi 0, %s25
      %s29 = sphi 0, %s26
      %s30 = sphi 0, %s27
      %s31 = sphi 0, %s28
      %s47 = sphi 0, %s49
      %s50 = sphi 0, %s47
      %s51 = sphi 0, %s50
      %s67 = sphi 0, %s51
      %s75 = sphi 0, %s77
      %s78 = sphi 0, %s75
      %s79 = sphi 0, %s78
      %s95 = sphi 0, %s79
      %s101 = sphi 0, %s103
      %s104 = sphi 0, %s101
      %s105 = sphi 0, %s104
      %s121 = sphi 0, %s105
      %s129 = sphi 0, %s131
      %s132 = sphi 0, %s129
      %s133 = sphi 0, %s132
      %s149 = sphi 0, %s133
    $region4: #{tpu_custom_call.1} parent=1 // loop_header_branch
      %19 = sbr.rel (%p17) target = $region8
    $region5: #{tpu_custom_call.1} parent=1 // loop_body
      %s21 = ssub.s32 %s16, 1
      %s22 = ssub.s32 %s16, 2
      %s32 = sadd.s32 1, %s25
      %p33 = scmp.ge.s32.totalorder %s32, 1
      %s34 = scalar_select %p33, 0, %s32
      %s35 = sadd.s32 1, %s24
      %s36 = scalar_select %p33, %s35, %s24
      %p37 = scmp.ge.s32.totalorder %s36, 2
      %s38 = scalar_select %p37, 0, %s36
      %s39 = sadd.s32 1, %s23
      %s40 = scalar_select %p37, %s39, %s23
      %p41 = scmp.ge.s32.totalorder %s40, 1
      %s42 = scalar_select %p41, 0, %s40
      %s43 = ssub.s32 %s23, %s42
      %s44 = ssub.s32 %s25, %s34
      %s45 = sor.u32 %s43, %s44
      %p46 = scmp.eq.s32.totalorder %s45, 0
      %s48 = sadd.s32 %s47, 1
      %s49 = scalar_select %p46, %s47, %s48
      %p52 = pneg %p46
      %p53 = scmp.eq.s32.totalorder %s16, 1
      %p54 = por %p52, %p53
      %p55 = scmp.ne.s32.totalorder %s47, %s50
      %p56 = scmp.eq.s32.totalorder %s16, 0
      %p57 = por %p55, %p56
      %p58 = scmp.ne.s32.totalorder %s47, %s50
      %p59 = scmp.eq.s32.totalorder %s21, 1
      %p60 = por %p58, %p59
      %p61 = scmp.ne.s32.totalorder %s50, %s51
      %p62 = scmp.eq.s32.totalorder %s21, 0
      %p63 = por %p61, %p62
      %p64 = scmp.ne.s32.totalorder %s50, %s51
      %p65 = scmp.eq.s32.totalorder %s22, 1
      %p66 = por %p64, %p65
      %p68 = scmp.ne.s32.totalorder %s51, %s67
      %p69 = scmp.eq.s32.totalorder %s22, 0
      %p70 = por %p68, %p69
      %s71 = ssub.s32 %s25, %s34
      %s72 = ssub.s32 %s24, %s38
      %s73 = sor.u32 %s71, %s72
      %p74 = scmp.eq.s32.totalorder %s73, 0
      %s76 = sadd.s32 %s75, 1
      %s77 = scalar_select %p74, %s75, %s76
      %p80 = pneg %p74
      %p81 = scmp.eq.s32.totalorder %s16, 1
      %p82 = por %p80, %p81
      %p83 = scmp.ne.s32.totalorder %s75, %s78
      %p84 = scmp.eq.s32.totalorder %s16, 0
      %p85 = por %p83, %p84
      %p86 = scmp.ne.s32.totalorder %s75, %s78
      %p87 = scmp.eq.s32.totalorder %s21, 1
      %p88 = por %p86, %p87
      %p89 = scmp.ne.s32.totalorder %s78, %s79
      %p90 = scmp.eq.s32.totalorder %s21, 0
      %p91 = por %p89, %p90
      %p92 = scmp.ne.s32.totalorder %s78, %s79
      %p93 = scmp.eq.s32.totalorder %s22, 1
      %p94 = por %p92, %p93
      %p96 = scmp.ne.s32.totalorder %s79, %s95
      %p97 = scmp.eq.s32.totalorder %s22, 0
      %p98 = por %p96, %p97
      %s99 = ssub.s32 %s24, %s38
      %p100 = scmp.eq.s32.totalorder %s99, 0
      %s102 = sadd.s32 %s101, 1
      %s103 = scalar_select %p100, %s101, %s102
      %p106 = pneg %p100
      %p107 = scmp.eq.s32.totalorder %s16, 1
      %p108 = por %p106, %p107
      %p109 = scmp.ne.s32.totalorder %s101, %s104
      %p110 = scmp.eq.s32.totalorder %s16, 0
      %p111 = por %p109, %p110
      %p112 = scmp.ne.s32.totalorder %s101, %s104
      %p113 = scmp.eq.s32.totalorder %s21, 1
      %p114 = por %p112, %p113
      %p115 = scmp.ne.s32.totalorder %s104, %s105
      %p116 = scmp.eq.s32.totalorder %s21, 0
      %p117 = por %p115, %p116
      %p118 = scmp.ne.s32.totalorder %s104, %s105
      %p119 = scmp.eq.s32.totalorder %s22, 1
      %p120 = por %p118, %p119
      %p122 = scmp.ne.s32.totalorder %s105, %s121
      %p123 = scmp.eq.s32.totalorder %s22, 0
      %p124 = por %p122, %p123
      %s125 = ssub.s32 %s23, %s42
      %s126 = ssub.s32 %s24, %s38
      %s127 = sor.u32 %s125, %s126
      %p128 = scmp.eq.s32.totalorder %s127, 0
      %s130 = sadd.s32 %s129, 1
      %s131 = scalar_select %p128, %s129, %s130
      %p134 = pneg %p128
      %p135 = scmp.eq.s32.totalorder %s16, 1
      %p136 = por %p134, %p135
      %p137 = scmp.ne.s32.totalorder %s129, %s132
      %p138 = scmp.eq.s32.totalorder %s16, 0
      %p139 = por %p137, %p138
      %p140 = scmp.ne.s32.totalorder %s129, %s132
      %p141 = scmp.eq.s32.totalorder %s21, 1
      %p142 = por %p140, %p141
      %p143 = scmp.ne.s32.totalorder %s132, %s133
      %p144 = scmp.eq.s32.totalorder %s21, 0
      %p145 = por %p143, %p144
      %p146 = scmp.ne.s32.totalorder %s132, %s133
      %p147 = scmp.eq.s32.totalorder %s22, 1
      %p148 = por %p146, %p147
      %p150 = scmp.ne.s32.totalorder %s133, %s149
      %p151 = scmp.eq.s32.totalorder %s22, 0
      %p152 = por %p150, %p151
      %p153 = scmp.le.s32.totalorder 1, %s16
      %p154 = scmp.lt.s32.totalorder %s16, 3
      %p155 = pnand %p153, %p154
      %p156 = pneg %p155
      // Predicated region
      $region9: #{tpu_custom_call.1} parent=5 // pred_check
        _
      $region10: #{tpu_custom_call.1} parent=5 // pred_check_branch
        %158 = sbr.rel (%p155) target = $region12
      $region11: #{tpu_custom_call.1} parent=5 // pred_region
        %s159 = ssub.s32 %s16, 1
        // Predicated region
        $region13: #{tpu_custom_call.1} parent=11 // pred_check
          %p160 = pneg %p63
        $region14: #{tpu_custom_call.1} parent=11 // pred_check_branch
          %162 = sbr.rel (%p160) target = $region16
        $region15: #{tpu_custom_call.1} parent=11 // pred_region
          %s163 = smul.u32 16, %s28
          %165 = vsyncadd [#allocation3], 0
          %s166 = smul.addr %s26, 16
          %s167 = sadd.s32 %s163, %s166
          %s168 = scalar_lea.hbm %s0, %s167
          %s170 = sshll.u32 %s168, 4
          %s171 = int_to_ptr.hbm [resolvable:$true] %s170
          %s172 = sshll.u32 [#allocation2], 4
          %s173 = int_to_ptr.vmem [resolvable:$true] %s172
          %175 = dma.hbm_to_vmem [thread:$0]  %s171, 256, %s173, [#allocation3]
        $region16: #{tpu_custom_call.1} parent=11 // pred_fallthru
          _
      $region12: #{tpu_custom_call.1} parent=5 // pred_fallthru
        _
      %p176 = scmp.lt.s32.totalorder %s16, 2
      // Predicated region
      $region17: #{tpu_custom_call.1} parent=5 // pred_check
        %p177 = pneg %p176
      $region18: #{tpu_custom_call.1} parent=5 // pred_check_branch
        %179 = sbr.rel (%p177) target = $region20
      $region19: #{tpu_custom_call.1} parent=5 // pred_region
        // Predicated region
        $region21: #{tpu_custom_call.1} parent=19 // pred_check
          %p180 = pneg %p85
        $region22: #{tpu_custom_call.1} parent=19 // pred_check_branch
          %182 = sbr.rel (%p180) target = $region24
        $region23: #{tpu_custom_call.1} parent=19 // pred_region
          %s183 = sand.u32 %s16, 1
          %s184 = scalar_lea.sflag [#allocation6], %s183
          %s185 = sand.u32 %s75, 1
          %s186 = smul.addr %s185, 4096
          %s187 = scalar_lea.vmem [#allocation5], %s186
          %s188 = smul.u32 256, %s25
          %s189 = smul.u32 4, %s24
          %191 = vsyncadd %s184, 0
          %s192 = smul.addr %s188, 8
          %s193 = sadd.s32 %s189, %s192
          %s194 = smul.addr %s193, 4
          %s195 = scalar_lea.hbm %s1, %s194
          %s196 = sshll.u32 %s195, 4
          %s197 = int_to_ptr.hbm [resolvable:$true] %s196
          %s198 = sshll.u32 %s187, 4
          %s199 = int_to_ptr.vmem [resolvable:$true] %s198
          %204 = dma.hbm_to_vmem [thread:$0]  %s197, 65536, %s199, %s184, 512, 256, 16
        $region24: #{tpu_custom_call.1} parent=19 // pred_fallthru
          _
        // Predicated region
        $region25: #{tpu_custom_call.1} parent=19 // pred_check
          %p205 = pneg %p111
        $region26: #{tpu_custom_call.1} parent=19 // pred_check_branch
          %207 = sbr.rel (%p205) target = $region28
        $region27: #{tpu_custom_call.1} parent=19 // pred_region
          %s208 = sand.u32 %s16, 1
          %s209 = scalar_lea.sflag [#allocation6], %s208
          %s210 = sand.u32 %s101, 1
          %s211 = smul.addr %s210, 4
          %s212 = scalar_lea.vmem [#allocation7], %s211
          %s213 = smul.u32 4, %s24
          %215 = vsyncadd %s209, 0
          %s216 = scalar_lea.hbm %s2, %s213
          %s218 = sshll.u32 %s216, 4
          %s219 = int_to_ptr.hbm [resolvable:$true] %s218
          %s220 = sshll.u32 %s212, 4
          %s221 = int_to_ptr.vmem [resolvable:$true] %s220
          %223 = dma.hbm_to_vmem [thread:$0]  %s219, 64, %s221, %s209
        $region28: #{tpu_custom_call.1} parent=19 // pred_fallthru
          _
      $region20: #{tpu_custom_call.1} parent=5 // pred_fallthru
        _
      %p224 = scmp.le.s32.totalorder 1, %s16
      %p225 = scmp.lt.s32.totalorder %s16, 3
      %p226 = pnand %p224, %p225
      %p227 = pneg %p226
      // Predicated region
      $region29: #{tpu_custom_call.1} parent=5 // pred_check
        _
      $region30: #{tpu_custom_call.1} parent=5 // pred_check_branch
        %229 = sbr.rel (%p226) target = $region32
      $region31: #{tpu_custom_call.1} parent=5 // pred_region
        %s230 = ssub.s32 %s16, 1
        // Predicated region
        $region33: #{tpu_custom_call.1} parent=31 // pred_check
          %p231 = pneg %p63
        $region34: #{tpu_custom_call.1} parent=31 // pred_check_branch
          %233 = sbr.rel (%p231) target = $region36
        $region35: #{tpu_custom_call.1} parent=31 // pred_region
          %235 = dma.done [#allocation3], 256
        $region36: #{tpu_custom_call.1} parent=31 // pred_fallthru
          _
        %s236 = sand.u32 %s21, 1
        %s237 = scalar_lea.sflag [#allocation6], %s236
        %s238 = sand.u32 %s78, 1
        %s239 = smul.addr %s238, 4096
        %s240 = scalar_lea.vmem [#allocation5], %s239
        // Predicated region
        $region37: #{tpu_custom_call.1} parent=31 // pred_check
          %p241 = pneg %p91
        $region38: #{tpu_custom_call.1} parent=31 // pred_check_branch
          %243 = sbr.rel (%p241) target = $region40
        $region39: #{tpu_custom_call.1} parent=31 // pred_region
          %245 = dma.done %s237, 65536
        $region40: #{tpu_custom_call.1} parent=31 // pred_fallthru
          _
        %s246 = sand.u32 %s21, 1
        %s247 = scalar_lea.sflag [#allocation6], %s246
        %s248 = sand.u32 %s104, 1
        %s249 = smul.addr %s248, 4
        %s250 = scalar_lea.vmem [#allocation7], %s249
        // Predicated region
        $region41: #{tpu_custom_call.1} parent=31 // pred_check
          %p251 = pneg %p117
        $region42: #{tpu_custom_call.1} parent=31 // pred_check_branch
          %253 = sbr.rel (%p251) target = $region44
        $region43: #{tpu_custom_call.1} parent=31 // pred_region
          %255 = dma.done %s247, 64
        $region44: #{tpu_custom_call.1} parent=31 // pred_fallthru
          _
        %p256 = pneg %p63
        %p257 = pneg %p60
        %s258 = sand.u32 %s21, 1
        %s259 = scalar_lea.sflag [#allocation6], %s258
        %s260 = sand.u32 %s78, 1
        %s261 = smul.addr %s260, 4096
        %s262 = scalar_lea.vmem [#allocation5], %s261
        %p263 = pneg %p91
        %p264 = pneg %p88
        %s265 = sand.u32 %s21, 1
        %s266 = scalar_lea.sflag [#allocation6], %s265
        %s267 = sand.u32 %s104, 1
        %s268 = smul.addr %s267, 4
        %s269 = scalar_lea.vmem [#allocation7], %s268
        %p270 = pneg %p117
        %p271 = pneg %p114
        %p272 = pneg %p145
        %p273 = pneg %p142
        %s274 = sand.u32 %s132, 1
        %s275 = scalar_lea.sflag [#allocation4], %s274
        %s276 = sand.u32 %s132, 1
        %s277 = smul.addr %s276, 8
        %s278 = scalar_lea.vmem [#allocation8], %s277
        %s279 = smul.u32 16, %s28
        %s280 = smul.u32 256, %s28
        %s281 = smul.u32 4, %s27
        %s282 = smul.u32 4, %s27
        %s283 = smul.u32 4, %s27
        %p284 = scmp.eq.s32.totalorder %s28, 0
        // Predicated region
        $region45: #{tpu_custom_call.1} parent=31 // pred_check
          %p285 = pneg %p284
        $region46: #{tpu_custom_call.1} parent=31 // pred_check_branch
          %287 = sbr.rel (%p285) target = $region48
        $region47: #{tpu_custom_call.1} parent=31 // pred_region
          %v288 = vld [vmem:[%s250] sm:$0xf]
          %v290 = vperm.slane %v288, 0
          %v291 = vperm.slane %v288, 1
          %v292 = vperm.slane %v288, 2
          %v293 = vperm.slane %v288, 3
          %v294 = vrot.slane %v291, 6
          %v295 = vrot.slane %v292, 4
          %v296 = vrot.slane %v293, 2
          %vm297 = vcmask 1041408
          %v298 = vsel %vm297, %v290, %v294
          %vm299 = vcmask 1045508
          %v300 = vsel %vm299, %v295, %v296
          %vm301 = vcmask 1043456
          %v302 = vsel %vm301, %v298, %v300
          %304 = vst [vmem:[%s278] sm:$0xff] %v302
        $region48: #{tpu_custom_call.1} parent=31 // pred_fallthru
          _
        %v305 = vld [vmem:[%s278] sm:$0xff]
        %v306 = vld [vmem:[#allocation2] sm:$0xff]
        %v307 = vld [vmem:[#allocation2 + $0x8] sm:$0xff]
        %v308 = vld [vmem:[%s240] sm:$0xff]
        %v309 = vld [vmem:[%s240 + $0x8] sm:$0xff]
        %v310 = vld [vmem:[%s240 + $0x10] sm:$0xff]
        %v311 = vld [vmem:[%s240 + $0x18] sm:$0xff]
        %v312 = vld [vmem:[%s240 + $0x20] sm:$0xff]
        %v313 = vld [vmem:[%s240 + $0x28] sm:$0xff]
        %v314 = vld [vmem:[%s240 + $0x30] sm:$0xff]
        %v315 = vld [vmem:[%s240 + $0x38] sm:$0xff]
        %v316 = vld [vmem:[%s240 + $0x40] sm:$0xff]
        %v317 = vld [vmem:[%s240 + $0x48] sm:$0xff]
        %v318 = vld [vmem:[%s240 + $0x50] sm:$0xff]
        %v319 = vld [vmem:[%s240 + $0x58] sm:$0xff]
        %v320 = vld [vmem:[%s240 + $0x60] sm:$0xff]
        %v321 = vld [vmem:[%s240 + $0x68] sm:$0xff]
        %v322 = vld [vmem:[%s240 + $0x70] sm:$0xff]
        %v323 = vld [vmem:[%s240 + $0x78] sm:$0xff]
        %v324 = vld [vmem:[%s240 + $0x80] sm:$0xff]
        %v325 = vld [vmem:[%s240 + $0x88] sm:$0xff]
        %v326 = vld [vmem:[%s240 + $0x90] sm:$0xff]
        %v327 = vld [vmem:[%s240 + $0x98] sm:$0xff]
        %v328 = vld [vmem:[%s240 + $0xa0] sm:$0xff]
        %v329 = vld [vmem:[%s240 + $0xa8] sm:$0xff]
        %v330 = vld [vmem:[%s240 + $0xb0] sm:$0xff]
        %v331 = vld [vmem:[%s240 + $0xb8] sm:$0xff]
        %v332 = vld [vmem:[%s240 + $0xc0] sm:$0xff]
        %v333 = vld [vmem:[%s240 + $0xc8] sm:$0xff]
        %v334 = vld [vmem:[%s240 + $0xd0] sm:$0xff]
        %v335 = vld [vmem:[%s240 + $0xd8] sm:$0xff]
        %v336 = vld [vmem:[%s240 + $0xe0] sm:$0xff]
        %v337 = vld [vmem:[%s240 + $0xe8] sm:$0xff]
        %v338 = vld [vmem:[%s240 + $0xf0] sm:$0xff]
        %v339 = vld [vmem:[%s240 + $0xf8] sm:$0xff]
        %v340 = vld [vmem:[%s240 + $0x100] sm:$0xff]
        %v341 = vld [vmem:[%s240 + $0x108] sm:$0xff]
        %v342 = vld [vmem:[%s240 + $0x110] sm:$0xff]
        %v343 = vld [vmem:[%s240 + $0x118] sm:$0xff]
        %v344 = vld [vmem:[%s240 + $0x120] sm:$0xff]
        %v345 = vld [vmem:[%s240 + $0x128] sm:$0xff]
        %v346 = vld [vmem:[%s240 + $0x130] sm:$0xff]
        %v347 = vld [vmem:[%s240 + $0x138] sm:$0xff]
        %v348 = vld [vmem:[%s240 + $0x140] sm:$0xff]
        %v349 = vld [vmem:[%s240 + $0x148] sm:$0xff]
        %v350 = vld [vmem:[%s240 + $0x150] sm:$0xff]
        %v351 = vld [vmem:[%s240 + $0x158] sm:$0xff]
        %v352 = vld [vmem:[%s240 + $0x160] sm:$0xff]
        %v353 = vld [vmem:[%s240 + $0x168] sm:$0xff]
        %v354 = vld [vmem:[%s240 + $0x170] sm:$0xff]
        %v355 = vld [vmem:[%s240 + $0x178] sm:$0xff]
        %v356 = vld [vmem:[%s240 + $0x180] sm:$0xff]
        %v357 = vld [vmem:[%s240 + $0x188] sm:$0xff]
        %v358 = vld [vmem:[%s240 + $0x190] sm:$0xff]
        %v359 = vld [vmem:[%s240 + $0x198] sm:$0xff]
        %v360 = vld [vmem:[%s240 + $0x1a0] sm:$0xff]
        %v361 = vld [vmem:[%s240 + $0x1a8] sm:$0xff]
        %v362 = vld [vmem:[%s240 + $0x1b0] sm:$0xff]
        %v363 = vld [vmem:[%s240 + $0x1b8] sm:$0xff]
        %v364 = vld [vmem:[%s240 + $0x1c0] sm:$0xff]
        %v365 = vld [vmem:[%s240 + $0x1c8] sm:$0xff]
        %v366 = vld [vmem:[%s240 + $0x1d0] sm:$0xff]
        %v367 = vld [vmem:[%s240 + $0x1d8] sm:$0xff]
        %v368 = vld [vmem:[%s240 + $0x1e0] sm:$0xff]
        %v369 = vld [vmem:[%s240 + $0x1e8] sm:$0xff]
        %v370 = vld [vmem:[%s240 + $0x1f0] sm:$0xff]
        %v371 = vld [vmem:[%s240 + $0x1f8] sm:$0xff]
        %v372 = vld [vmem:[%s240 + $0x200] sm:$0xff]
        %v373 = vld [vmem:[%s240 + $0x208] sm:$0xff]
        %v374 = vld [vmem:[%s240 + $0x210] sm:$0xff]
        %v375 = vld [vmem:[%s240 + $0x218] sm:$0xff]
        %v376 = vld [vmem:[%s240 + $0x220] sm:$0xff]
        %v377 = vld [vmem:[%s240 + $0x228] sm:$0xff]
        %v378 = vld [vmem:[%s240 + $0x230] sm:$0xff]
        %v379 = vld [vmem:[%s240 + $0x238] sm:$0xff]
        %v380 = vld [vmem:[%s240 + $0x240] sm:$0xff]
        %v381 = vld [vmem:[%s240 + $0x248] sm:$0xff]
        %v382 = vld [vmem:[%s240 + $0x250] sm:$0xff]
        %v383 = vld [vmem:[%s240 + $0x258] sm:$0xff]
        %v384 = vld [vmem:[%s240 + $0x260] sm:$0xff]
        %v385 = vld [vmem:[%s240 + $0x268] sm:$0xff]
        %v386 = vld [vmem:[%s240 + $0x270] sm:$0xff]
        %v387 = vld [vmem:[%s240 + $0x278] sm:$0xff]
        %v388 = vld [vmem:[%s240 + $0x280] sm:$0xff]
        %v389 = vld [vmem:[%s240 + $0x288] sm:$0xff]
        %v390 = vld [vmem:[%s240 + $0x290] sm:$0xff]
        %v391 = vld [vmem:[%s240 + $0x298] sm:$0xff]
        %v392 = vld [vmem:[%s240 + $0x2a0] sm:$0xff]
        %v393 = vld [vmem:[%s240 + $0x2a8] sm:$0xff]
        %v394 = vld [vmem:[%s240 + $0x2b0] sm:$0xff]
        %v395 = vld [vmem:[%s240 + $0x2b8] sm:$0xff]
        %v396 = vld [vmem:[%s240 + $0x2c0] sm:$0xff]
        %v397 = vld [vmem:[%s240 + $0x2c8] sm:$0xff]
        %v398 = vld [vmem:[%s240 + $0x2d0] sm:$0xff]
        %v399 = vld [vmem:[%s240 + $0x2d8] sm:$0xff]
        %v400 = vld [vmem:[%s240 + $0x2e0] sm:$0xff]
        %v401 = vld [vmem:[%s240 + $0x2e8] sm:$0xff]
        %v402 = vld [vmem:[%s240 + $0x2f0] sm:$0xff]
        %v403 = vld [vmem:[%s240 + $0x2f8] sm:$0xff]
        %v404 = vld [vmem:[%s240 + $0x300] sm:$0xff]
        %v405 = vld [vmem:[%s240 + $0x308] sm:$0xff]
        %v406 = vld [vmem:[%s240 + $0x310] sm:$0xff]
        %v407 = vld [vmem:[%s240 + $0x318] sm:$0xff]
        %v408 = vld [vmem:[%s240 + $0x320] sm:$0xff]
        %v409 = vld [vmem:[%s240 + $0x328] sm:$0xff]
        %v410 = vld [vmem:[%s240 + $0x330] sm:$0xff]
        %v411 = vld [vmem:[%s240 + $0x338] sm:$0xff]
        %v412 = vld [vmem:[%s240 + $0x340] sm:$0xff]
        %v413 = vld [vmem:[%s240 + $0x348] sm:$0xff]
        %v414 = vld [vmem:[%s240 + $0x350] sm:$0xff]
        %v415 = vld [vmem:[%s240 + $0x358] sm:$0xff]
        %v416 = vld [vmem:[%s240 + $0x360] sm:$0xff]
        %v417 = vld [vmem:[%s240 + $0x368] sm:$0xff]
        %v418 = vld [vmem:[%s240 + $0x370] sm:$0xff]
        %v419 = vld [vmem:[%s240 + $0x378] sm:$0xff]
        %v420 = vld [vmem:[%s240 + $0x380] sm:$0xff]
        %v421 = vld [vmem:[%s240 + $0x388] sm:$0xff]
        %v422 = vld [vmem:[%s240 + $0x390] sm:$0xff]
        %v423 = vld [vmem:[%s240 + $0x398] sm:$0xff]
        %v424 = vld [vmem:[%s240 + $0x3a0] sm:$0xff]
        %v425 = vld [vmem:[%s240 + $0x3a8] sm:$0xff]
        %v426 = vld [vmem:[%s240 + $0x3b0] sm:$0xff]
        %v427 = vld [vmem:[%s240 + $0x3b8] sm:$0xff]
        %v428 = vld [vmem:[%s240 + $0x3c0] sm:$0xff]
        %v429 = vld [vmem:[%s240 + $0x3c8] sm:$0xff]
        %v430 = vld [vmem:[%s240 + $0x3d0] sm:$0xff]
        %v431 = vld [vmem:[%s240 + $0x3d8] sm:$0xff]
        %v432 = vld [vmem:[%s240 + $0x3e0] sm:$0xff]
        %v433 = vld [vmem:[%s240 + $0x3e8] sm:$0xff]
        %v434 = vld [vmem:[%s240 + $0x3f0] sm:$0xff]
        %v435 = vld [vmem:[%s240 + $0x3f8] sm:$0xff]
        %v436 = vld [vmem:[%s240 + $0x400] sm:$0xff]
        %v437 = vld [vmem:[%s240 + $0x408] sm:$0xff]
        %v438 = vld [vmem:[%s240 + $0x410] sm:$0xff]
        %v439 = vld [vmem:[%s240 + $0x418] sm:$0xff]
        %v440 = vld [vmem:[%s240 + $0x420] sm:$0xff]
        %v441 = vld [vmem:[%s240 + $0x428] sm:$0xff]
        %v442 = vld [vmem:[%s240 + $0x430] sm:$0xff]
        %v443 = vld [vmem:[%s240 + $0x438] sm:$0xff]
        %v444 = vld [vmem:[%s240 + $0x440] sm:$0xff]
        %v445 = vld [vmem:[%s240 + $0x448] sm:$0xff]
        %v446 = vld [vmem:[%s240 + $0x450] sm:$0xff]
        %v447 = vld [vmem:[%s240 + $0x458] sm:$0xff]
        %v448 = vld [vmem:[%s240 + $0x460] sm:$0xff]
        %v449 = vld [vmem:[%s240 + $0x468] sm:$0xff]
        %v450 = vld [vmem:[%s240 + $0x470] sm:$0xff]
        %v451 = vld [vmem:[%s240 + $0x478] sm:$0xff]
        %v452 = vld [vmem:[%s240 + $0x480] sm:$0xff]
        %v453 = vld [vmem:[%s240 + $0x488] sm:$0xff]
        %v454 = vld [vmem:[%s240 + $0x490] sm:$0xff]
        %v455 = vld [vmem:[%s240 + $0x498] sm:$0xff]
        %v456 = vld [vmem:[%s240 + $0x4a0] sm:$0xff]
        %v457 = vld [vmem:[%s240 + $0x4a8] sm:$0xff]
        %v458 = vld [vmem:[%s240 + $0x4b0] sm:$0xff]
        %v459 = vld [vmem:[%s240 + $0x4b8] sm:$0xff]
        %v460 = vld [vmem:[%s240 + $0x4c0] sm:$0xff]
        %v461 = vld [vmem:[%s240 + $0x4c8] sm:$0xff]
        %v462 = vld [vmem:[%s240 + $0x4d0] sm:$0xff]
        %v463 = vld [vmem:[%s240 + $0x4d8] sm:$0xff]
        %v464 = vld [vmem:[%s240 + $0x4e0] sm:$0xff]
        %v465 = vld [vmem:[%s240 + $0x4e8] sm:$0xff]
        %v466 = vld [vmem:[%s240 + $0x4f0] sm:$0xff]
        %v467 = vld [vmem:[%s240 + $0x4f8] sm:$0xff]
        %v468 = vld [vmem:[%s240 + $0x500] sm:$0xff]
        %v469 = vld [vmem:[%s240 + $0x508] sm:$0xff]
        %v470 = vld [vmem:[%s240 + $0x510] sm:$0xff]
        %v471 = vld [vmem:[%s240 + $0x518] sm:$0xff]
        %v472 = vld [vmem:[%s240 + $0x520] sm:$0xff]
        %v473 = vld [vmem:[%s240 + $0x528] sm:$0xff]
        %v474 = vld [vmem:[%s240 + $0x530] sm:$0xff]
        %v475 = vld [vmem:[%s240 + $0x538] sm:$0xff]
        %v476 = vld [vmem:[%s240 + $0x540] sm:$0xff]
        %v477 = vld [vmem:[%s240 + $0x548] sm:$0xff]
        %v478 = vld [vmem:[%s240 + $0x550] sm:$0xff]
        %v479 = vld [vmem:[%s240 + $0x558] sm:$0xff]
        %v480 = vld [vmem:[%s240 + $0x560] sm:$0xff]
        %v481 = vld [vmem:[%s240 + $0x568] sm:$0xff]
        %v482 = vld [vmem:[%s240 + $0x570] sm:$0xff]
        %v483 = vld [vmem:[%s240 + $0x578] sm:$0xff]
        %v484 = vld [vmem:[%s240 + $0x580] sm:$0xff]
        %v485 = vld [vmem:[%s240 + $0x588] sm:$0xff]
        %v486 = vld [vmem:[%s240 + $0x590] sm:$0xff]
        %v487 = vld [vmem:[%s240 + $0x598] sm:$0xff]
        %v488 = vld [vmem:[%s240 + $0x5a0] sm:$0xff]
        %v489 = vld [vmem:[%s240 + $0x5a8] sm:$0xff]
        %v490 = vld [vmem:[%s240 + $0x5b0] sm:$0xff]
        %v491 = vld [vmem:[%s240 + $0x5b8] sm:$0xff]
        %v492 = vld [vmem:[%s240 + $0x5c0] sm:$0xff]
        %v493 = vld [vmem:[%s240 + $0x5c8] sm:$0xff]
        %v494 = vld [vmem:[%s240 + $0x5d0] sm:$0xff]
        %v495 = vld [vmem:[%s240 + $0x5d8] sm:$0xff]
        %v496 = vld [vmem:[%s240 + $0x5e0] sm:$0xff]
        %v497 = vld [vmem:[%s240 + $0x5e8] sm:$0xff]
        %v498 = vld [vmem:[%s240 + $0x5f0] sm:$0xff]
        %v499 = vld [vmem:[%s240 + $0x5f8] sm:$0xff]
        %v500 = vld [vmem:[%s240 + $0x600] sm:$0xff]
        %v501 = vld [vmem:[%s240 + $0x608] sm:$0xff]
        %v502 = vld [vmem:[%s240 + $0x610] sm:$0xff]
        %v503 = vld [vmem:[%s240 + $0x618] sm:$0xff]
        %v504 = vld [vmem:[%s240 + $0x620] sm:$0xff]
        %v505 = vld [vmem:[%s240 + $0x628] sm:$0xff]
        %v506 = vld [vmem:[%s240 + $0x630] sm:$0xff]
        %v507 = vld [vmem:[%s240 + $0x638] sm:$0xff]
        %v508 = vld [vmem:[%s240 + $0x640] sm:$0xff]
        %v509 = vld [vmem:[%s240 + $0x648] sm:$0xff]
        %v510 = vld [vmem:[%s240 + $0x650] sm:$0xff]
        %v511 = vld [vmem:[%s240 + $0x658] sm:$0xff]
        %v512 = vld [vmem:[%s240 + $0x660] sm:$0xff]
        %v513 = vld [vmem:[%s240 + $0x668] sm:$0xff]
        %v514 = vld [vmem:[%s240 + $0x670] sm:$0xff]
        %v515 = vld [vmem:[%s240 + $0x678] sm:$0xff]
        %v516 = vld [vmem:[%s240 + $0x680] sm:$0xff]
        %v517 = vld [vmem:[%s240 + $0x688] sm:$0xff]
        %v518 = vld [vmem:[%s240 + $0x690] sm:$0xff]
        %v519 = vld [vmem:[%s240 + $0x698] sm:$0xff]
        %v520 = vld [vmem:[%s240 + $0x6a0] sm:$0xff]
        %v521 = vld [vmem:[%s240 + $0x6a8] sm:$0xff]
        %v522 = vld [vmem:[%s240 + $0x6b0] sm:$0xff]
        %v523 = vld [vmem:[%s240 + $0x6b8] sm:$0xff]
        %v524 = vld [vmem:[%s240 + $0x6c0] sm:$0xff]
        %v525 = vld [vmem:[%s240 + $0x6c8] sm:$0xff]
        %v526 = vld [vmem:[%s240 + $0x6d0] sm:$0xff]
        %v527 = vld [vmem:[%s240 + $0x6d8] sm:$0xff]
        %v528 = vld [vmem:[%s240 + $0x6e0] sm:$0xff]
        %v529 = vld [vmem:[%s240 + $0x6e8] sm:$0xff]
        %v530 = vld [vmem:[%s240 + $0x6f0] sm:$0xff]
        %v531 = vld [vmem:[%s240 + $0x6f8] sm:$0xff]
        %v532 = vld [vmem:[%s240 + $0x700] sm:$0xff]
        %v533 = vld [vmem:[%s240 + $0x708] sm:$0xff]
        %v534 = vld [vmem:[%s240 + $0x710] sm:$0xff]
        %v535 = vld [vmem:[%s240 + $0x718] sm:$0xff]
        %v536 = vld [vmem:[%s240 + $0x720] sm:$0xff]
        %v537 = vld [vmem:[%s240 + $0x728] sm:$0xff]
        %v538 = vld [vmem:[%s240 + $0x730] sm:$0xff]
        %v539 = vld [vmem:[%s240 + $0x738] sm:$0xff]
        %v540 = vld [vmem:[%s240 + $0x740] sm:$0xff]
        %v541 = vld [vmem:[%s240 + $0x748] sm:$0xff]
        %v542 = vld [vmem:[%s240 + $0x750] sm:$0xff]
        %v543 = vld [vmem:[%s240 + $0x758] sm:$0xff]
        %v544 = vld [vmem:[%s240 + $0x760] sm:$0xff]
        %v545 = vld [vmem:[%s240 + $0x768] sm:$0xff]
        %v546 = vld [vmem:[%s240 + $0x770] sm:$0xff]
        %v547 = vld [vmem:[%s240 + $0x778] sm:$0xff]
        %v548 = vld [vmem:[%s240 + $0x780] sm:$0xff]
        %v549 = vld [vmem:[%s240 + $0x788] sm:$0xff]
        %v550 = vld [vmem:[%s240 + $0x790] sm:$0xff]
        %v551 = vld [vmem:[%s240 + $0x798] sm:$0xff]
        %v552 = vld [vmem:[%s240 + $0x7a0] sm:$0xff]
        %v553 = vld [vmem:[%s240 + $0x7a8] sm:$0xff]
        %v554 = vld [vmem:[%s240 + $0x7b0] sm:$0xff]
        %v555 = vld [vmem:[%s240 + $0x7b8] sm:$0xff]
        %v556 = vld [vmem:[%s240 + $0x7c0] sm:$0xff]
        %v557 = vld [vmem:[%s240 + $0x7c8] sm:$0xff]
        %v558 = vld [vmem:[%s240 + $0x7d0] sm:$0xff]
        %v559 = vld [vmem:[%s240 + $0x7d8] sm:$0xff]
        %v560 = vld [vmem:[%s240 + $0x7e0] sm:$0xff]
        %v561 = vld [vmem:[%s240 + $0x7e8] sm:$0xff]
        %v562 = vld [vmem:[%s240 + $0x7f0] sm:$0xff]
        %v563 = vld [vmem:[%s240 + $0x7f8] sm:$0xff]
        %v564 = vld [vmem:[%s240 + $0x800] sm:$0xff]
        %v565 = vld [vmem:[%s240 + $0x808] sm:$0xff]
        %v566 = vld [vmem:[%s240 + $0x810] sm:$0xff]
        %v567 = vld [vmem:[%s240 + $0x818] sm:$0xff]
        %v568 = vld [vmem:[%s240 + $0x820] sm:$0xff]
        %v569 = vld [vmem:[%s240 + $0x828] sm:$0xff]
        %v570 = vld [vmem:[%s240 + $0x830] sm:$0xff]
        %v571 = vld [vmem:[%s240 + $0x838] sm:$0xff]
        %v572 = vld [vmem:[%s240 + $0x840] sm:$0xff]
        %v573 = vld [vmem:[%s240 + $0x848] sm:$0xff]
        %v574 = vld [vmem:[%s240 + $0x850] sm:$0xff]
        %v575 = vld [vmem:[%s240 + $0x858] sm:$0xff]
        %v576 = vld [vmem:[%s240 + $0x860] sm:$0xff]
        %v577 = vld [vmem:[%s240 + $0x868] sm:$0xff]
        %v578 = vld [vmem:[%s240 + $0x870] sm:$0xff]
        %v579 = vld [vmem:[%s240 + $0x878] sm:$0xff]
        %v580 = vld [vmem:[%s240 + $0x880] sm:$0xff]
        %v581 = vld [vmem:[%s240 + $0x888] sm:$0xff]
        %v582 = vld [vmem:[%s240 + $0x890] sm:$0xff]
        %v583 = vld [vmem:[%s240 + $0x898] sm:$0xff]
        %v584 = vld [vmem:[%s240 + $0x8a0] sm:$0xff]
        %v585 = vld [vmem:[%s240 + $0x8a8] sm:$0xff]
        %v586 = vld [vmem:[%s240 + $0x8b0] sm:$0xff]
        %v587 = vld [vmem:[%s240 + $0x8b8] sm:$0xff]
        %v588 = vld [vmem:[%s240 + $0x8c0] sm:$0xff]
        %v589 = vld [vmem:[%s240 + $0x8c8] sm:$0xff]
        %v590 = vld [vmem:[%s240 + $0x8d0] sm:$0xff]
        %v591 = vld [vmem:[%s240 + $0x8d8] sm:$0xff]
        %v592 = vld [vmem:[%s240 + $0x8e0] sm:$0xff]
        %v593 = vld [vmem:[%s240 + $0x8e8] sm:$0xff]
        %v594 = vld [vmem:[%s240 + $0x8f0] sm:$0xff]
        %v595 = vld [vmem:[%s240 + $0x8f8] sm:$0xff]
        %v596 = vld [vmem:[%s240 + $0x900] sm:$0xff]
        %v597 = vld [vmem:[%s240 + $0x908] sm:$0xff]
        %v598 = vld [vmem:[%s240 + $0x910] sm:$0xff]
        %v599 = vld [vmem:[%s240 + $0x918] sm:$0xff]
        %v600 = vld [vmem:[%s240 + $0x920] sm:$0xff]
        %v601 = vld [vmem:[%s240 + $0x928] sm:$0xff]
        %v602 = vld [vmem:[%s240 + $0x930] sm:$0xff]
        %v603 = vld [vmem:[%s240 + $0x938] sm:$0xff]
        %v604 = vld [vmem:[%s240 + $0x940] sm:$0xff]
        %v605 = vld [vmem:[%s240 + $0x948] sm:$0xff]
        %v606 = vld [vmem:[%s240 + $0x950] sm:$0xff]
        %v607 = vld [vmem:[%s240 + $0x958] sm:$0xff]
        %v608 = vld [vmem:[%s240 + $0x960] sm:$0xff]
        %v609 = vld [vmem:[%s240 + $0x968] sm:$0xff]
        %v610 = vld [vmem:[%s240 + $0x970] sm:$0xff]
        %v611 = vld [vmem:[%s240 + $0x978] sm:$0xff]
        %v612 = vld [vmem:[%s240 + $0x980] sm:$0xff]
        %v613 = vld [vmem:[%s240 + $0x988] sm:$0xff]
        %v614 = vld [vmem:[%s240 + $0x990] sm:$0xff]
        %v615 = vld [vmem:[%s240 + $0x998] sm:$0xff]
        %v616 = vld [vmem:[%s240 + $0x9a0] sm:$0xff]
        %v617 = vld [vmem:[%s240 + $0x9a8] sm:$0xff]
        %v618 = vld [vmem:[%s240 + $0x9b0] sm:$0xff]
        %v619 = vld [vmem:[%s240 + $0x9b8] sm:$0xff]
        %v620 = vld [vmem:[%s240 + $0x9c0] sm:$0xff]
        %v621 = vld [vmem:[%s240 + $0x9c8] sm:$0xff]
        %v622 = vld [vmem:[%s240 + $0x9d0] sm:$0xff]
        %v623 = vld [vmem:[%s240 + $0x9d8] sm:$0xff]
        %v624 = vld [vmem:[%s240 + $0x9e0] sm:$0xff]
        %v625 = vld [vmem:[%s240 + $0x9e8] sm:$0xff]
        %v626 = vld [vmem:[%s240 + $0x9f0] sm:$0xff]
        %v627 = vld [vmem:[%s240 + $0x9f8] sm:$0xff]
        %v628 = vld [vmem:[%s240 + $0xa00] sm:$0xff]
        %v629 = vld [vmem:[%s240 + $0xa08] sm:$0xff]
        %v630 = vld [vmem:[%s240 + $0xa10] sm:$0xff]
        %v631 = vld [vmem:[%s240 + $0xa18] sm:$0xff]
        %v632 = vld [vmem:[%s240 + $0xa20] sm:$0xff]
        %v633 = vld [vmem:[%s240 + $0xa28] sm:$0xff]
        %v634 = vld [vmem:[%s240 + $0xa30] sm:$0xff]
        %v635 = vld [vmem:[%s240 + $0xa38] sm:$0xff]
        %v636 = vld [vmem:[%s240 + $0xa40] sm:$0xff]
        %v637 = vld [vmem:[%s240 + $0xa48] sm:$0xff]
        %v638 = vld [vmem:[%s240 + $0xa50] sm:$0xff]
        %v639 = vld [vmem:[%s240 + $0xa58] sm:$0xff]
        %v640 = vld [vmem:[%s240 + $0xa60] sm:$0xff]
        %v641 = vld [vmem:[%s240 + $0xa68] sm:$0xff]
        %v642 = vld [vmem:[%s240 + $0xa70] sm:$0xff]
        %v643 = vld [vmem:[%s240 + $0xa78] sm:$0xff]
        %v644 = vld [vmem:[%s240 + $0xa80] sm:$0xff]
        %v645 = vld [vmem:[%s240 + $0xa88] sm:$0xff]
        %v646 = vld [vmem:[%s240 + $0xa90] sm:$0xff]
        %v647 = vld [vmem:[%s240 + $0xa98] sm:$0xff]
        %v648 = vld [vmem:[%s240 + $0xaa0] sm:$0xff]
        %v649 = vld [vmem:[%s240 + $0xaa8] sm:$0xff]
        %v650 = vld [vmem:[%s240 + $0xab0] sm:$0xff]
        %v651 = vld [vmem:[%s240 + $0xab8] sm:$0xff]
        %v652 = vld [vmem:[%s240 + $0xac0] sm:$0xff]
        %v653 = vld [vmem:[%s240 + $0xac8] sm:$0xff]
        %v654 = vld [vmem:[%s240 + $0xad0] sm:$0xff]
        %v655 = vld [vmem:[%s240 + $0xad8] sm:$0xff]
        %v656 = vld [vmem:[%s240 + $0xae0] sm:$0xff]
        %v657 = vld [vmem:[%s240 + $0xae8] sm:$0xff]
        %v658 = vld [vmem:[%s240 + $0xaf0] sm:$0xff]
        %v659 = vld [vmem:[%s240 + $0xaf8] sm:$0xff]
        %v660 = vld [vmem:[%s240 + $0xb00] sm:$0xff]
        %v661 = vld [vmem:[%s240 + $0xb08] sm:$0xff]
        %v662 = vld [vmem:[%s240 + $0xb10] sm:$0xff]
        %v663 = vld [vmem:[%s240 + $0xb18] sm:$0xff]
        %v664 = vld [vmem:[%s240 + $0xb20] sm:$0xff]
        %v665 = vld [vmem:[%s240 + $0xb28] sm:$0xff]
        %v666 = vld [vmem:[%s240 + $0xb30] sm:$0xff]
        %v667 = vld [vmem:[%s240 + $0xb38] sm:$0xff]
        %v668 = vld [vmem:[%s240 + $0xb40] sm:$0xff]
        %v669 = vld [vmem:[%s240 + $0xb48] sm:$0xff]
        %v670 = vld [vmem:[%s240 + $0xb50] sm:$0xff]
        %v671 = vld [vmem:[%s240 + $0xb58] sm:$0xff]
        %v672 = vld [vmem:[%s240 + $0xb60] sm:$0xff]
        %v673 = vld [vmem:[%s240 + $0xb68] sm:$0xff]
        %v674 = vld [vmem:[%s240 + $0xb70] sm:$0xff]
        %v675 = vld [vmem:[%s240 + $0xb78] sm:$0xff]
        %v676 = vld [vmem:[%s240 + $0xb80] sm:$0xff]
        %v677 = vld [vmem:[%s240 + $0xb88] sm:$0xff]
        %v678 = vld [vmem:[%s240 + $0xb90] sm:$0xff]
        %v679 = vld [vmem:[%s240 + $0xb98] sm:$0xff]
        %v680 = vld [vmem:[%s240 + $0xba0] sm:$0xff]
        %v681 = vld [vmem:[%s240 + $0xba8] sm:$0xff]
        %v682 = vld [vmem:[%s240 + $0xbb0] sm:$0xff]
        %v683 = vld [vmem:[%s240 + $0xbb8] sm:$0xff]
        %v684 = vld [vmem:[%s240 + $0xbc0] sm:$0xff]
        %v685 = vld [vmem:[%s240 + $0xbc8] sm:$0xff]
        %v686 = vld [vmem:[%s240 + $0xbd0] sm:$0xff]
        %v687 = vld [vmem:[%s240 + $0xbd8] sm:$0xff]
        %v688 = vld [vmem:[%s240 + $0xbe0] sm:$0xff]
        %v689 = vld [vmem:[%s240 + $0xbe8] sm:$0xff]
        %v690 = vld [vmem:[%s240 + $0xbf0] sm:$0xff]
        %v691 = vld [vmem:[%s240 + $0xbf8] sm:$0xff]
        %v692 = vld [vmem:[%s240 + $0xc00] sm:$0xff]
        %v693 = vld [vmem:[%s240 + $0xc08] sm:$0xff]
        %v694 = vld [vmem:[%s240 + $0xc10] sm:$0xff]
        %v695 = vld [vmem:[%s240 + $0xc18] sm:$0xff]
        %v696 = vld [vmem:[%s240 + $0xc20] sm:$0xff]
        %v697 = vld [vmem:[%s240 + $0xc28] sm:$0xff]
        %v698 = vld [vmem:[%s240 + $0xc30] sm:$0xff]
        %v699 = vld [vmem:[%s240 + $0xc38] sm:$0xff]
        %v700 = vld [vmem:[%s240 + $0xc40] sm:$0xff]
        %v701 = vld [vmem:[%s240 + $0xc48] sm:$0xff]
        %v702 = vld [vmem:[%s240 + $0xc50] sm:$0xff]
        %v703 = vld [vmem:[%s240 + $0xc58] sm:$0xff]
        %v704 = vld [vmem:[%s240 + $0xc60] sm:$0xff]
        %v705 = vld [vmem:[%s240 + $0xc68] sm:$0xff]
        %v706 = vld [vmem:[%s240 + $0xc70] sm:$0xff]
        %v707 = vld [vmem:[%s240 + $0xc78] sm:$0xff]
        %v708 = vld [vmem:[%s240 + $0xc80] sm:$0xff]
        %v709 = vld [vmem:[%s240 + $0xc88] sm:$0xff]
        %v710 = vld [vmem:[%s240 + $0xc90] sm:$0xff]
        %v711 = vld [vmem:[%s240 + $0xc98] sm:$0xff]
        %v712 = vld [vmem:[%s240 + $0xca0] sm:$0xff]
        %v713 = vld [vmem:[%s240 + $0xca8] sm:$0xff]
        %v714 = vld [vmem:[%s240 + $0xcb0] sm:$0xff]
        %v715 = vld [vmem:[%s240 + $0xcb8] sm:$0xff]
        %v716 = vld [vmem:[%s240 + $0xcc0] sm:$0xff]
        %v717 = vld [vmem:[%s240 + $0xcc8] sm:$0xff]
        %v718 = vld [vmem:[%s240 + $0xcd0] sm:$0xff]
        %v719 = vld [vmem:[%s240 + $0xcd8] sm:$0xff]
        %v720 = vld [vmem:[%s240 + $0xce0] sm:$0xff]
        %v721 = vld [vmem:[%s240 + $0xce8] sm:$0xff]
        %v722 = vld [vmem:[%s240 + $0xcf0] sm:$0xff]
        %v723 = vld [vmem:[%s240 + $0xcf8] sm:$0xff]
        %v724 = vld [vmem:[%s240 + $0xd00] sm:$0xff]
        %v725 = vld [vmem:[%s240 + $0xd08] sm:$0xff]
        %v726 = vld [vmem:[%s240 + $0xd10] sm:$0xff]
        %v727 = vld [vmem:[%s240 + $0xd18] sm:$0xff]
        %v728 = vld [vmem:[%s240 + $0xd20] sm:$0xff]
        %v729 = vld [vmem:[%s240 + $0xd28] sm:$0xff]
        %v730 = vld [vmem:[%s240 + $0xd30] sm:$0xff]
        %v731 = vld [vmem:[%s240 + $0xd38] sm:$0xff]
        %v732 = vld [vmem:[%s240 + $0xd40] sm:$0xff]
        %v733 = vld [vmem:[%s240 + $0xd48] sm:$0xff]
        %v734 = vld [vmem:[%s240 + $0xd50] sm:$0xff]
        %v735 = vld [vmem:[%s240 + $0xd58] sm:$0xff]
        %v736 = vld [vmem:[%s240 + $0xd60] sm:$0xff]
        %v737 = vld [vmem:[%s240 + $0xd68] sm:$0xff]
        %v738 = vld [vmem:[%s240 + $0xd70] sm:$0xff]
        %v739 = vld [vmem:[%s240 + $0xd78] sm:$0xff]
        %v740 = vld [vmem:[%s240 + $0xd80] sm:$0xff]
        %v741 = vld [vmem:[%s240 + $0xd88] sm:$0xff]
        %v742 = vld [vmem:[%s240 + $0xd90] sm:$0xff]
        %v743 = vld [vmem:[%s240 + $0xd98] sm:$0xff]
        %v744 = vld [vmem:[%s240 + $0xda0] sm:$0xff]
        %v745 = vld [vmem:[%s240 + $0xda8] sm:$0xff]
        %v746 = vld [vmem:[%s240 + $0xdb0] sm:$0xff]
        %v747 = vld [vmem:[%s240 + $0xdb8] sm:$0xff]
        %v748 = vld [vmem:[%s240 + $0xdc0] sm:$0xff]
        %v749 = vld [vmem:[%s240 + $0xdc8] sm:$0xff]
        %v750 = vld [vmem:[%s240 + $0xdd0] sm:$0xff]
        %v751 = vld [vmem:[%s240 + $0xdd8] sm:$0xff]
        %v752 = vld [vmem:[%s240 + $0xde0] sm:$0xff]
        %v753 = vld [vmem:[%s240 + $0xde8] sm:$0xff]
        %v754 = vld [vmem:[%s240 + $0xdf0] sm:$0xff]
        %v755 = vld [vmem:[%s240 + $0xdf8] sm:$0xff]
        %v756 = vld [vmem:[%s240 + $0xe00] sm:$0xff]
        %v757 = vld [vmem:[%s240 + $0xe08] sm:$0xff]
        %v758 = vld [vmem:[%s240 + $0xe10] sm:$0xff]
        %v759 = vld [vmem:[%s240 + $0xe18] sm:$0xff]
        %v760 = vld [vmem:[%s240 + $0xe20] sm:$0xff]
        %v761 = vld [vmem:[%s240 + $0xe28] sm:$0xff]
        %v762 = vld [vmem:[%s240 + $0xe30] sm:$0xff]
        %v763 = vld [vmem:[%s240 + $0xe38] sm:$0xff]
        %v764 = vld [vmem:[%s240 + $0xe40] sm:$0xff]
        %v765 = vld [vmem:[%s240 + $0xe48] sm:$0xff]
        %v766 = vld [vmem:[%s240 + $0xe50] sm:$0xff]
        %v767 = vld [vmem:[%s240 + $0xe58] sm:$0xff]
        %v768 = vld [vmem:[%s240 + $0xe60] sm:$0xff]
        %v769 = vld [vmem:[%s240 + $0xe68] sm:$0xff]
        %v770 = vld [vmem:[%s240 + $0xe70] sm:$0xff]
        %v771 = vld [vmem:[%s240 + $0xe78] sm:$0xff]
        %v772 = vld [vmem:[%s240 + $0xe80] sm:$0xff]
        %v773 = vld [vmem:[%s240 + $0xe88] sm:$0xff]
        %v774 = vld [vmem:[%s240 + $0xe90] sm:$0xff]
        %v775 = vld [vmem:[%s240 + $0xe98] sm:$0xff]
        %v776 = vld [vmem:[%s240 + $0xea0] sm:$0xff]
        %v777 = vld [vmem:[%s240 + $0xea8] sm:$0xff]
        %v778 = vld [vmem:[%s240 + $0xeb0] sm:$0xff]
        %v779 = vld [vmem:[%s240 + $0xeb8] sm:$0xff]
        %v780 = vld [vmem:[%s240 + $0xec0] sm:$0xff]
        %v781 = vld [vmem:[%s240 + $0xec8] sm:$0xff]
        %v782 = vld [vmem:[%s240 + $0xed0] sm:$0xff]
        %v783 = vld [vmem:[%s240 + $0xed8] sm:$0xff]
        %v784 = vld [vmem:[%s240 + $0xee0] sm:$0xff]
        %v785 = vld [vmem:[%s240 + $0xee8] sm:$0xff]
        %v786 = vld [vmem:[%s240 + $0xef0] sm:$0xff]
        %v787 = vld [vmem:[%s240 + $0xef8] sm:$0xff]
        %v788 = vld [vmem:[%s240 + $0xf00] sm:$0xff]
        %v789 = vld [vmem:[%s240 + $0xf08] sm:$0xff]
        %v790 = vld [vmem:[%s240 + $0xf10] sm:$0xff]
        %v791 = vld [vmem:[%s240 + $0xf18] sm:$0xff]
        %v792 = vld [vmem:[%s240 + $0xf20] sm:$0xff]
        %v793 = vld [vmem:[%s240 + $0xf28] sm:$0xff]
        %v794 = vld [vmem:[%s240 + $0xf30] sm:$0xff]
        %v795 = vld [vmem:[%s240 + $0xf38] sm:$0xff]
        %v796 = vld [vmem:[%s240 + $0xf40] sm:$0xff]
        %v797 = vld [vmem:[%s240 + $0xf48] sm:$0xff]
        %v798 = vld [vmem:[%s240 + $0xf50] sm:$0xff]
        %v799 = vld [vmem:[%s240 + $0xf58] sm:$0xff]
        %v800 = vld [vmem:[%s240 + $0xf60] sm:$0xff]
        %v801 = vld [vmem:[%s240 + $0xf68] sm:$0xff]
        %v802 = vld [vmem:[%s240 + $0xf70] sm:$0xff]
        %v803 = vld [vmem:[%s240 + $0xf78] sm:$0xff]
        %v804 = vld [vmem:[%s240 + $0xf80] sm:$0xff]
        %v805 = vld [vmem:[%s240 + $0xf88] sm:$0xff]
        %v806 = vld [vmem:[%s240 + $0xf90] sm:$0xff]
        %v807 = vld [vmem:[%s240 + $0xf98] sm:$0xff]
        %v808 = vld [vmem:[%s240 + $0xfa0] sm:$0xff]
        %v809 = vld [vmem:[%s240 + $0xfa8] sm:$0xff]
        %v810 = vld [vmem:[%s240 + $0xfb0] sm:$0xff]
        %v811 = vld [vmem:[%s240 + $0xfb8] sm:$0xff]
        %v812 = vld [vmem:[%s240 + $0xfc0] sm:$0xff]
        %v813 = vld [vmem:[%s240 + $0xfc8] sm:$0xff]
        %v814 = vld [vmem:[%s240 + $0xfd0] sm:$0xff]
        %v815 = vld [vmem:[%s240 + $0xfd8] sm:$0xff]
        %v816 = vld [vmem:[%s240 + $0xfe0] sm:$0xff]
        %v817 = vld [vmem:[%s240 + $0xfe8] sm:$0xff]
        %v818 = vld [vmem:[%s240 + $0xff0] sm:$0xff]
        %v819 = vld [vmem:[%s240 + $0xff8] sm:$0xff]
        %821 = vst [vmem:[#allocation1] ss:$9 sm:$0xff] %v306
        %v822 = vld [vmem:[#allocation1] sm:$0xff]
        %v823 = vld [vmem:[#allocation1 + $0x9] sm:$0xff]
        %v824 = vld [vmem:[#allocation1 + $0x12] sm:$0xff]
        %v825 = vld [vmem:[#allocation1 + $0x1b] sm:$0xff]
        %v826 = vld [vmem:[#allocation1 + $0x24] sm:$0xff]
        %v827 = vld [vmem:[#allocation1 + $0x2d] sm:$0xff]
        %v828 = vld [vmem:[#allocation1 + $0x36] sm:$0xff]
        %v829 = vld [vmem:[#allocation1 + $0x3f] sm:$0xff]
        %831 = vst [vmem:[#allocation1] ss:$9 sm:$0xff] %v307
        %v832 = vld [vmem:[#allocation1] sm:$0xff]
        %v833 = vld [vmem:[#allocation1 + $0x9] sm:$0xff]
        %v834 = vld [vmem:[#allocation1 + $0x12] sm:$0xff]
        %v835 = vld [vmem:[#allocation1 + $0x1b] sm:$0xff]
        %v836 = vld [vmem:[#allocation1 + $0x24] sm:$0xff]
        %v837 = vld [vmem:[#allocation1 + $0x2d] sm:$0xff]
        %v838 = vld [vmem:[#allocation1 + $0x36] sm:$0xff]
        %v839 = vld [vmem:[#allocation1 + $0x3f] sm:$0xff]
        %v1368 = vunpack.c.l.b16 %v308
        %v1369 = vunpack.c.h.b16 %v308
        %v1370 = vunpack.c.l.b16 %v309
        %v1371 = vunpack.c.h.b16 %v309
        %v1372 = vunpack.c.l.b16 %v310
        %v1373 = vunpack.c.h.b16 %v310
        %v1374 = vunpack.c.l.b16 %v311
        %v1375 = vunpack.c.h.b16 %v311
        %v1376 = vunpack.c.l.b16 %v312
        %v1377 = vunpack.c.h.b16 %v312
        %v1378 = vunpack.c.l.b16 %v313
        %v1379 = vunpack.c.h.b16 %v313
        %v1380 = vunpack.c.l.b16 %v314
        %v1381 = vunpack.c.h.b16 %v314
        %v1382 = vunpack.c.l.b16 %v315
        %v1383 = vunpack.c.h.b16 %v315
        %v1384 = vunpack.c.l.b16 %v316
        %v1385 = vunpack.c.h.b16 %v316
        %v1386 = vunpack.c.l.b16 %v317
        %v1387 = vunpack.c.h.b16 %v317
        %v1388 = vunpack.c.l.b16 %v318
        %v1389 = vunpack.c.h.b16 %v318
        %v1390 = vunpack.c.l.b16 %v319
        %v1391 = vunpack.c.h.b16 %v319
        %v1392 = vunpack.c.l.b16 %v320
        %v1393 = vunpack.c.h.b16 %v320
        %v1394 = vunpack.c.l.b16 %v321
        %v1395 = vunpack.c.h.b16 %v321
        %v1396 = vunpack.c.l.b16 %v322
        %v1397 = vunpack.c.h.b16 %v322
        %v1398 = vunpack.c.l.b16 %v323
        %v1399 = vunpack.c.h.b16 %v323
        %v1400 = vunpack.c.l.b16 %v324
        %v1401 = vunpack.c.h.b16 %v324
        %v1402 = vunpack.c.l.b16 %v325
        %v1403 = vunpack.c.h.b16 %v325
        %v1404 = vunpack.c.l.b16 %v326
        %v1405 = vunpack.c.h.b16 %v326
        %v1406 = vunpack.c.l.b16 %v327
        %v1407 = vunpack.c.h.b16 %v327
        %v1408 = vunpack.c.l.b16 %v328
        %v1409 = vunpack.c.h.b16 %v328
        %v1410 = vunpack.c.l.b16 %v329
        %v1411 = vunpack.c.h.b16 %v329
        %v1412 = vunpack.c.l.b16 %v330
        %v1413 = vunpack.c.h.b16 %v330
        %v1414 = vunpack.c.l.b16 %v331
        %v1415 = vunpack.c.h.b16 %v331
        %v1416 = vunpack.c.l.b16 %v332
        %v1417 = vunpack.c.h.b16 %v332
        %v1418 = vunpack.c.l.b16 %v333
        %v1419 = vunpack.c.h.b16 %v333
        %v1420 = vunpack.c.l.b16 %v334
        %v1421 = vunpack.c.h.b16 %v334
        %v1422 = vunpack.c.l.b16 %v335
        %v1423 = vunpack.c.h.b16 %v335
        %v1424 = vunpack.c.l.b16 %v336
        %v1425 = vunpack.c.h.b16 %v336
        %v1426 = vunpack.c.l.b16 %v337
        %v1427 = vunpack.c.h.b16 %v337
        %v1428 = vunpack.c.l.b16 %v338
        %v1429 = vunpack.c.h.b16 %v338
        %v1430 = vunpack.c.l.b16 %v339
        %v1431 = vunpack.c.h.b16 %v339
        %v1432 = vunpack.c.l.b16 %v340
        %v1433 = vunpack.c.h.b16 %v340
        %v1434 = vunpack.c.l.b16 %v341
        %v1435 = vunpack.c.h.b16 %v341
        %v1436 = vunpack.c.l.b16 %v342
        %v1437 = vunpack.c.h.b16 %v342
        %v1438 = vunpack.c.l.b16 %v343
        %v1439 = vunpack.c.h.b16 %v343
        %v1440 = vunpack.c.l.b16 %v344
        %v1441 = vunpack.c.h.b16 %v344
        %v1442 = vunpack.c.l.b16 %v345
        %v1443 = vunpack.c.h.b16 %v345
        %v1444 = vunpack.c.l.b16 %v346
        %v1445 = vunpack.c.h.b16 %v346
        %v1446 = vunpack.c.l.b16 %v347
        %v1447 = vunpack.c.h.b16 %v347
        %v1448 = vunpack.c.l.b16 %v348
        %v1449 = vunpack.c.h.b16 %v348
        %v1450 = vunpack.c.l.b16 %v349
        %v1451 = vunpack.c.h.b16 %v349
        %v1452 = vunpack.c.l.b16 %v350
        %v1453 = vunpack.c.h.b16 %v350
        %v1454 = vunpack.c.l.b16 %v351
        %v1455 = vunpack.c.h.b16 %v351
        %v1456 = vunpack.c.l.b16 %v352
        %v1457 = vunpack.c.h.b16 %v352
        %v1458 = vunpack.c.l.b16 %v353
        %v1459 = vunpack.c.h.b16 %v353
        %v1460 = vunpack.c.l.b16 %v354
        %v1461 = vunpack.c.h.b16 %v354
        %v1462 = vunpack.c.l.b16 %v355
        %v1463 = vunpack.c.h.b16 %v355
        %v1464 = vunpack.c.l.b16 %v356
        %v1465 = vunpack.c.h.b16 %v356
        %v1466 = vunpack.c.l.b16 %v357
        %v1467 = vunpack.c.h.b16 %v357
        %v1468 = vunpack.c.l.b16 %v358
        %v1469 = vunpack.c.h.b16 %v358
        %v1470 = vunpack.c.l.b16 %v359
        %v1471 = vunpack.c.h.b16 %v359
        %v1472 = vunpack.c.l.b16 %v360
        %v1473 = vunpack.c.h.b16 %v360
        %v1474 = vunpack.c.l.b16 %v361
        %v1475 = vunpack.c.h.b16 %v361
        %v1476 = vunpack.c.l.b16 %v362
        %v1477 = vunpack.c.h.b16 %v362
        %v1478 = vunpack.c.l.b16 %v363
        %v1479 = vunpack.c.h.b16 %v363
        %v1480 = vunpack.c.l.b16 %v364
        %v1481 = vunpack.c.h.b16 %v364
        %v1482 = vunpack.c.l.b16 %v365
        %v1483 = vunpack.c.h.b16 %v365
        %v1484 = vunpack.c.l.b16 %v366
        %v1485 = vunpack.c.h.b16 %v366
        %v1486 = vunpack.c.l.b16 %v367
        %v1487 = vunpack.c.h.b16 %v367
        %v1488 = vunpack.c.l.b16 %v368
        %v1489 = vunpack.c.h.b16 %v368
        %v1490 = vunpack.c.l.b16 %v369
        %v1491 = vunpack.c.h.b16 %v369
        %v1492 = vunpack.c.l.b16 %v370
        %v1493 = vunpack.c.h.b16 %v370
        %v1494 = vunpack.c.l.b16 %v371
        %v1495 = vunpack.c.h.b16 %v371
        %v1496 = vunpack.c.l.b16 %v372
        %v1497 = vunpack.c.h.b16 %v372
        %v1498 = vunpack.c.l.b16 %v373
        %v1499 = vunpack.c.h.b16 %v373
        %v1500 = vunpack.c.l.b16 %v374
        %v1501 = vunpack.c.h.b16 %v374
        %v1502 = vunpack.c.l.b16 %v375
        %v1503 = vunpack.c.h.b16 %v375
        %v1504 = vunpack.c.l.b16 %v376
        %v1505 = vunpack.c.h.b16 %v376
        %v1506 = vunpack.c.l.b16 %v377
        %v1507 = vunpack.c.h.b16 %v377
        %v1508 = vunpack.c.l.b16 %v378
        %v1509 = vunpack.c.h.b16 %v378
        %v1510 = vunpack.c.l.b16 %v379
        %v1511 = vunpack.c.h.b16 %v379
        %v1512 = vunpack.c.l.b16 %v380
        %v1513 = vunpack.c.h.b16 %v380
        %v1514 = vunpack.c.l.b16 %v381
        %v1515 = vunpack.c.h.b16 %v381
        %v1516 = vunpack.c.l.b16 %v382
        %v1517 = vunpack.c.h.b16 %v382
        %v1518 = vunpack.c.l.b16 %v383
        %v1519 = vunpack.c.h.b16 %v383
        %v1520 = vunpack.c.l.b16 %v384
        %v1521 = vunpack.c.h.b16 %v384
        %v1522 = vunpack.c.l.b16 %v385
        %v1523 = vunpack.c.h.b16 %v385
        %v1524 = vunpack.c.l.b16 %v386
        %v1525 = vunpack.c.h.b16 %v386
        %v1526 = vunpack.c.l.b16 %v387
        %v1527 = vunpack.c.h.b16 %v387
        %v1528 = vunpack.c.l.b16 %v388
        %v1529 = vunpack.c.h.b16 %v388
        %v1530 = vunpack.c.l.b16 %v389
        %v1531 = vunpack.c.h.b16 %v389
        %v1532 = vunpack.c.l.b16 %v390
        %v1533 = vunpack.c.h.b16 %v390
        %v1534 = vunpack.c.l.b16 %v391
        %v1535 = vunpack.c.h.b16 %v391
        %v1536 = vunpack.c.l.b16 %v392
        %v1537 = vunpack.c.h.b16 %v392
        %v1538 = vunpack.c.l.b16 %v393
        %v1539 = vunpack.c.h.b16 %v393
        %v1540 = vunpack.c.l.b16 %v394
        %v1541 = vunpack.c.h.b16 %v394
        %v1542 = vunpack.c.l.b16 %v395
        %v1543 = vunpack.c.h.b16 %v395
        %v1544 = vunpack.c.l.b16 %v396
        %v1545 = vunpack.c.h.b16 %v396
        %v1546 = vunpack.c.l.b16 %v397
        %v1547 = vunpack.c.h.b16 %v397
        %v1548 = vunpack.c.l.b16 %v398
        %v1549 = vunpack.c.h.b16 %v398
        %v1550 = vunpack.c.l.b16 %v399
        %v1551 = vunpack.c.h.b16 %v399
        %v1552 = vunpack.c.l.b16 %v400
        %v1553 = vunpack.c.h.b16 %v400
        %v1554 = vunpack.c.l.b16 %v401
        %v1555 = vunpack.c.h.b16 %v401
        %v1556 = vunpack.c.l.b16 %v402
        %v1557 = vunpack.c.h.b16 %v402
        %v1558 = vunpack.c.l.b16 %v403
        %v1559 = vunpack.c.h.b16 %v403
        %v1560 = vunpack.c.l.b16 %v404
        %v1561 = vunpack.c.h.b16 %v404
        %v1562 = vunpack.c.l.b16 %v405
        %v1563 = vunpack.c.h.b16 %v405
        %v1564 = vunpack.c.l.b16 %v406
        %v1565 = vunpack.c.h.b16 %v406
        %v1566 = vunpack.c.l.b16 %v407
        %v1567 = vunpack.c.h.b16 %v407
        %v1568 = vunpack.c.l.b16 %v408
        %v1569 = vunpack.c.h.b16 %v408
        %v1570 = vunpack.c.l.b16 %v409
        %v1571 = vunpack.c.h.b16 %v409
        %v1572 = vunpack.c.l.b16 %v410
        %v1573 = vunpack.c.h.b16 %v410
        %v1574 = vunpack.c.l.b16 %v411
        %v1575 = vunpack.c.h.b16 %v411
        %v1576 = vunpack.c.l.b16 %v412
        %v1577 = vunpack.c.h.b16 %v412
        %v1578 = vunpack.c.l.b16 %v413
        %v1579 = vunpack.c.h.b16 %v413
        %v1580 = vunpack.c.l.b16 %v414
        %v1581 = vunpack.c.h.b16 %v414
        %v1582 = vunpack.c.l.b16 %v415
        %v1583 = vunpack.c.h.b16 %v415
        %v1584 = vunpack.c.l.b16 %v416
        %v1585 = vunpack.c.h.b16 %v416
        %v1586 = vunpack.c.l.b16 %v417
        %v1587 = vunpack.c.h.b16 %v417
        %v1588 = vunpack.c.l.b16 %v418
        %v1589 = vunpack.c.h.b16 %v418
        %v1590 = vunpack.c.l.b16 %v419
        %v1591 = vunpack.c.h.b16 %v419
        %v1592 = vunpack.c.l.b16 %v420
        %v1593 = vunpack.c.h.b16 %v420
        %v1594 = vunpack.c.l.b16 %v421
        %v1595 = vunpack.c.h.b16 %v421
        %v1596 = vunpack.c.l.b16 %v422
        %v1597 = vunpack.c.h.b16 %v422
        %v1598 = vunpack.c.l.b16 %v423
        %v1599 = vunpack.c.h.b16 %v423
        %v1600 = vunpack.c.l.b16 %v424
        %v1601 = vunpack.c.h.b16 %v424
        %v1602 = vunpack.c.l.b16 %v425
        %v1603 = vunpack.c.h.b16 %v425
        %v1604 = vunpack.c.l.b16 %v426
        %v1605 = vunpack.c.h.b16 %v426
        %v1606 = vunpack.c.l.b16 %v427
        %v1607 = vunpack.c.h.b16 %v427
        %v1608 = vunpack.c.l.b16 %v428
        %v1609 = vunpack.c.h.b16 %v428
        %v1610 = vunpack.c.l.b16 %v429
        %v1611 = vunpack.c.h.b16 %v429
        %v1612 = vunpack.c.l.b16 %v430
        %v1613 = vunpack.c.h.b16 %v430
        %v1614 = vunpack.c.l.b16 %v431
        %v1615 = vunpack.c.h.b16 %v431
        %v1616 = vunpack.c.l.b16 %v432
        %v1617 = vunpack.c.h.b16 %v432
        %v1618 = vunpack.c.l.b16 %v433
        %v1619 = vunpack.c.h.b16 %v433
        %v1620 = vunpack.c.l.b16 %v434
        %v1621 = vunpack.c.h.b16 %v434
        %v1622 = vunpack.c.l.b16 %v435
        %v1623 = vunpack.c.h.b16 %v435
        %v1624 = vunpack.c.l.b16 %v436
        %v1625 = vunpack.c.h.b16 %v436
        %v1626 = vunpack.c.l.b16 %v437
        %v1627 = vunpack.c.h.b16 %v437
        %v1628 = vunpack.c.l.b16 %v438
        %v1629 = vunpack.c.h.b16 %v438
        %v1630 = vunpack.c.l.b16 %v439
        %v1631 = vunpack.c.h.b16 %v439
        %v1632 = vunpack.c.l.b16 %v440
        %v1633 = vunpack.c.h.b16 %v440
        %v1634 = vunpack.c.l.b16 %v441
        %v1635 = vunpack.c.h.b16 %v441
        %v1636 = vunpack.c.l.b16 %v442
        %v1637 = vunpack.c.h.b16 %v442
        %v1638 = vunpack.c.l.b16 %v443
        %v1639 = vunpack.c.h.b16 %v443
        %v1640 = vunpack.c.l.b16 %v444
        %v1641 = vunpack.c.h.b16 %v444
        %v1642 = vunpack.c.l.b16 %v445
        %v1643 = vunpack.c.h.b16 %v445
        %v1644 = vunpack.c.l.b16 %v446
        %v1645 = vunpack.c.h.b16 %v446
        %v1646 = vunpack.c.l.b16 %v447
        %v1647 = vunpack.c.h.b16 %v447
        %v1648 = vunpack.c.l.b16 %v448
        %v1649 = vunpack.c.h.b16 %v448
        %v1650 = vunpack.c.l.b16 %v449
        %v1651 = vunpack.c.h.b16 %v449
        %v1652 = vunpack.c.l.b16 %v450
        %v1653 = vunpack.c.h.b16 %v450
        %v1654 = vunpack.c.l.b16 %v451
        %v1655 = vunpack.c.h.b16 %v451
        %v1656 = vunpack.c.l.b16 %v452
        %v1657 = vunpack.c.h.b16 %v452
        %v1658 = vunpack.c.l.b16 %v453
        %v1659 = vunpack.c.h.b16 %v453
        %v1660 = vunpack.c.l.b16 %v454
        %v1661 = vunpack.c.h.b16 %v454
        %v1662 = vunpack.c.l.b16 %v455
        %v1663 = vunpack.c.h.b16 %v455
        %v1664 = vunpack.c.l.b16 %v456
        %v1665 = vunpack.c.h.b16 %v456
        %v1666 = vunpack.c.l.b16 %v457
        %v1667 = vunpack.c.h.b16 %v457
        %v1668 = vunpack.c.l.b16 %v458
        %v1669 = vunpack.c.h.b16 %v458
        %v1670 = vunpack.c.l.b16 %v459
        %v1671 = vunpack.c.h.b16 %v459
        %v1672 = vunpack.c.l.b16 %v460
        %v1673 = vunpack.c.h.b16 %v460
        %v1674 = vunpack.c.l.b16 %v461
        %v1675 = vunpack.c.h.b16 %v461
        %v1676 = vunpack.c.l.b16 %v462
        %v1677 = vunpack.c.h.b16 %v462
        %v1678 = vunpack.c.l.b16 %v463
        %v1679 = vunpack.c.h.b16 %v463
        %v1680 = vunpack.c.l.b16 %v464
        %v1681 = vunpack.c.h.b16 %v464
        %v1682 = vunpack.c.l.b16 %v465
        %v1683 = vunpack.c.h.b16 %v465
        %v1684 = vunpack.c.l.b16 %v466
        %v1685 = vunpack.c.h.b16 %v466
        %v1686 = vunpack.c.l.b16 %v467
        %v1687 = vunpack.c.h.b16 %v467
        %v1688 = vunpack.c.l.b16 %v468
        %v1689 = vunpack.c.h.b16 %v468
        %v1690 = vunpack.c.l.b16 %v469
        %v1691 = vunpack.c.h.b16 %v469
        %v1692 = vunpack.c.l.b16 %v470
        %v1693 = vunpack.c.h.b16 %v470
        %v1694 = vunpack.c.l.b16 %v471
        %v1695 = vunpack.c.h.b16 %v471
        %v1696 = vunpack.c.l.b16 %v472
        %v1697 = vunpack.c.h.b16 %v472
        %v1698 = vunpack.c.l.b16 %v473
        %v1699 = vunpack.c.h.b16 %v473
        %v1700 = vunpack.c.l.b16 %v474
        %v1701 = vunpack.c.h.b16 %v474
        %v1702 = vunpack.c.l.b16 %v475
        %v1703 = vunpack.c.h.b16 %v475
        %v1704 = vunpack.c.l.b16 %v476
        %v1705 = vunpack.c.h.b16 %v476
        %v1706 = vunpack.c.l.b16 %v477
        %v1707 = vunpack.c.h.b16 %v477
        %v1708 = vunpack.c.l.b16 %v478
        %v1709 = vunpack.c.h.b16 %v478
        %v1710 = vunpack.c.l.b16 %v479
        %v1711 = vunpack.c.h.b16 %v479
        %v1712 = vunpack.c.l.b16 %v480
        %v1713 = vunpack.c.h.b16 %v480
        %v1714 = vunpack.c.l.b16 %v481
        %v1715 = vunpack.c.h.b16 %v481
        %v1716 = vunpack.c.l.b16 %v482
        %v1717 = vunpack.c.h.b16 %v482
        %v1718 = vunpack.c.l.b16 %v483
        %v1719 = vunpack.c.h.b16 %v483
        %v1720 = vunpack.c.l.b16 %v484
        %v1721 = vunpack.c.h.b16 %v484
        %v1722 = vunpack.c.l.b16 %v485
        %v1723 = vunpack.c.h.b16 %v485
        %v1724 = vunpack.c.l.b16 %v486
        %v1725 = vunpack.c.h.b16 %v486
        %v1726 = vunpack.c.l.b16 %v487
        %v1727 = vunpack.c.h.b16 %v487
        %v1728 = vunpack.c.l.b16 %v488
        %v1729 = vunpack.c.h.b16 %v488
        %v1730 = vunpack.c.l.b16 %v489
        %v1731 = vunpack.c.h.b16 %v489
        %v1732 = vunpack.c.l.b16 %v490
        %v1733 = vunpack.c.h.b16 %v490
        %v1734 = vunpack.c.l.b16 %v491
        %v1735 = vunpack.c.h.b16 %v491
        %v1736 = vunpack.c.l.b16 %v492
        %v1737 = vunpack.c.h.b16 %v492
        %v1738 = vunpack.c.l.b16 %v493
        %v1739 = vunpack.c.h.b16 %v493
        %v1740 = vunpack.c.l.b16 %v494
        %v1741 = vunpack.c.h.b16 %v494
        %v1742 = vunpack.c.l.b16 %v495
        %v1743 = vunpack.c.h.b16 %v495
        %v1744 = vunpack.c.l.b16 %v496
        %v1745 = vunpack.c.h.b16 %v496
        %v1746 = vunpack.c.l.b16 %v497
        %v1747 = vunpack.c.h.b16 %v497
        %v1748 = vunpack.c.l.b16 %v498
        %v1749 = vunpack.c.h.b16 %v498
        %v1750 = vunpack.c.l.b16 %v499
        %v1751 = vunpack.c.h.b16 %v499
        %v1752 = vunpack.c.l.b16 %v500
        %v1753 = vunpack.c.h.b16 %v500
        %v1754 = vunpack.c.l.b16 %v501
        %v1755 = vunpack.c.h.b16 %v501
        %v1756 = vunpack.c.l.b16 %v502
        %v1757 = vunpack.c.h.b16 %v502
        %v1758 = vunpack.c.l.b16 %v503
        %v1759 = vunpack.c.h.b16 %v503
        %v1760 = vunpack.c.l.b16 %v504
        %v1761 = vunpack.c.h.b16 %v504
        %v1762 = vunpack.c.l.b16 %v505
        %v1763 = vunpack.c.h.b16 %v505
        %v1764 = vunpack.c.l.b16 %v506
        %v1765 = vunpack.c.h.b16 %v506
        %v1766 = vunpack.c.l.b16 %v507
        %v1767 = vunpack.c.h.b16 %v507
        %v1768 = vunpack.c.l.b16 %v508
        %v1769 = vunpack.c.h.b16 %v508
        %v1770 = vunpack.c.l.b16 %v509
        %v1771 = vunpack.c.h.b16 %v509
        %v1772 = vunpack.c.l.b16 %v510
        %v1773 = vunpack.c.h.b16 %v510
        %v1774 = vunpack.c.l.b16 %v511
        %v1775 = vunpack.c.h.b16 %v511
        %v1776 = vunpack.c.l.b16 %v512
        %v1777 = vunpack.c.h.b16 %v512
        %v1778 = vunpack.c.l.b16 %v513
        %v1779 = vunpack.c.h.b16 %v513
        %v1780 = vunpack.c.l.b16 %v514
        %v1781 = vunpack.c.h.b16 %v514
        %v1782 = vunpack.c.l.b16 %v515
        %v1783 = vunpack.c.h.b16 %v515
        %v1784 = vunpack.c.l.b16 %v516
        %v1785 = vunpack.c.h.b16 %v516
        %v1786 = vunpack.c.l.b16 %v517
        %v1787 = vunpack.c.h.b16 %v517
        %v1788 = vunpack.c.l.b16 %v518
        %v1789 = vunpack.c.h.b16 %v518
        %v1790 = vunpack.c.l.b16 %v519
        %v1791 = vunpack.c.h.b16 %v519
        %v1792 = vunpack.c.l.b16 %v520
        %v1793 = vunpack.c.h.b16 %v520
        %v1794 = vunpack.c.l.b16 %v521
        %v1795 = vunpack.c.h.b16 %v521
        %v1796 = vunpack.c.l.b16 %v522
        %v1797 = vunpack.c.h.b16 %v522
        %v1798 = vunpack.c.l.b16 %v523
        %v1799 = vunpack.c.h.b16 %v523
        %v1800 = vunpack.c.l.b16 %v524
        %v1801 = vunpack.c.h.b16 %v524
        %v1802 = vunpack.c.l.b16 %v525
        %v1803 = vunpack.c.h.b16 %v525
        %v1804 = vunpack.c.l.b16 %v526
        %v1805 = vunpack.c.h.b16 %v526
        %v1806 = vunpack.c.l.b16 %v527
        %v1807 = vunpack.c.h.b16 %v527
        %v1808 = vunpack.c.l.b16 %v528
        %v1809 = vunpack.c.h.b16 %v528
        %v1810 = vunpack.c.l.b16 %v529
        %v1811 = vunpack.c.h.b16 %v529
        %v1812 = vunpack.c.l.b16 %v530
        %v1813 = vunpack.c.h.b16 %v530
        %v1814 = vunpack.c.l.b16 %v531
        %v1815 = vunpack.c.h.b16 %v531
        %v1816 = vunpack.c.l.b16 %v532
        %v1817 = vunpack.c.h.b16 %v532
        %v1818 = vunpack.c.l.b16 %v533
        %v1819 = vunpack.c.h.b16 %v533
        %v1820 = vunpack.c.l.b16 %v534
        %v1821 = vunpack.c.h.b16 %v534
        %v1822 = vunpack.c.l.b16 %v535
        %v1823 = vunpack.c.h.b16 %v535
        %v1824 = vunpack.c.l.b16 %v536
        %v1825 = vunpack.c.h.b16 %v536
        %v1826 = vunpack.c.l.b16 %v537
        %v1827 = vunpack.c.h.b16 %v537
        %v1828 = vunpack.c.l.b16 %v538
        %v1829 = vunpack.c.h.b16 %v538
        %v1830 = vunpack.c.l.b16 %v539
        %v1831 = vunpack.c.h.b16 %v539
        %v1832 = vunpack.c.l.b16 %v540
        %v1833 = vunpack.c.h.b16 %v540
        %v1834 = vunpack.c.l.b16 %v541
        %v1835 = vunpack.c.h.b16 %v541
        %v1836 = vunpack.c.l.b16 %v542
        %v1837 = vunpack.c.h.b16 %v542
        %v1838 = vunpack.c.l.b16 %v543
        %v1839 = vunpack.c.h.b16 %v543
        %v1840 = vunpack.c.l.b16 %v544
        %v1841 = vunpack.c.h.b16 %v544
        %v1842 = vunpack.c.l.b16 %v545
        %v1843 = vunpack.c.h.b16 %v545
        %v1844 = vunpack.c.l.b16 %v546
        %v1845 = vunpack.c.h.b16 %v546
        %v1846 = vunpack.c.l.b16 %v547
        %v1847 = vunpack.c.h.b16 %v547
        %v1848 = vunpack.c.l.b16 %v548
        %v1849 = vunpack.c.h.b16 %v548
        %v1850 = vunpack.c.l.b16 %v549
        %v1851 = vunpack.c.h.b16 %v549
        %v1852 = vunpack.c.l.b16 %v550
        %v1853 = vunpack.c.h.b16 %v550
        %v1854 = vunpack.c.l.b16 %v551
        %v1855 = vunpack.c.h.b16 %v551
        %v1856 = vunpack.c.l.b16 %v552
        %v1857 = vunpack.c.h.b16 %v552
        %v1858 = vunpack.c.l.b16 %v553
        %v1859 = vunpack.c.h.b16 %v553
        %v1860 = vunpack.c.l.b16 %v554
        %v1861 = vunpack.c.h.b16 %v554
        %v1862 = vunpack.c.l.b16 %v555
        %v1863 = vunpack.c.h.b16 %v555
        %v1864 = vunpack.c.l.b16 %v556
        %v1865 = vunpack.c.h.b16 %v556
        %v1866 = vunpack.c.l.b16 %v557
        %v1867 = vunpack.c.h.b16 %v557
        %v1868 = vunpack.c.l.b16 %v558
        %v1869 = vunpack.c.h.b16 %v558
        %v1870 = vunpack.c.l.b16 %v559
        %v1871 = vunpack.c.h.b16 %v559
        %v1872 = vunpack.c.l.b16 %v560
        %v1873 = vunpack.c.h.b16 %v560
        %v1874 = vunpack.c.l.b16 %v561
        %v1875 = vunpack.c.h.b16 %v561
        %v1876 = vunpack.c.l.b16 %v562
        %v1877 = vunpack.c.h.b16 %v562
        %v1878 = vunpack.c.l.b16 %v563
        %v1879 = vunpack.c.h.b16 %v563
        %v1880 = vunpack.c.l.b16 %v564
        %v1881 = vunpack.c.h.b16 %v564
        %v1882 = vunpack.c.l.b16 %v565
        %v1883 = vunpack.c.h.b16 %v565
        %v1884 = vunpack.c.l.b16 %v566
        %v1885 = vunpack.c.h.b16 %v566
        %v1886 = vunpack.c.l.b16 %v567
        %v1887 = vunpack.c.h.b16 %v567
        %v1888 = vunpack.c.l.b16 %v568
        %v1889 = vunpack.c.h.b16 %v568
        %v1890 = vunpack.c.l.b16 %v569
        %v1891 = vunpack.c.h.b16 %v569
        %v1892 = vunpack.c.l.b16 %v570
        %v1893 = vunpack.c.h.b16 %v570
        %v1894 = vunpack.c.l.b16 %v571
        %v1895 = vunpack.c.h.b16 %v571
        %v1896 = vunpack.c.l.b16 %v572
        %v1897 = vunpack.c.h.b16 %v572
        %v1898 = vunpack.c.l.b16 %v573
        %v1899 = vunpack.c.h.b16 %v573
        %v1900 = vunpack.c.l.b16 %v574
        %v1901 = vunpack.c.h.b16 %v574
        %v1902 = vunpack.c.l.b16 %v575
        %v1903 = vunpack.c.h.b16 %v575
        %v1904 = vunpack.c.l.b16 %v576
        %v1905 = vunpack.c.h.b16 %v576
        %v1906 = vunpack.c.l.b16 %v577
        %v1907 = vunpack.c.h.b16 %v577
        %v1908 = vunpack.c.l.b16 %v578
        %v1909 = vunpack.c.h.b16 %v578
        %v1910 = vunpack.c.l.b16 %v579
        %v1911 = vunpack.c.h.b16 %v579
        %v1912 = vunpack.c.l.b16 %v580
        %v1913 = vunpack.c.h.b16 %v580
        %v1914 = vunpack.c.l.b16 %v581
        %v1915 = vunpack.c.h.b16 %v581
        %v1916 = vunpack.c.l.b16 %v582
        %v1917 = vunpack.c.h.b16 %v582
        %v1918 = vunpack.c.l.b16 %v583
        %v1919 = vunpack.c.h.b16 %v583
        %v1920 = vunpack.c.l.b16 %v584
        %v1921 = vunpack.c.h.b16 %v584
        %v1922 = vunpack.c.l.b16 %v585
        %v1923 = vunpack.c.h.b16 %v585
        %v1924 = vunpack.c.l.b16 %v586
        %v1925 = vunpack.c.h.b16 %v586
        %v1926 = vunpack.c.l.b16 %v587
        %v1927 = vunpack.c.h.b16 %v587
        %v1928 = vunpack.c.l.b16 %v588
        %v1929 = vunpack.c.h.b16 %v588
        %v1930 = vunpack.c.l.b16 %v589
        %v1931 = vunpack.c.h.b16 %v589
        %v1932 = vunpack.c.l.b16 %v590
        %v1933 = vunpack.c.h.b16 %v590
        %v1934 = vunpack.c.l.b16 %v591
        %v1935 = vunpack.c.h.b16 %v591
        %v1936 = vunpack.c.l.b16 %v592
        %v1937 = vunpack.c.h.b16 %v592
        %v1938 = vunpack.c.l.b16 %v593
        %v1939 = vunpack.c.h.b16 %v593
        %v1940 = vunpack.c.l.b16 %v594
        %v1941 = vunpack.c.h.b16 %v594
        %v1942 = vunpack.c.l.b16 %v595
        %v1943 = vunpack.c.h.b16 %v595
        %v1944 = vunpack.c.l.b16 %v596
        %v1945 = vunpack.c.h.b16 %v596
        %v1946 = vunpack.c.l.b16 %v597
        %v1947 = vunpack.c.h.b16 %v597
        %v1948 = vunpack.c.l.b16 %v598
        %v1949 = vunpack.c.h.b16 %v598
        %v1950 = vunpack.c.l.b16 %v599
        %v1951 = vunpack.c.h.b16 %v599
        %v1952 = vunpack.c.l.b16 %v600
        %v1953 = vunpack.c.h.b16 %v600
        %v1954 = vunpack.c.l.b16 %v601
        %v1955 = vunpack.c.h.b16 %v601
        %v1956 = vunpack.c.l.b16 %v602
        %v1957 = vunpack.c.h.b16 %v602
        %v1958 = vunpack.c.l.b16 %v603
        %v1959 = vunpack.c.h.b16 %v603
        %v1960 = vunpack.c.l.b16 %v604
        %v1961 = vunpack.c.h.b16 %v604
        %v1962 = vunpack.c.l.b16 %v605
        %v1963 = vunpack.c.h.b16 %v605
        %v1964 = vunpack.c.l.b16 %v606
        %v1965 = vunpack.c.h.b16 %v606
        %v1966 = vunpack.c.l.b16 %v607
        %v1967 = vunpack.c.h.b16 %v607
        %v1968 = vunpack.c.l.b16 %v608
        %v1969 = vunpack.c.h.b16 %v608
        %v1970 = vunpack.c.l.b16 %v609
        %v1971 = vunpack.c.h.b16 %v609
        %v1972 = vunpack.c.l.b16 %v610
        %v1973 = vunpack.c.h.b16 %v610
        %v1974 = vunpack.c.l.b16 %v611
        %v1975 = vunpack.c.h.b16 %v611
        %v1976 = vunpack.c.l.b16 %v612
        %v1977 = vunpack.c.h.b16 %v612
        %v1978 = vunpack.c.l.b16 %v613
        %v1979 = vunpack.c.h.b16 %v613
        %v1980 = vunpack.c.l.b16 %v614
        %v1981 = vunpack.c.h.b16 %v614
        %v1982 = vunpack.c.l.b16 %v615
        %v1983 = vunpack.c.h.b16 %v615
        %v1984 = vunpack.c.l.b16 %v616
        %v1985 = vunpack.c.h.b16 %v616
        %v1986 = vunpack.c.l.b16 %v617
        %v1987 = vunpack.c.h.b16 %v617
        %v1988 = vunpack.c.l.b16 %v618
        %v1989 = vunpack.c.h.b16 %v618
        %v1990 = vunpack.c.l.b16 %v619
        %v1991 = vunpack.c.h.b16 %v619
        %v1992 = vunpack.c.l.b16 %v620
        %v1993 = vunpack.c.h.b16 %v620
        %v1994 = vunpack.c.l.b16 %v621
        %v1995 = vunpack.c.h.b16 %v621
        %v1996 = vunpack.c.l.b16 %v622
        %v1997 = vunpack.c.h.b16 %v622
        %v1998 = vunpack.c.l.b16 %v623
        %v1999 = vunpack.c.h.b16 %v623
        %v2000 = vunpack.c.l.b16 %v624
        %v2001 = vunpack.c.h.b16 %v624
        %v2002 = vunpack.c.l.b16 %v625
        %v2003 = vunpack.c.h.b16 %v625
        %v2004 = vunpack.c.l.b16 %v626
        %v2005 = vunpack.c.h.b16 %v626
        %v2006 = vunpack.c.l.b16 %v627
        %v2007 = vunpack.c.h.b16 %v627
        %v2008 = vunpack.c.l.b16 %v628
        %v2009 = vunpack.c.h.b16 %v628
        %v2010 = vunpack.c.l.b16 %v629
        %v2011 = vunpack.c.h.b16 %v629
        %v2012 = vunpack.c.l.b16 %v630
        %v2013 = vunpack.c.h.b16 %v630
        %v2014 = vunpack.c.l.b16 %v631
        %v2015 = vunpack.c.h.b16 %v631
        %v2016 = vunpack.c.l.b16 %v632
        %v2017 = vunpack.c.h.b16 %v632
        %v2018 = vunpack.c.l.b16 %v633
        %v2019 = vunpack.c.h.b16 %v633
        %v2020 = vunpack.c.l.b16 %v634
        %v2021 = vunpack.c.h.b16 %v634
        %v2022 = vunpack.c.l.b16 %v635
        %v2023 = vunpack.c.h.b16 %v635
        %v2024 = vunpack.c.l.b16 %v636
        %v2025 = vunpack.c.h.b16 %v636
        %v2026 = vunpack.c.l.b16 %v637
        %v2027 = vunpack.c.h.b16 %v637
        %v2028 = vunpack.c.l.b16 %v638
        %v2029 = vunpack.c.h.b16 %v638
        %v2030 = vunpack.c.l.b16 %v639
        %v2031 = vunpack.c.h.b16 %v639
        %v2032 = vunpack.c.l.b16 %v640
        %v2033 = vunpack.c.h.b16 %v640
        %v2034 = vunpack.c.l.b16 %v641
        %v2035 = vunpack.c.h.b16 %v641
        %v2036 = vunpack.c.l.b16 %v642
        %v2037 = vunpack.c.h.b16 %v642
        %v2038 = vunpack.c.l.b16 %v643
        %v2039 = vunpack.c.h.b16 %v643
        %v2040 = vunpack.c.l.b16 %v644
        %v2041 = vunpack.c.h.b16 %v644
        %v2042 = vunpack.c.l.b16 %v645
        %v2043 = vunpack.c.h.b16 %v645
        %v2044 = vunpack.c.l.b16 %v646
        %v2045 = vunpack.c.h.b16 %v646
        %v2046 = vunpack.c.l.b16 %v647
        %v2047 = vunpack.c.h.b16 %v647
        %v2048 = vunpack.c.l.b16 %v648
        %v2049 = vunpack.c.h.b16 %v648
        %v2050 = vunpack.c.l.b16 %v649
        %v2051 = vunpack.c.h.b16 %v649
        %v2052 = vunpack.c.l.b16 %v650
        %v2053 = vunpack.c.h.b16 %v650
        %v2054 = vunpack.c.l.b16 %v651
        %v2055 = vunpack.c.h.b16 %v651
        %v2056 = vunpack.c.l.b16 %v652
        %v2057 = vunpack.c.h.b16 %v652
        %v2058 = vunpack.c.l.b16 %v653
        %v2059 = vunpack.c.h.b16 %v653
        %v2060 = vunpack.c.l.b16 %v654
        %v2061 = vunpack.c.h.b16 %v654
        %v2062 = vunpack.c.l.b16 %v655
        %v2063 = vunpack.c.h.b16 %v655
        %v2064 = vunpack.c.l.b16 %v656
        %v2065 = vunpack.c.h.b16 %v656
        %v2066 = vunpack.c.l.b16 %v657
        %v2067 = vunpack.c.h.b16 %v657
        %v2068 = vunpack.c.l.b16 %v658
        %v2069 = vunpack.c.h.b16 %v658
        %v2070 = vunpack.c.l.b16 %v659
        %v2071 = vunpack.c.h.b16 %v659
        %v2072 = vunpack.c.l.b16 %v660
        %v2073 = vunpack.c.h.b16 %v660
        %v2074 = vunpack.c.l.b16 %v661
        %v2075 = vunpack.c.h.b16 %v661
        %v2076 = vunpack.c.l.b16 %v662
        %v2077 = vunpack.c.h.b16 %v662
        %v2078 = vunpack.c.l.b16 %v663
        %v2079 = vunpack.c.h.b16 %v663
        %v2080 = vunpack.c.l.b16 %v664
        %v2081 = vunpack.c.h.b16 %v664
        %v2082 = vunpack.c.l.b16 %v665
        %v2083 = vunpack.c.h.b16 %v665
        %v2084 = vunpack.c.l.b16 %v666
        %v2085 = vunpack.c.h.b16 %v666
        %v2086 = vunpack.c.l.b16 %v667
        %v2087 = vunpack.c.h.b16 %v667
        %v2088 = vunpack.c.l.b16 %v668
        %v2089 = vunpack.c.h.b16 %v668
        %v2090 = vunpack.c.l.b16 %v669
        %v2091 = vunpack.c.h.b16 %v669
        %v2092 = vunpack.c.l.b16 %v670
        %v2093 = vunpack.c.h.b16 %v670
        %v2094 = vunpack.c.l.b16 %v671
        %v2095 = vunpack.c.h.b16 %v671
        %v2096 = vunpack.c.l.b16 %v672
        %v2097 = vunpack.c.h.b16 %v672
        %v2098 = vunpack.c.l.b16 %v673
        %v2099 = vunpack.c.h.b16 %v673
        %v2100 = vunpack.c.l.b16 %v674
        %v2101 = vunpack.c.h.b16 %v674
        %v2102 = vunpack.c.l.b16 %v675
        %v2103 = vunpack.c.h.b16 %v675
        %v2104 = vunpack.c.l.b16 %v676
        %v2105 = vunpack.c.h.b16 %v676
        %v2106 = vunpack.c.l.b16 %v677
        %v2107 = vunpack.c.h.b16 %v677
        %v2108 = vunpack.c.l.b16 %v678
        %v2109 = vunpack.c.h.b16 %v678
        %v2110 = vunpack.c.l.b16 %v679
        %v2111 = vunpack.c.h.b16 %v679
        %v2112 = vunpack.c.l.b16 %v680
        %v2113 = vunpack.c.h.b16 %v680
        %v2114 = vunpack.c.l.b16 %v681
        %v2115 = vunpack.c.h.b16 %v681
        %v2116 = vunpack.c.l.b16 %v682
        %v2117 = vunpack.c.h.b16 %v682
        %v2118 = vunpack.c.l.b16 %v683
        %v2119 = vunpack.c.h.b16 %v683
        %v2120 = vunpack.c.l.b16 %v684
        %v2121 = vunpack.c.h.b16 %v684
        %v2122 = vunpack.c.l.b16 %v685
        %v2123 = vunpack.c.h.b16 %v685
        %v2124 = vunpack.c.l.b16 %v686
        %v2125 = vunpack.c.h.b16 %v686
        %v2126 = vunpack.c.l.b16 %v687
        %v2127 = vunpack.c.h.b16 %v687
        %v2128 = vunpack.c.l.b16 %v688
        %v2129 = vunpack.c.h.b16 %v688
        %v2130 = vunpack.c.l.b16 %v689
        %v2131 = vunpack.c.h.b16 %v689
        %v2132 = vunpack.c.l.b16 %v690
        %v2133 = vunpack.c.h.b16 %v690
        %v2134 = vunpack.c.l.b16 %v691
        %v2135 = vunpack.c.h.b16 %v691
        %v2136 = vunpack.c.l.b16 %v692
        %v2137 = vunpack.c.h.b16 %v692
        %v2138 = vunpack.c.l.b16 %v693
        %v2139 = vunpack.c.h.b16 %v693
        %v2140 = vunpack.c.l.b16 %v694
        %v2141 = vunpack.c.h.b16 %v694
        %v2142 = vunpack.c.l.b16 %v695
        %v2143 = vunpack.c.h.b16 %v695
        %v2144 = vunpack.c.l.b16 %v696
        %v2145 = vunpack.c.h.b16 %v696
        %v2146 = vunpack.c.l.b16 %v697
        %v2147 = vunpack.c.h.b16 %v697
        %v2148 = vunpack.c.l.b16 %v698
        %v2149 = vunpack.c.h.b16 %v698
        %v2150 = vunpack.c.l.b16 %v699
        %v2151 = vunpack.c.h.b16 %v699
        %v2152 = vunpack.c.l.b16 %v700
        %v2153 = vunpack.c.h.b16 %v700
        %v2154 = vunpack.c.l.b16 %v701
        %v2155 = vunpack.c.h.b16 %v701
        %v2156 = vunpack.c.l.b16 %v702
        %v2157 = vunpack.c.h.b16 %v702
        %v2158 = vunpack.c.l.b16 %v703
        %v2159 = vunpack.c.h.b16 %v703
        %v2160 = vunpack.c.l.b16 %v704
        %v2161 = vunpack.c.h.b16 %v704
        %v2162 = vunpack.c.l.b16 %v705
        %v2163 = vunpack.c.h.b16 %v705
        %v2164 = vunpack.c.l.b16 %v706
        %v2165 = vunpack.c.h.b16 %v706
        %v2166 = vunpack.c.l.b16 %v707
        %v2167 = vunpack.c.h.b16 %v707
        %v2168 = vunpack.c.l.b16 %v708
        %v2169 = vunpack.c.h.b16 %v708
        %v2170 = vunpack.c.l.b16 %v709
        %v2171 = vunpack.c.h.b16 %v709
        %v2172 = vunpack.c.l.b16 %v710
        %v2173 = vunpack.c.h.b16 %v710
        %v2174 = vunpack.c.l.b16 %v711
        %v2175 = vunpack.c.h.b16 %v711
        %v2176 = vunpack.c.l.b16 %v712
        %v2177 = vunpack.c.h.b16 %v712
        %v2178 = vunpack.c.l.b16 %v713
        %v2179 = vunpack.c.h.b16 %v713
        %v2180 = vunpack.c.l.b16 %v714
        %v2181 = vunpack.c.h.b16 %v714
        %v2182 = vunpack.c.l.b16 %v715
        %v2183 = vunpack.c.h.b16 %v715
        %v2184 = vunpack.c.l.b16 %v716
        %v2185 = vunpack.c.h.b16 %v716
        %v2186 = vunpack.c.l.b16 %v717
        %v2187 = vunpack.c.h.b16 %v717
        %v2188 = vunpack.c.l.b16 %v718
        %v2189 = vunpack.c.h.b16 %v718
        %v2190 = vunpack.c.l.b16 %v719
        %v2191 = vunpack.c.h.b16 %v719
        %v2192 = vunpack.c.l.b16 %v720
        %v2193 = vunpack.c.h.b16 %v720
        %v2194 = vunpack.c.l.b16 %v721
        %v2195 = vunpack.c.h.b16 %v721
        %v2196 = vunpack.c.l.b16 %v722
        %v2197 = vunpack.c.h.b16 %v722
        %v2198 = vunpack.c.l.b16 %v723
        %v2199 = vunpack.c.h.b16 %v723
        %v2200 = vunpack.c.l.b16 %v724
        %v2201 = vunpack.c.h.b16 %v724
        %v2202 = vunpack.c.l.b16 %v725
        %v2203 = vunpack.c.h.b16 %v725
        %v2204 = vunpack.c.l.b16 %v726
        %v2205 = vunpack.c.h.b16 %v726
        %v2206 = vunpack.c.l.b16 %v727
        %v2207 = vunpack.c.h.b16 %v727
        %v2208 = vunpack.c.l.b16 %v728
        %v2209 = vunpack.c.h.b16 %v728
        %v2210 = vunpack.c.l.b16 %v729
        %v2211 = vunpack.c.h.b16 %v729
        %v2212 = vunpack.c.l.b16 %v730
        %v2213 = vunpack.c.h.b16 %v730
        %v2214 = vunpack.c.l.b16 %v731
        %v2215 = vunpack.c.h.b16 %v731
        %v2216 = vunpack.c.l.b16 %v732
        %v2217 = vunpack.c.h.b16 %v732
        %v2218 = vunpack.c.l.b16 %v733
        %v2219 = vunpack.c.h.b16 %v733
        %v2220 = vunpack.c.l.b16 %v734
        %v2221 = vunpack.c.h.b16 %v734
        %v2222 = vunpack.c.l.b16 %v735
        %v2223 = vunpack.c.h.b16 %v735
        %v2224 = vunpack.c.l.b16 %v736
        %v2225 = vunpack.c.h.b16 %v736
        %v2226 = vunpack.c.l.b16 %v737
        %v2227 = vunpack.c.h.b16 %v737
        %v2228 = vunpack.c.l.b16 %v738
        %v2229 = vunpack.c.h.b16 %v738
        %v2230 = vunpack.c.l.b16 %v739
        %v2231 = vunpack.c.h.b16 %v739
        %v2232 = vunpack.c.l.b16 %v740
        %v2233 = vunpack.c.h.b16 %v740
        %v2234 = vunpack.c.l.b16 %v741
        %v2235 = vunpack.c.h.b16 %v741
        %v2236 = vunpack.c.l.b16 %v742
        %v2237 = vunpack.c.h.b16 %v742
        %v2238 = vunpack.c.l.b16 %v743
        %v2239 = vunpack.c.h.b16 %v743
        %v2240 = vunpack.c.l.b16 %v744
        %v2241 = vunpack.c.h.b16 %v744
        %v2242 = vunpack.c.l.b16 %v745
        %v2243 = vunpack.c.h.b16 %v745
        %v2244 = vunpack.c.l.b16 %v746
        %v2245 = vunpack.c.h.b16 %v746
        %v2246 = vunpack.c.l.b16 %v747
        %v2247 = vunpack.c.h.b16 %v747
        %v2248 = vunpack.c.l.b16 %v748
        %v2249 = vunpack.c.h.b16 %v748
        %v2250 = vunpack.c.l.b16 %v749
        %v2251 = vunpack.c.h.b16 %v749
        %v2252 = vunpack.c.l.b16 %v750
        %v2253 = vunpack.c.h.b16 %v750
        %v2254 = vunpack.c.l.b16 %v751
        %v2255 = vunpack.c.h.b16 %v751
        %v2256 = vunpack.c.l.b16 %v752
        %v2257 = vunpack.c.h.b16 %v752
        %v2258 = vunpack.c.l.b16 %v753
        %v2259 = vunpack.c.h.b16 %v753
        %v2260 = vunpack.c.l.b16 %v754
        %v2261 = vunpack.c.h.b16 %v754
        %v2262 = vunpack.c.l.b16 %v755
        %v2263 = vunpack.c.h.b16 %v755
        %v2264 = vunpack.c.l.b16 %v756
        %v2265 = vunpack.c.h.b16 %v756
        %v2266 = vunpack.c.l.b16 %v757
        %v2267 = vunpack.c.h.b16 %v757
        %v2268 = vunpack.c.l.b16 %v758
        %v2269 = vunpack.c.h.b16 %v758
        %v2270 = vunpack.c.l.b16 %v759
        %v2271 = vunpack.c.h.b16 %v759
        %v2272 = vunpack.c.l.b16 %v760
        %v2273 = vunpack.c.h.b16 %v760
        %v2274 = vunpack.c.l.b16 %v761
        %v2275 = vunpack.c.h.b16 %v761
        %v2276 = vunpack.c.l.b16 %v762
        %v2277 = vunpack.c.h.b16 %v762
        %v2278 = vunpack.c.l.b16 %v763
        %v2279 = vunpack.c.h.b16 %v763
        %v2280 = vunpack.c.l.b16 %v764
        %v2281 = vunpack.c.h.b16 %v764
        %v2282 = vunpack.c.l.b16 %v765
        %v2283 = vunpack.c.h.b16 %v765
        %v2284 = vunpack.c.l.b16 %v766
        %v2285 = vunpack.c.h.b16 %v766
        %v2286 = vunpack.c.l.b16 %v767
        %v2287 = vunpack.c.h.b16 %v767
        %v2288 = vunpack.c.l.b16 %v768
        %v2289 = vunpack.c.h.b16 %v768
        %v2290 = vunpack.c.l.b16 %v769
        %v2291 = vunpack.c.h.b16 %v769
        %v2292 = vunpack.c.l.b16 %v770
        %v2293 = vunpack.c.h.b16 %v770
        %v2294 = vunpack.c.l.b16 %v771
        %v2295 = vunpack.c.h.b16 %v771
        %v2296 = vunpack.c.l.b16 %v772
        %v2297 = vunpack.c.h.b16 %v772
        %v2298 = vunpack.c.l.b16 %v773
        %v2299 = vunpack.c.h.b16 %v773
        %v2300 = vunpack.c.l.b16 %v774
        %v2301 = vunpack.c.h.b16 %v774
        %v2302 = vunpack.c.l.b16 %v775
        %v2303 = vunpack.c.h.b16 %v775
        %v2304 = vunpack.c.l.b16 %v776
        %v2305 = vunpack.c.h.b16 %v776
        %v2306 = vunpack.c.l.b16 %v777
        %v2307 = vunpack.c.h.b16 %v777
        %v2308 = vunpack.c.l.b16 %v778
        %v2309 = vunpack.c.h.b16 %v778
        %v2310 = vunpack.c.l.b16 %v779
        %v2311 = vunpack.c.h.b16 %v779
        %v2312 = vunpack.c.l.b16 %v780
        %v2313 = vunpack.c.h.b16 %v780
        %v2314 = vunpack.c.l.b16 %v781
        %v2315 = vunpack.c.h.b16 %v781
        %v2316 = vunpack.c.l.b16 %v782
        %v2317 = vunpack.c.h.b16 %v782
        %v2318 = vunpack.c.l.b16 %v783
        %v2319 = vunpack.c.h.b16 %v783
        %v2320 = vunpack.c.l.b16 %v784
        %v2321 = vunpack.c.h.b16 %v784
        %v2322 = vunpack.c.l.b16 %v785
        %v2323 = vunpack.c.h.b16 %v785
        %v2324 = vunpack.c.l.b16 %v786
        %v2325 = vunpack.c.h.b16 %v786
        %v2326 = vunpack.c.l.b16 %v787
        %v2327 = vunpack.c.h.b16 %v787
        %v2328 = vunpack.c.l.b16 %v788
        %v2329 = vunpack.c.h.b16 %v788
        %v2330 = vunpack.c.l.b16 %v789
        %v2331 = vunpack.c.h.b16 %v789
        %v2332 = vunpack.c.l.b16 %v790
        %v2333 = vunpack.c.h.b16 %v790
        %v2334 = vunpack.c.l.b16 %v791
        %v2335 = vunpack.c.h.b16 %v791
        %v2336 = vunpack.c.l.b16 %v792
        %v2337 = vunpack.c.h.b16 %v792
        %v2338 = vunpack.c.l.b16 %v793
        %v2339 = vunpack.c.h.b16 %v793
        %v2340 = vunpack.c.l.b16 %v794
        %v2341 = vunpack.c.h.b16 %v794
        %v2342 = vunpack.c.l.b16 %v795
        %v2343 = vunpack.c.h.b16 %v795
        %v2344 = vunpack.c.l.b16 %v796
        %v2345 = vunpack.c.h.b16 %v796
        %v2346 = vunpack.c.l.b16 %v797
        %v2347 = vunpack.c.h.b16 %v797
        %v2348 = vunpack.c.l.b16 %v798
        %v2349 = vunpack.c.h.b16 %v798
        %v2350 = vunpack.c.l.b16 %v799
        %v2351 = vunpack.c.h.b16 %v799
        %v2352 = vunpack.c.l.b16 %v800
        %v2353 = vunpack.c.h.b16 %v800
        %v2354 = vunpack.c.l.b16 %v801
        %v2355 = vunpack.c.h.b16 %v801
        %v2356 = vunpack.c.l.b16 %v802
        %v2357 = vunpack.c.h.b16 %v802
        %v2358 = vunpack.c.l.b16 %v803
        %v2359 = vunpack.c.h.b16 %v803
        %v2360 = vunpack.c.l.b16 %v804
        %v2361 = vunpack.c.h.b16 %v804
        %v2362 = vunpack.c.l.b16 %v805
        %v2363 = vunpack.c.h.b16 %v805
        %v2364 = vunpack.c.l.b16 %v806
        %v2365 = vunpack.c.h.b16 %v806
        %v2366 = vunpack.c.l.b16 %v807
        %v2367 = vunpack.c.h.b16 %v807
        %v2368 = vunpack.c.l.b16 %v808
        %v2369 = vunpack.c.h.b16 %v808
        %v2370 = vunpack.c.l.b16 %v809
        %v2371 = vunpack.c.h.b16 %v809
        %v2372 = vunpack.c.l.b16 %v810
        %v2373 = vunpack.c.h.b16 %v810
        %v2374 = vunpack.c.l.b16 %v811
        %v2375 = vunpack.c.h.b16 %v811
        %v2376 = vunpack.c.l.b16 %v812
        %v2377 = vunpack.c.h.b16 %v812
        %v2378 = vunpack.c.l.b16 %v813
        %v2379 = vunpack.c.h.b16 %v813
        %v2380 = vunpack.c.l.b16 %v814
        %v2381 = vunpack.c.h.b16 %v814
        %v2382 = vunpack.c.l.b16 %v815
        %v2383 = vunpack.c.h.b16 %v815
        %v2384 = vunpack.c.l.b16 %v816
        %v2385 = vunpack.c.h.b16 %v816
        %v2386 = vunpack.c.l.b16 %v817
        %v2387 = vunpack.c.h.b16 %v817
        %v2388 = vunpack.c.l.b16 %v818
        %v2389 = vunpack.c.h.b16 %v818
        %v2390 = vunpack.c.l.b16 %v819
        %v2391 = vunpack.c.h.b16 %v819
        %v2392 = vpack.c.b16 %v1372, %v1368
        %v2393 = vpack.c.b16 %v1373, %v1369
        %v2394 = vpack.c.b16 %v1374, %v1370
        %v2395 = vpack.c.b16 %v1375, %v1371
        %v2396 = vpack.c.b16 %v1380, %v1376
        %v2397 = vpack.c.b16 %v1381, %v1377
        %v2398 = vpack.c.b16 %v1382, %v1378
        %v2399 = vpack.c.b16 %v1383, %v1379
        %v2400 = vpack.c.b16 %v1388, %v1384
        %v2401 = vpack.c.b16 %v1389, %v1385
        %v2402 = vpack.c.b16 %v1390, %v1386
        %v2403 = vpack.c.b16 %v1391, %v1387
        %v2404 = vpack.c.b16 %v1396, %v1392
        %v2405 = vpack.c.b16 %v1397, %v1393
        %v2406 = vpack.c.b16 %v1398, %v1394
        %v2407 = vpack.c.b16 %v1399, %v1395
        %v2408 = vpack.c.b16 %v1404, %v1400
        %v2409 = vpack.c.b16 %v1405, %v1401
        %v2410 = vpack.c.b16 %v1406, %v1402
        %v2411 = vpack.c.b16 %v1407, %v1403
        %v2412 = vpack.c.b16 %v1412, %v1408
        %v2413 = vpack.c.b16 %v1413, %v1409
        %v2414 = vpack.c.b16 %v1414, %v1410
        %v2415 = vpack.c.b16 %v1415, %v1411
        %v2416 = vpack.c.b16 %v1420, %v1416
        %v2417 = vpack.c.b16 %v1421, %v1417
        %v2418 = vpack.c.b16 %v1422, %v1418
        %v2419 = vpack.c.b16 %v1423, %v1419
        %v2420 = vpack.c.b16 %v1428, %v1424
        %v2421 = vpack.c.b16 %v1429, %v1425
        %v2422 = vpack.c.b16 %v1430, %v1426
        %v2423 = vpack.c.b16 %v1431, %v1427
        %v2424 = vpack.c.b16 %v1436, %v1432
        %v2425 = vpack.c.b16 %v1437, %v1433
        %v2426 = vpack.c.b16 %v1438, %v1434
        %v2427 = vpack.c.b16 %v1439, %v1435
        %v2428 = vpack.c.b16 %v1444, %v1440
        %v2429 = vpack.c.b16 %v1445, %v1441
        %v2430 = vpack.c.b16 %v1446, %v1442
        %v2431 = vpack.c.b16 %v1447, %v1443
        %v2432 = vpack.c.b16 %v1452, %v1448
        %v2433 = vpack.c.b16 %v1453, %v1449
        %v2434 = vpack.c.b16 %v1454, %v1450
        %v2435 = vpack.c.b16 %v1455, %v1451
        %v2436 = vpack.c.b16 %v1460, %v1456
        %v2437 = vpack.c.b16 %v1461, %v1457
        %v2438 = vpack.c.b16 %v1462, %v1458
        %v2439 = vpack.c.b16 %v1463, %v1459
        %v2440 = vpack.c.b16 %v1468, %v1464
        %v2441 = vpack.c.b16 %v1469, %v1465
        %v2442 = vpack.c.b16 %v1470, %v1466
        %v2443 = vpack.c.b16 %v1471, %v1467
        %v2444 = vpack.c.b16 %v1476, %v1472
        %v2445 = vpack.c.b16 %v1477, %v1473
        %v2446 = vpack.c.b16 %v1478, %v1474
        %v2447 = vpack.c.b16 %v1479, %v1475
        %v2448 = vpack.c.b16 %v1484, %v1480
        %v2449 = vpack.c.b16 %v1485, %v1481
        %v2450 = vpack.c.b16 %v1486, %v1482
        %v2451 = vpack.c.b16 %v1487, %v1483
        %v2452 = vpack.c.b16 %v1492, %v1488
        %v2453 = vpack.c.b16 %v1493, %v1489
        %v2454 = vpack.c.b16 %v1494, %v1490
        %v2455 = vpack.c.b16 %v1495, %v1491
        %v2456 = vpack.c.b16 %v1500, %v1496
        %v2457 = vpack.c.b16 %v1501, %v1497
        %v2458 = vpack.c.b16 %v1502, %v1498
        %v2459 = vpack.c.b16 %v1503, %v1499
        %v2460 = vpack.c.b16 %v1508, %v1504
        %v2461 = vpack.c.b16 %v1509, %v1505
        %v2462 = vpack.c.b16 %v1510, %v1506
        %v2463 = vpack.c.b16 %v1511, %v1507
        %v2464 = vpack.c.b16 %v1516, %v1512
        %v2465 = vpack.c.b16 %v1517, %v1513
        %v2466 = vpack.c.b16 %v1518, %v1514
        %v2467 = vpack.c.b16 %v1519, %v1515
        %v2468 = vpack.c.b16 %v1524, %v1520
        %v2469 = vpack.c.b16 %v1525, %v1521
        %v2470 = vpack.c.b16 %v1526, %v1522
        %v2471 = vpack.c.b16 %v1527, %v1523
        %v2472 = vpack.c.b16 %v1532, %v1528
        %v2473 = vpack.c.b16 %v1533, %v1529
        %v2474 = vpack.c.b16 %v1534, %v1530
        %v2475 = vpack.c.b16 %v1535, %v1531
        %v2476 = vpack.c.b16 %v1540, %v1536
        %v2477 = vpack.c.b16 %v1541, %v1537
        %v2478 = vpack.c.b16 %v1542, %v1538
        %v2479 = vpack.c.b16 %v1543, %v1539
        %v2480 = vpack.c.b16 %v1548, %v1544
        %v2481 = vpack.c.b16 %v1549, %v1545
        %v2482 = vpack.c.b16 %v1550, %v1546
        %v2483 = vpack.c.b16 %v1551, %v1547
        %v2484 = vpack.c.b16 %v1556, %v1552
        %v2485 = vpack.c.b16 %v1557, %v1553
        %v2486 = vpack.c.b16 %v1558, %v1554
        %v2487 = vpack.c.b16 %v1559, %v1555
        %v2488 = vpack.c.b16 %v1564, %v1560
        %v2489 = vpack.c.b16 %v1565, %v1561
        %v2490 = vpack.c.b16 %v1566, %v1562
        %v2491 = vpack.c.b16 %v1567, %v1563
        %v2492 = vpack.c.b16 %v1572, %v1568
        %v2493 = vpack.c.b16 %v1573, %v1569
        %v2494 = vpack.c.b16 %v1574, %v1570
        %v2495 = vpack.c.b16 %v1575, %v1571
        %v2496 = vpack.c.b16 %v1580, %v1576
        %v2497 = vpack.c.b16 %v1581, %v1577
        %v2498 = vpack.c.b16 %v1582, %v1578
        %v2499 = vpack.c.b16 %v1583, %v1579
        %v2500 = vpack.c.b16 %v1588, %v1584
        %v2501 = vpack.c.b16 %v1589, %v1585
        %v2502 = vpack.c.b16 %v1590, %v1586
        %v2503 = vpack.c.b16 %v1591, %v1587
        %v2504 = vpack.c.b16 %v1596, %v1592
        %v2505 = vpack.c.b16 %v1597, %v1593
        %v2506 = vpack.c.b16 %v1598, %v1594
        %v2507 = vpack.c.b16 %v1599, %v1595
        %v2508 = vpack.c.b16 %v1604, %v1600
        %v2509 = vpack.c.b16 %v1605, %v1601
        %v2510 = vpack.c.b16 %v1606, %v1602
        %v2511 = vpack.c.b16 %v1607, %v1603
        %v2512 = vpack.c.b16 %v1612, %v1608
        %v2513 = vpack.c.b16 %v1613, %v1609
        %v2514 = vpack.c.b16 %v1614, %v1610
        %v2515 = vpack.c.b16 %v1615, %v1611
        %v2516 = vpack.c.b16 %v1620, %v1616
        %v2517 = vpack.c.b16 %v1621, %v1617
        %v2518 = vpack.c.b16 %v1622, %v1618
        %v2519 = vpack.c.b16 %v1623, %v1619
        %v2520 = vpack.c.b16 %v1628, %v1624
        %v2521 = vpack.c.b16 %v1629, %v1625
        %v2522 = vpack.c.b16 %v1630, %v1626
        %v2523 = vpack.c.b16 %v1631, %v1627
        %v2524 = vpack.c.b16 %v1636, %v1632
        %v2525 = vpack.c.b16 %v1637, %v1633
        %v2526 = vpack.c.b16 %v1638, %v1634
        %v2527 = vpack.c.b16 %v1639, %v1635
        %v2528 = vpack.c.b16 %v1644, %v1640
        %v2529 = vpack.c.b16 %v1645, %v1641
        %v2530 = vpack.c.b16 %v1646, %v1642
        %v2531 = vpack.c.b16 %v1647, %v1643
        %v2532 = vpack.c.b16 %v1652, %v1648
        %v2533 = vpack.c.b16 %v1653, %v1649
        %v2534 = vpack.c.b16 %v1654, %v1650
        %v2535 = vpack.c.b16 %v1655, %v1651
        %v2536 = vpack.c.b16 %v1660, %v1656
        %v2537 = vpack.c.b16 %v1661, %v1657
        %v2538 = vpack.c.b16 %v1662, %v1658
        %v2539 = vpack.c.b16 %v1663, %v1659
        %v2540 = vpack.c.b16 %v1668, %v1664
        %v2541 = vpack.c.b16 %v1669, %v1665
        %v2542 = vpack.c.b16 %v1670, %v1666
        %v2543 = vpack.c.b16 %v1671, %v1667
        %v2544 = vpack.c.b16 %v1676, %v1672
        %v2545 = vpack.c.b16 %v1677, %v1673
        %v2546 = vpack.c.b16 %v1678, %v1674
        %v2547 = vpack.c.b16 %v1679, %v1675
        %v2548 = vpack.c.b16 %v1684, %v1680
        %v2549 = vpack.c.b16 %v1685, %v1681
        %v2550 = vpack.c.b16 %v1686, %v1682
        %v2551 = vpack.c.b16 %v1687, %v1683
        %v2552 = vpack.c.b16 %v1692, %v1688
        %v2553 = vpack.c.b16 %v1693, %v1689
        %v2554 = vpack.c.b16 %v1694, %v1690
        %v2555 = vpack.c.b16 %v1695, %v1691
        %v2556 = vpack.c.b16 %v1700, %v1696
        %v2557 = vpack.c.b16 %v1701, %v1697
        %v2558 = vpack.c.b16 %v1702, %v1698
        %v2559 = vpack.c.b16 %v1703, %v1699
        %v2560 = vpack.c.b16 %v1708, %v1704
        %v2561 = vpack.c.b16 %v1709, %v1705
        %v2562 = vpack.c.b16 %v1710, %v1706
        %v2563 = vpack.c.b16 %v1711, %v1707
        %v2564 = vpack.c.b16 %v1716, %v1712
        %v2565 = vpack.c.b16 %v1717, %v1713
        %v2566 = vpack.c.b16 %v1718, %v1714
        %v2567 = vpack.c.b16 %v1719, %v1715
        %v2568 = vpack.c.b16 %v1724, %v1720
        %v2569 = vpack.c.b16 %v1725, %v1721
        %v2570 = vpack.c.b16 %v1726, %v1722
        %v2571 = vpack.c.b16 %v1727, %v1723
        %v2572 = vpack.c.b16 %v1732, %v1728
        %v2573 = vpack.c.b16 %v1733, %v1729
        %v2574 = vpack.c.b16 %v1734, %v1730
        %v2575 = vpack.c.b16 %v1735, %v1731
        %v2576 = vpack.c.b16 %v1740, %v1736
        %v2577 = vpack.c.b16 %v1741, %v1737
        %v2578 = vpack.c.b16 %v1742, %v1738
        %v2579 = vpack.c.b16 %v1743, %v1739
        %v2580 = vpack.c.b16 %v1748, %v1744
        %v2581 = vpack.c.b16 %v1749, %v1745
        %v2582 = vpack.c.b16 %v1750, %v1746
        %v2583 = vpack.c.b16 %v1751, %v1747
        %v2584 = vpack.c.b16 %v1756, %v1752
        %v2585 = vpack.c.b16 %v1757, %v1753
        %v2586 = vpack.c.b16 %v1758, %v1754
        %v2587 = vpack.c.b16 %v1759, %v1755
        %v2588 = vpack.c.b16 %v1764, %v1760
        %v2589 = vpack.c.b16 %v1765, %v1761
        %v2590 = vpack.c.b16 %v1766, %v1762
        %v2591 = vpack.c.b16 %v1767, %v1763
        %v2592 = vpack.c.b16 %v1772, %v1768
        %v2593 = vpack.c.b16 %v1773, %v1769
        %v2594 = vpack.c.b16 %v1774, %v1770
        %v2595 = vpack.c.b16 %v1775, %v1771
        %v2596 = vpack.c.b16 %v1780, %v1776
        %v2597 = vpack.c.b16 %v1781, %v1777
        %v2598 = vpack.c.b16 %v1782, %v1778
        %v2599 = vpack.c.b16 %v1783, %v1779
        %v2600 = vpack.c.b16 %v1788, %v1784
        %v2601 = vpack.c.b16 %v1789, %v1785
        %v2602 = vpack.c.b16 %v1790, %v1786
        %v2603 = vpack.c.b16 %v1791, %v1787
        %v2604 = vpack.c.b16 %v1796, %v1792
        %v2605 = vpack.c.b16 %v1797, %v1793
        %v2606 = vpack.c.b16 %v1798, %v1794
        %v2607 = vpack.c.b16 %v1799, %v1795
        %v2608 = vpack.c.b16 %v1804, %v1800
        %v2609 = vpack.c.b16 %v1805, %v1801
        %v2610 = vpack.c.b16 %v1806, %v1802
        %v2611 = vpack.c.b16 %v1807, %v1803
        %v2612 = vpack.c.b16 %v1812, %v1808
        %v2613 = vpack.c.b16 %v1813, %v1809
        %v2614 = vpack.c.b16 %v1814, %v1810
        %v2615 = vpack.c.b16 %v1815, %v1811
        %v2616 = vpack.c.b16 %v1820, %v1816
        %v2617 = vpack.c.b16 %v1821, %v1817
        %v2618 = vpack.c.b16 %v1822, %v1818
        %v2619 = vpack.c.b16 %v1823, %v1819
        %v2620 = vpack.c.b16 %v1828, %v1824
        %v2621 = vpack.c.b16 %v1829, %v1825
        %v2622 = vpack.c.b16 %v1830, %v1826
        %v2623 = vpack.c.b16 %v1831, %v1827
        %v2624 = vpack.c.b16 %v1836, %v1832
        %v2625 = vpack.c.b16 %v1837, %v1833
        %v2626 = vpack.c.b16 %v1838, %v1834
        %v2627 = vpack.c.b16 %v1839, %v1835
        %v2628 = vpack.c.b16 %v1844, %v1840
        %v2629 = vpack.c.b16 %v1845, %v1841
        %v2630 = vpack.c.b16 %v1846, %v1842
        %v2631 = vpack.c.b16 %v1847, %v1843
        %v2632 = vpack.c.b16 %v1852, %v1848
        %v2633 = vpack.c.b16 %v1853, %v1849
        %v2634 = vpack.c.b16 %v1854, %v1850
        %v2635 = vpack.c.b16 %v1855, %v1851
        %v2636 = vpack.c.b16 %v1860, %v1856
        %v2637 = vpack.c.b16 %v1861, %v1857
        %v2638 = vpack.c.b16 %v1862, %v1858
        %v2639 = vpack.c.b16 %v1863, %v1859
        %v2640 = vpack.c.b16 %v1868, %v1864
        %v2641 = vpack.c.b16 %v1869, %v1865
        %v2642 = vpack.c.b16 %v1870, %v1866
        %v2643 = vpack.c.b16 %v1871, %v1867
        %v2644 = vpack.c.b16 %v1876, %v1872
        %v2645 = vpack.c.b16 %v1877, %v1873
        %v2646 = vpack.c.b16 %v1878, %v1874
        %v2647 = vpack.c.b16 %v1879, %v1875
        %v2648 = vpack.c.b16 %v1884, %v1880
        %v2649 = vpack.c.b16 %v1885, %v1881
        %v2650 = vpack.c.b16 %v1886, %v1882
        %v2651 = vpack.c.b16 %v1887, %v1883
        %v2652 = vpack.c.b16 %v1892, %v1888
        %v2653 = vpack.c.b16 %v1893, %v1889
        %v2654 = vpack.c.b16 %v1894, %v1890
        %v2655 = vpack.c.b16 %v1895, %v1891
        %v2656 = vpack.c.b16 %v1900, %v1896
        %v2657 = vpack.c.b16 %v1901, %v1897
        %v2658 = vpack.c.b16 %v1902, %v1898
        %v2659 = vpack.c.b16 %v1903, %v1899
        %v2660 = vpack.c.b16 %v1908, %v1904
        %v2661 = vpack.c.b16 %v1909, %v1905
        %v2662 = vpack.c.b16 %v1910, %v1906
        %v2663 = vpack.c.b16 %v1911, %v1907
        %v2664 = vpack.c.b16 %v1916, %v1912
        %v2665 = vpack.c.b16 %v1917, %v1913
        %v2666 = vpack.c.b16 %v1918, %v1914
        %v2667 = vpack.c.b16 %v1919, %v1915
        %v2668 = vpack.c.b16 %v1924, %v1920
        %v2669 = vpack.c.b16 %v1925, %v1921
        %v2670 = vpack.c.b16 %v1926, %v1922
        %v2671 = vpack.c.b16 %v1927, %v1923
        %v2672 = vpack.c.b16 %v1932, %v1928
        %v2673 = vpack.c.b16 %v1933, %v1929
        %v2674 = vpack.c.b16 %v1934, %v1930
        %v2675 = vpack.c.b16 %v1935, %v1931
        %v2676 = vpack.c.b16 %v1940, %v1936
        %v2677 = vpack.c.b16 %v1941, %v1937
        %v2678 = vpack.c.b16 %v1942, %v1938
        %v2679 = vpack.c.b16 %v1943, %v1939
        %v2680 = vpack.c.b16 %v1948, %v1944
        %v2681 = vpack.c.b16 %v1949, %v1945
        %v2682 = vpack.c.b16 %v1950, %v1946
        %v2683 = vpack.c.b16 %v1951, %v1947
        %v2684 = vpack.c.b16 %v1956, %v1952
        %v2685 = vpack.c.b16 %v1957, %v1953
        %v2686 = vpack.c.b16 %v1958, %v1954
        %v2687 = vpack.c.b16 %v1959, %v1955
        %v2688 = vpack.c.b16 %v1964, %v1960
        %v2689 = vpack.c.b16 %v1965, %v1961
        %v2690 = vpack.c.b16 %v1966, %v1962
        %v2691 = vpack.c.b16 %v1967, %v1963
        %v2692 = vpack.c.b16 %v1972, %v1968
        %v2693 = vpack.c.b16 %v1973, %v1969
        %v2694 = vpack.c.b16 %v1974, %v1970
        %v2695 = vpack.c.b16 %v1975, %v1971
        %v2696 = vpack.c.b16 %v1980, %v1976
        %v2697 = vpack.c.b16 %v1981, %v1977
        %v2698 = vpack.c.b16 %v1982, %v1978
        %v2699 = vpack.c.b16 %v1983, %v1979
        %v2700 = vpack.c.b16 %v1988, %v1984
        %v2701 = vpack.c.b16 %v1989, %v1985
        %v2702 = vpack.c.b16 %v1990, %v1986
        %v2703 = vpack.c.b16 %v1991, %v1987
        %v2704 = vpack.c.b16 %v1996, %v1992
        %v2705 = vpack.c.b16 %v1997, %v1993
        %v2706 = vpack.c.b16 %v1998, %v1994
        %v2707 = vpack.c.b16 %v1999, %v1995
        %v2708 = vpack.c.b16 %v2004, %v2000
        %v2709 = vpack.c.b16 %v2005, %v2001
        %v2710 = vpack.c.b16 %v2006, %v2002
        %v2711 = vpack.c.b16 %v2007, %v2003
        %v2712 = vpack.c.b16 %v2012, %v2008
        %v2713 = vpack.c.b16 %v2013, %v2009
        %v2714 = vpack.c.b16 %v2014, %v2010
        %v2715 = vpack.c.b16 %v2015, %v2011
        %v2716 = vpack.c.b16 %v2020, %v2016
        %v2717 = vpack.c.b16 %v2021, %v2017
        %v2718 = vpack.c.b16 %v2022, %v2018
        %v2719 = vpack.c.b16 %v2023, %v2019
        %v2720 = vpack.c.b16 %v2028, %v2024
        %v2721 = vpack.c.b16 %v2029, %v2025
        %v2722 = vpack.c.b16 %v2030, %v2026
        %v2723 = vpack.c.b16 %v2031, %v2027
        %v2724 = vpack.c.b16 %v2036, %v2032
        %v2725 = vpack.c.b16 %v2037, %v2033
        %v2726 = vpack.c.b16 %v2038, %v2034
        %v2727 = vpack.c.b16 %v2039, %v2035
        %v2728 = vpack.c.b16 %v2044, %v2040
        %v2729 = vpack.c.b16 %v2045, %v2041
        %v2730 = vpack.c.b16 %v2046, %v2042
        %v2731 = vpack.c.b16 %v2047, %v2043
        %v2732 = vpack.c.b16 %v2052, %v2048
        %v2733 = vpack.c.b16 %v2053, %v2049
        %v2734 = vpack.c.b16 %v2054, %v2050
        %v2735 = vpack.c.b16 %v2055, %v2051
        %v2736 = vpack.c.b16 %v2060, %v2056
        %v2737 = vpack.c.b16 %v2061, %v2057
        %v2738 = vpack.c.b16 %v2062, %v2058
        %v2739 = vpack.c.b16 %v2063, %v2059
        %v2740 = vpack.c.b16 %v2068, %v2064
        %v2741 = vpack.c.b16 %v2069, %v2065
        %v2742 = vpack.c.b16 %v2070, %v2066
        %v2743 = vpack.c.b16 %v2071, %v2067
        %v2744 = vpack.c.b16 %v2076, %v2072
        %v2745 = vpack.c.b16 %v2077, %v2073
        %v2746 = vpack.c.b16 %v2078, %v2074
        %v2747 = vpack.c.b16 %v2079, %v2075
        %v2748 = vpack.c.b16 %v2084, %v2080
        %v2749 = vpack.c.b16 %v2085, %v2081
        %v2750 = vpack.c.b16 %v2086, %v2082
        %v2751 = vpack.c.b16 %v2087, %v2083
        %v2752 = vpack.c.b16 %v2092, %v2088
        %v2753 = vpack.c.b16 %v2093, %v2089
        %v2754 = vpack.c.b16 %v2094, %v2090
        %v2755 = vpack.c.b16 %v2095, %v2091
        %v2756 = vpack.c.b16 %v2100, %v2096
        %v2757 = vpack.c.b16 %v2101, %v2097
        %v2758 = vpack.c.b16 %v2102, %v2098
        %v2759 = vpack.c.b16 %v2103, %v2099
        %v2760 = vpack.c.b16 %v2108, %v2104
        %v2761 = vpack.c.b16 %v2109, %v2105
        %v2762 = vpack.c.b16 %v2110, %v2106
        %v2763 = vpack.c.b16 %v2111, %v2107
        %v2764 = vpack.c.b16 %v2116, %v2112
        %v2765 = vpack.c.b16 %v2117, %v2113
        %v2766 = vpack.c.b16 %v2118, %v2114
        %v2767 = vpack.c.b16 %v2119, %v2115
        %v2768 = vpack.c.b16 %v2124, %v2120
        %v2769 = vpack.c.b16 %v2125, %v2121
        %v2770 = vpack.c.b16 %v2126, %v2122
        %v2771 = vpack.c.b16 %v2127, %v2123
        %v2772 = vpack.c.b16 %v2132, %v2128
        %v2773 = vpack.c.b16 %v2133, %v2129
        %v2774 = vpack.c.b16 %v2134, %v2130
        %v2775 = vpack.c.b16 %v2135, %v2131
        %v2776 = vpack.c.b16 %v2140, %v2136
        %v2777 = vpack.c.b16 %v2141, %v2137
        %v2778 = vpack.c.b16 %v2142, %v2138
        %v2779 = vpack.c.b16 %v2143, %v2139
        %v2780 = vpack.c.b16 %v2148, %v2144
        %v2781 = vpack.c.b16 %v2149, %v2145
        %v2782 = vpack.c.b16 %v2150, %v2146
        %v2783 = vpack.c.b16 %v2151, %v2147
        %v2784 = vpack.c.b16 %v2156, %v2152
        %v2785 = vpack.c.b16 %v2157, %v2153
        %v2786 = vpack.c.b16 %v2158, %v2154
        %v2787 = vpack.c.b16 %v2159, %v2155
        %v2788 = vpack.c.b16 %v2164, %v2160
        %v2789 = vpack.c.b16 %v2165, %v2161
        %v2790 = vpack.c.b16 %v2166, %v2162
        %v2791 = vpack.c.b16 %v2167, %v2163
        %v2792 = vpack.c.b16 %v2172, %v2168
        %v2793 = vpack.c.b16 %v2173, %v2169
        %v2794 = vpack.c.b16 %v2174, %v2170
        %v2795 = vpack.c.b16 %v2175, %v2171
        %v2796 = vpack.c.b16 %v2180, %v2176
        %v2797 = vpack.c.b16 %v2181, %v2177
        %v2798 = vpack.c.b16 %v2182, %v2178
        %v2799 = vpack.c.b16 %v2183, %v2179
        %v2800 = vpack.c.b16 %v2188, %v2184
        %v2801 = vpack.c.b16 %v2189, %v2185
        %v2802 = vpack.c.b16 %v2190, %v2186
        %v2803 = vpack.c.b16 %v2191, %v2187
        %v2804 = vpack.c.b16 %v2196, %v2192
        %v2805 = vpack.c.b16 %v2197, %v2193
        %v2806 = vpack.c.b16 %v2198, %v2194
        %v2807 = vpack.c.b16 %v2199, %v2195
        %v2808 = vpack.c.b16 %v2204, %v2200
        %v2809 = vpack.c.b16 %v2205, %v2201
        %v2810 = vpack.c.b16 %v2206, %v2202
        %v2811 = vpack.c.b16 %v2207, %v2203
        %v2812 = vpack.c.b16 %v2212, %v2208
        %v2813 = vpack.c.b16 %v2213, %v2209
        %v2814 = vpack.c.b16 %v2214, %v2210
        %v2815 = vpack.c.b16 %v2215, %v2211
        %v2816 = vpack.c.b16 %v2220, %v2216
        %v2817 = vpack.c.b16 %v2221, %v2217
        %v2818 = vpack.c.b16 %v2222, %v2218
        %v2819 = vpack.c.b16 %v2223, %v2219
        %v2820 = vpack.c.b16 %v2228, %v2224
        %v2821 = vpack.c.b16 %v2229, %v2225
        %v2822 = vpack.c.b16 %v2230, %v2226
        %v2823 = vpack.c.b16 %v2231, %v2227
        %v2824 = vpack.c.b16 %v2236, %v2232
        %v2825 = vpack.c.b16 %v2237, %v2233
        %v2826 = vpack.c.b16 %v2238, %v2234
        %v2827 = vpack.c.b16 %v2239, %v2235
        %v2828 = vpack.c.b16 %v2244, %v2240
        %v2829 = vpack.c.b16 %v2245, %v2241
        %v2830 = vpack.c.b16 %v2246, %v2242
        %v2831 = vpack.c.b16 %v2247, %v2243
        %v2832 = vpack.c.b16 %v2252, %v2248
        %v2833 = vpack.c.b16 %v2253, %v2249
        %v2834 = vpack.c.b16 %v2254, %v2250
        %v2835 = vpack.c.b16 %v2255, %v2251
        %v2836 = vpack.c.b16 %v2260, %v2256
        %v2837 = vpack.c.b16 %v2261, %v2257
        %v2838 = vpack.c.b16 %v2262, %v2258
        %v2839 = vpack.c.b16 %v2263, %v2259
        %v2840 = vpack.c.b16 %v2268, %v2264
        %v2841 = vpack.c.b16 %v2269, %v2265
        %v2842 = vpack.c.b16 %v2270, %v2266
        %v2843 = vpack.c.b16 %v2271, %v2267
        %v2844 = vpack.c.b16 %v2276, %v2272
        %v2845 = vpack.c.b16 %v2277, %v2273
        %v2846 = vpack.c.b16 %v2278, %v2274
        %v2847 = vpack.c.b16 %v2279, %v2275
        %v2848 = vpack.c.b16 %v2284, %v2280
        %v2849 = vpack.c.b16 %v2285, %v2281
        %v2850 = vpack.c.b16 %v2286, %v2282
        %v2851 = vpack.c.b16 %v2287, %v2283
        %v2852 = vpack.c.b16 %v2292, %v2288
        %v2853 = vpack.c.b16 %v2293, %v2289
        %v2854 = vpack.c.b16 %v2294, %v2290
        %v2855 = vpack.c.b16 %v2295, %v2291
        %v2856 = vpack.c.b16 %v2300, %v2296
        %v2857 = vpack.c.b16 %v2301, %v2297
        %v2858 = vpack.c.b16 %v2302, %v2298
        %v2859 = vpack.c.b16 %v2303, %v2299
        %v2860 = vpack.c.b16 %v2308, %v2304
        %v2861 = vpack.c.b16 %v2309, %v2305
        %v2862 = vpack.c.b16 %v2310, %v2306
        %v2863 = vpack.c.b16 %v2311, %v2307
        %v2864 = vpack.c.b16 %v2316, %v2312
        %v2865 = vpack.c.b16 %v2317, %v2313
        %v2866 = vpack.c.b16 %v2318, %v2314
        %v2867 = vpack.c.b16 %v2319, %v2315
        %v2868 = vpack.c.b16 %v2324, %v2320
        %v2869 = vpack.c.b16 %v2325, %v2321
        %v2870 = vpack.c.b16 %v2326, %v2322
        %v2871 = vpack.c.b16 %v2327, %v2323
        %v2872 = vpack.c.b16 %v2332, %v2328
        %v2873 = vpack.c.b16 %v2333, %v2329
        %v2874 = vpack.c.b16 %v2334, %v2330
        %v2875 = vpack.c.b16 %v2335, %v2331
        %v2876 = vpack.c.b16 %v2340, %v2336
        %v2877 = vpack.c.b16 %v2341, %v2337
        %v2878 = vpack.c.b16 %v2342, %v2338
        %v2879 = vpack.c.b16 %v2343, %v2339
        %v2880 = vpack.c.b16 %v2348, %v2344
        %v2881 = vpack.c.b16 %v2349, %v2345
        %v2882 = vpack.c.b16 %v2350, %v2346
        %v2883 = vpack.c.b16 %v2351, %v2347
        %v2884 = vpack.c.b16 %v2356, %v2352
        %v2885 = vpack.c.b16 %v2357, %v2353
        %v2886 = vpack.c.b16 %v2358, %v2354
        %v2887 = vpack.c.b16 %v2359, %v2355
        %v2888 = vpack.c.b16 %v2364, %v2360
        %v2889 = vpack.c.b16 %v2365, %v2361
        %v2890 = vpack.c.b16 %v2366, %v2362
        %v2891 = vpack.c.b16 %v2367, %v2363
        %v2892 = vpack.c.b16 %v2372, %v2368
        %v2893 = vpack.c.b16 %v2373, %v2369
        %v2894 = vpack.c.b16 %v2374, %v2370
        %v2895 = vpack.c.b16 %v2375, %v2371
        %v2896 = vpack.c.b16 %v2380, %v2376
        %v2897 = vpack.c.b16 %v2381, %v2377
        %v2898 = vpack.c.b16 %v2382, %v2378
        %v2899 = vpack.c.b16 %v2383, %v2379
        %v2900 = vpack.c.b16 %v2388, %v2384
        %v2901 = vpack.c.b16 %v2389, %v2385
        %v2902 = vpack.c.b16 %v2390, %v2386
        %v2903 = vpack.c.b16 %v2391, %v2387
        %3416 = vmatpush.bf16.msra.mxu0 %v2420
        %3417 = vmatpush.bf16.msra.mxu0 %v2416
        %3418 = vmatpush.bf16.msra.mxu0 %v2412
        %3419 = vmatpush.bf16.msra.mxu0 %v2408
        %3420 = vmatpush.bf16.msra.mxu0 %v2404
        %3421 = vmatpush.bf16.msra.mxu0 %v2400
        %3422 = vmatpush.bf16.msra.mxu0 %v2396
        %3423 = vmatpush.bf16.msra.mxu0 %v2392
        %3424 = vmatmul.bf16.gmra.mxu0 %v822
        %v3425 = vpop.f32.mrf.mxu0
        %v3426 = vadd.f32 0.0, %v3425
        %v3427 = vpop.f32.mrf.mxu0
        %3428 = vdwg.mxu0
        %3429 = vmatpush.bf16.msra.mxu0 %v2452
        %3430 = vmatpush.bf16.msra.mxu0 %v2448
        %3431 = vmatpush.bf16.msra.mxu0 %v2444
        %3432 = vmatpush.bf16.msra.mxu0 %v2440
        %3433 = vmatpush.bf16.msra.mxu0 %v2436
        %3434 = vmatpush.bf16.msra.mxu0 %v2432
        %3435 = vmatpush.bf16.msra.mxu0 %v2428
        %3436 = vmatpush.bf16.msra.mxu0 %v2424
        %3437 = vmatmul.bf16.gmra.mxu0 %v823
        %v3438 = vpop.f32.mrf.mxu0
        %v3439 = vadd.f32 %v3426, %v3438
        %v3440 = vpop.f32.mrf.mxu0
        %3441 = vdwg.mxu0
        %3442 = vmatpush.bf16.msra.mxu0 %v2484
        %3443 = vmatpush.bf16.msra.mxu0 %v2480
        %3444 = vmatpush.bf16.msra.mxu0 %v2476
        %3445 = vmatpush.bf16.msra.mxu0 %v2472
        %3446 = vmatpush.bf16.msra.mxu0 %v2468
        %3447 = vmatpush.bf16.msra.mxu0 %v2464
        %3448 = vmatpush.bf16.msra.mxu0 %v2460
        %3449 = vmatpush.bf16.msra.mxu0 %v2456
        %3450 = vmatmul.bf16.gmra.mxu0 %v824
        %v3451 = vpop.f32.mrf.mxu0
        %v3452 = vadd.f32 %v3439, %v3451
        %v3453 = vpop.f32.mrf.mxu0
        %3454 = vdwg.mxu0
        %3455 = vmatpush.bf16.msra.mxu0 %v2516
        %3456 = vmatpush.bf16.msra.mxu0 %v2512
        %3457 = vmatpush.bf16.msra.mxu0 %v2508
        %3458 = vmatpush.bf16.msra.mxu0 %v2504
        %3459 = vmatpush.bf16.msra.mxu0 %v2500
        %3460 = vmatpush.bf16.msra.mxu0 %v2496
        %3461 = vmatpush.bf16.msra.mxu0 %v2492
        %3462 = vmatpush.bf16.msra.mxu0 %v2488
        %3463 = vmatmul.bf16.gmra.mxu0 %v825
        %v3464 = vpop.f32.mrf.mxu0
        %v3465 = vadd.f32 %v3452, %v3464
        %v3466 = vpop.f32.mrf.mxu0
        %3467 = vdwg.mxu0
        %3468 = vmatpush.bf16.msra.mxu0 %v2548
        %3469 = vmatpush.bf16.msra.mxu0 %v2544
        %3470 = vmatpush.bf16.msra.mxu0 %v2540
        %3471 = vmatpush.bf16.msra.mxu0 %v2536
        %3472 = vmatpush.bf16.msra.mxu0 %v2532
        %3473 = vmatpush.bf16.msra.mxu0 %v2528
        %3474 = vmatpush.bf16.msra.mxu0 %v2524
        %3475 = vmatpush.bf16.msra.mxu0 %v2520
        %3476 = vmatmul.bf16.gmra.mxu0 %v826
        %v3477 = vpop.f32.mrf.mxu0
        %v3478 = vadd.f32 %v3465, %v3477
        %v3479 = vpop.f32.mrf.mxu0
        %3480 = vdwg.mxu0
        %3481 = vmatpush.bf16.msra.mxu0 %v2580
        %3482 = vmatpush.bf16.msra.mxu0 %v2576
        %3483 = vmatpush.bf16.msra.mxu0 %v2572
        %3484 = vmatpush.bf16.msra.mxu0 %v2568
        %3485 = vmatpush.bf16.msra.mxu0 %v2564
        %3486 = vmatpush.bf16.msra.mxu0 %v2560
        %3487 = vmatpush.bf16.msra.mxu0 %v2556
        %3488 = vmatpush.bf16.msra.mxu0 %v2552
        %3489 = vmatmul.bf16.gmra.mxu0 %v827
        %v3490 = vpop.f32.mrf.mxu0
        %v3491 = vadd.f32 %v3478, %v3490
        %v3492 = vpop.f32.mrf.mxu0
        %3493 = vdwg.mxu0
        %3494 = vmatpush.bf16.msra.mxu0 %v2612
        %3495 = vmatpush.bf16.msra.mxu0 %v2608
        %3496 = vmatpush.bf16.msra.mxu0 %v2604
        %3497 = vmatpush.bf16.msra.mxu0 %v2600
        %3498 = vmatpush.bf16.msra.mxu0 %v2596
        %3499 = vmatpush.bf16.msra.mxu0 %v2592
        %3500 = vmatpush.bf16.msra.mxu0 %v2588
        %3501 = vmatpush.bf16.msra.mxu0 %v2584
        %3502 = vmatmul.bf16.gmra.mxu0 %v828
        %v3503 = vpop.f32.mrf.mxu0
        %v3504 = vadd.f32 %v3491, %v3503
        %v3505 = vpop.f32.mrf.mxu0
        %3506 = vdwg.mxu0
        %3507 = vmatpush.bf16.msra.mxu0 %v2644
        %3508 = vmatpush.bf16.msra.mxu0 %v2640
        %3509 = vmatpush.bf16.msra.mxu0 %v2636
        %3510 = vmatpush.bf16.msra.mxu0 %v2632
        %3511 = vmatpush.bf16.msra.mxu0 %v2628
        %3512 = vmatpush.bf16.msra.mxu0 %v2624
        %3513 = vmatpush.bf16.msra.mxu0 %v2620
        %3514 = vmatpush.bf16.msra.mxu0 %v2616
        %3515 = vmatmul.bf16.gmra.mxu0 %v829
        %v3516 = vpop.f32.mrf.mxu0
        %v3517 = vadd.f32 %v3504, %v3516
        %v3518 = vpop.f32.mrf.mxu0
        %3519 = vdwg.mxu0
        %3520 = vmatpush.bf16.msra.mxu0 %v2676
        %3521 = vmatpush.bf16.msra.mxu0 %v2672
        %3522 = vmatpush.bf16.msra.mxu0 %v2668
        %3523 = vmatpush.bf16.msra.mxu0 %v2664
        %3524 = vmatpush.bf16.msra.mxu0 %v2660
        %3525 = vmatpush.bf16.msra.mxu0 %v2656
        %3526 = vmatpush.bf16.msra.mxu0 %v2652
        %3527 = vmatpush.bf16.msra.mxu0 %v2648
        %3528 = vmatmul.bf16.gmra.mxu0 %v832
        %v3529 = vpop.f32.mrf.mxu0
        %v3530 = vadd.f32 %v3517, %v3529
        %v3531 = vpop.f32.mrf.mxu0
        %3532 = vdwg.mxu0
        %3533 = vmatpush.bf16.msra.mxu0 %v2708
        %3534 = vmatpush.bf16.msra.mxu0 %v2704
        %3535 = vmatpush.bf16.msra.mxu0 %v2700
        %3536 = vmatpush.bf16.msra.mxu0 %v2696
        %3537 = vmatpush.bf16.msra.mxu0 %v2692
        %3538 = vmatpush.bf16.msra.mxu0 %v2688
        %3539 = vmatpush.bf16.msra.mxu0 %v2684
        %3540 = vmatpush.bf16.msra.mxu0 %v2680
        %3541 = vmatmul.bf16.gmra.mxu0 %v833
        %v3542 = vpop.f32.mrf.mxu0
        %v3543 = vadd.f32 %v3530, %v3542
        %v3544 = vpop.f32.mrf.mxu0
        %3545 = vdwg.mxu0
        %3546 = vmatpush.bf16.msra.mxu0 %v2740
        %3547 = vmatpush.bf16.msra.mxu0 %v2736
        %3548 = vmatpush.bf16.msra.mxu0 %v2732
        %3549 = vmatpush.bf16.msra.mxu0 %v2728
        %3550 = vmatpush.bf16.msra.mxu0 %v2724
        %3551 = vmatpush.bf16.msra.mxu0 %v2720
        %3552 = vmatpush.bf16.msra.mxu0 %v2716
        %3553 = vmatpush.bf16.msra.mxu0 %v2712
        %3554 = vmatmul.bf16.gmra.mxu0 %v834
        %v3555 = vpop.f32.mrf.mxu0
        %v3556 = vadd.f32 %v3543, %v3555
        %v3557 = vpop.f32.mrf.mxu0
        %3558 = vdwg.mxu0
        %3559 = vmatpush.bf16.msra.mxu0 %v2772
        %3560 = vmatpush.bf16.msra.mxu0 %v2768
        %3561 = vmatpush.bf16.msra.mxu0 %v2764
        %3562 = vmatpush.bf16.msra.mxu0 %v2760
        %3563 = vmatpush.bf16.msra.mxu0 %v2756
        %3564 = vmatpush.bf16.msra.mxu0 %v2752
        %3565 = vmatpush.bf16.msra.mxu0 %v2748
        %3566 = vmatpush.bf16.msra.mxu0 %v2744
        %3567 = vmatmul.bf16.gmra.mxu0 %v835
        %v3568 = vpop.f32.mrf.mxu0
        %v3569 = vadd.f32 %v3556, %v3568
        %v3570 = vpop.f32.mrf.mxu0
        %3571 = vdwg.mxu0
        %3572 = vmatpush.bf16.msra.mxu0 %v2804
        %3573 = vmatpush.bf16.msra.mxu0 %v2800
        %3574 = vmatpush.bf16.msra.mxu0 %v2796
        %3575 = vmatpush.bf16.msra.mxu0 %v2792
        %3576 = vmatpush.bf16.msra.mxu0 %v2788
        %3577 = vmatpush.bf16.msra.mxu0 %v2784
        %3578 = vmatpush.bf16.msra.mxu0 %v2780
        %3579 = vmatpush.bf16.msra.mxu0 %v2776
        %3580 = vmatmul.bf16.gmra.mxu0 %v836
        %v3581 = vpop.f32.mrf.mxu0
        %v3582 = vadd.f32 %v3569, %v3581
        %v3583 = vpop.f32.mrf.mxu0
        %3584 = vdwg.mxu0
        %3585 = vmatpush.bf16.msra.mxu0 %v2836
        %3586 = vmatpush.bf16.msra.mxu0 %v2832
        %3587 = vmatpush.bf16.msra.mxu0 %v2828
        %3588 = vmatpush.bf16.msra.mxu0 %v2824
        %3589 = vmatpush.bf16.msra.mxu0 %v2820
        %3590 = vmatpush.bf16.msra.mxu0 %v2816
        %3591 = vmatpush.bf16.msra.mxu0 %v2812
        %3592 = vmatpush.bf16.msra.mxu0 %v2808
        %3593 = vmatmul.bf16.gmra.mxu0 %v837
        %v3594 = vpop.f32.mrf.mxu0
        %v3595 = vadd.f32 %v3582, %v3594
        %v3596 = vpop.f32.mrf.mxu0
        %3597 = vdwg.mxu0
        %3598 = vmatpush.bf16.msra.mxu0 %v2868
        %3599 = vmatpush.bf16.msra.mxu0 %v2864
        %3600 = vmatpush.bf16.msra.mxu0 %v2860
        %3601 = vmatpush.bf16.msra.mxu0 %v2856
        %3602 = vmatpush.bf16.msra.mxu0 %v2852
        %3603 = vmatpush.bf16.msra.mxu0 %v2848
        %3604 = vmatpush.bf16.msra.mxu0 %v2844
        %3605 = vmatpush.bf16.msra.mxu0 %v2840
        %3606 = vmatmul.bf16.gmra.mxu0 %v838
        %v3607 = vpop.f32.mrf.mxu0
        %v3608 = vadd.f32 %v3595, %v3607
        %v3609 = vpop.f32.mrf.mxu0
        %3610 = vdwg.mxu0
        %3611 = vmatpush.bf16.msra.mxu0 %v2900
        %3612 = vmatpush.bf16.msra.mxu0 %v2896
        %3613 = vmatpush.bf16.msra.mxu0 %v2892
        %3614 = vmatpush.bf16.msra.mxu0 %v2888
        %3615 = vmatpush.bf16.msra.mxu0 %v2884
        %3616 = vmatpush.bf16.msra.mxu0 %v2880
        %3617 = vmatpush.bf16.msra.mxu0 %v2876
        %3618 = vmatpush.bf16.msra.mxu0 %v2872
        %3619 = vmatmul.bf16.gmra.mxu0 %v839
        %v3620 = vpop.f32.mrf.mxu0
        %v3621 = vadd.f32 %v3608, %v3620
        %v3622 = vpop.f32.mrf.mxu0
        %3623 = vdwg.mxu0
        %3624 = vmatpush.bf16.msra.mxu0 %v2421
        %3625 = vmatpush.bf16.msra.mxu0 %v2417
        %3626 = vmatpush.bf16.msra.mxu0 %v2413
        %3627 = vmatpush.bf16.msra.mxu0 %v2409
        %3628 = vmatpush.bf16.msra.mxu0 %v2405
        %3629 = vmatpush.bf16.msra.mxu0 %v2401
        %3630 = vmatpush.bf16.msra.mxu0 %v2397
        %3631 = vmatpush.bf16.msra.mxu0 %v2393
        %3632 = vmatmul.bf16.gmra.mxu0 %v822
        %v3633 = vpop.f32.mrf.mxu0
        %v3634 = vadd.f32 0.0, %v3633
        %v3635 = vpop.f32.mrf.mxu0
        %3636 = vdwg.mxu0
        %3637 = vmatpush.bf16.msra.mxu0 %v2453
        %3638 = vmatpush.bf16.msra.mxu0 %v2449
        %3639 = vmatpush.bf16.msra.mxu0 %v2445
        %3640 = vmatpush.bf16.msra.mxu0 %v2441
        %3641 = vmatpush.bf16.msra.mxu0 %v2437
        %3642 = vmatpush.bf16.msra.mxu0 %v2433
        %3643 = vmatpush.bf16.msra.mxu0 %v2429
        %3644 = vmatpush.bf16.msra.mxu0 %v2425
        %3645 = vmatmul.bf16.gmra.mxu0 %v823
        %v3646 = vpop.f32.mrf.mxu0
        %v3647 = vadd.f32 %v3634, %v3646
        %v3648 = vpop.f32.mrf.mxu0
        %3649 = vdwg.mxu0
        %3650 = vmatpush.bf16.msra.mxu0 %v2485
        %3651 = vmatpush.bf16.msra.mxu0 %v2481
        %3652 = vmatpush.bf16.msra.mxu0 %v2477
        %3653 = vmatpush.bf16.msra.mxu0 %v2473
        %3654 = vmatpush.bf16.msra.mxu0 %v2469
        %3655 = vmatpush.bf16.msra.mxu0 %v2465
        %3656 = vmatpush.bf16.msra.mxu0 %v2461
        %3657 = vmatpush.bf16.msra.mxu0 %v2457
        %3658 = vmatmul.bf16.gmra.mxu0 %v824
        %v3659 = vpop.f32.mrf.mxu0
        %v3660 = vadd.f32 %v3647, %v3659
        %v3661 = vpop.f32.mrf.mxu0
        %3662 = vdwg.mxu0
        %3663 = vmatpush.bf16.msra.mxu0 %v2517
        %3664 = vmatpush.bf16.msra.mxu0 %v2513
        %3665 = vmatpush.bf16.msra.mxu0 %v2509
        %3666 = vmatpush.bf16.msra.mxu0 %v2505
        %3667 = vmatpush.bf16.msra.mxu0 %v2501
        %3668 = vmatpush.bf16.msra.mxu0 %v2497
        %3669 = vmatpush.bf16.msra.mxu0 %v2493
        %3670 = vmatpush.bf16.msra.mxu0 %v2489
        %3671 = vmatmul.bf16.gmra.mxu0 %v825
        %v3672 = vpop.f32.mrf.mxu0
        %v3673 = vadd.f32 %v3660, %v3672
        %v3674 = vpop.f32.mrf.mxu0
        %3675 = vdwg.mxu0
        %3676 = vmatpush.bf16.msra.mxu0 %v2549
        %3677 = vmatpush.bf16.msra.mxu0 %v2545
        %3678 = vmatpush.bf16.msra.mxu0 %v2541
        %3679 = vmatpush.bf16.msra.mxu0 %v2537
        %3680 = vmatpush.bf16.msra.mxu0 %v2533
        %3681 = vmatpush.bf16.msra.mxu0 %v2529
        %3682 = vmatpush.bf16.msra.mxu0 %v2525
        %3683 = vmatpush.bf16.msra.mxu0 %v2521
        %3684 = vmatmul.bf16.gmra.mxu0 %v826
        %v3685 = vpop.f32.mrf.mxu0
        %v3686 = vadd.f32 %v3673, %v3685
        %v3687 = vpop.f32.mrf.mxu0
        %3688 = vdwg.mxu0
        %3689 = vmatpush.bf16.msra.mxu0 %v2581
        %3690 = vmatpush.bf16.msra.mxu0 %v2577
        %3691 = vmatpush.bf16.msra.mxu0 %v2573
        %3692 = vmatpush.bf16.msra.mxu0 %v2569
        %3693 = vmatpush.bf16.msra.mxu0 %v2565
        %3694 = vmatpush.bf16.msra.mxu0 %v2561
        %3695 = vmatpush.bf16.msra.mxu0 %v2557
        %3696 = vmatpush.bf16.msra.mxu0 %v2553
        %3697 = vmatmul.bf16.gmra.mxu0 %v827
        %v3698 = vpop.f32.mrf.mxu0
        %v3699 = vadd.f32 %v3686, %v3698
        %v3700 = vpop.f32.mrf.mxu0
        %3701 = vdwg.mxu0
        %3702 = vmatpush.bf16.msra.mxu0 %v2613
        %3703 = vmatpush.bf16.msra.mxu0 %v2609
        %3704 = vmatpush.bf16.msra.mxu0 %v2605
        %3705 = vmatpush.bf16.msra.mxu0 %v2601
        %3706 = vmatpush.bf16.msra.mxu0 %v2597
        %3707 = vmatpush.bf16.msra.mxu0 %v2593
        %3708 = vmatpush.bf16.msra.mxu0 %v2589
        %3709 = vmatpush.bf16.msra.mxu0 %v2585
        %3710 = vmatmul.bf16.gmra.mxu0 %v828
        %v3711 = vpop.f32.mrf.mxu0
        %v3712 = vadd.f32 %v3699, %v3711
        %v3713 = vpop.f32.mrf.mxu0
        %3714 = vdwg.mxu0
        %3715 = vmatpush.bf16.msra.mxu0 %v2645
        %3716 = vmatpush.bf16.msra.mxu0 %v2641
        %3717 = vmatpush.bf16.msra.mxu0 %v2637
        %3718 = vmatpush.bf16.msra.mxu0 %v2633
        %3719 = vmatpush.bf16.msra.mxu0 %v2629
        %3720 = vmatpush.bf16.msra.mxu0 %v2625
        %3721 = vmatpush.bf16.msra.mxu0 %v2621
        %3722 = vmatpush.bf16.msra.mxu0 %v2617
        %3723 = vmatmul.bf16.gmra.mxu0 %v829
        %v3724 = vpop.f32.mrf.mxu0
        %v3725 = vadd.f32 %v3712, %v3724
        %v3726 = vpop.f32.mrf.mxu0
        %3727 = vdwg.mxu0
        %3728 = vmatpush.bf16.msra.mxu0 %v2677
        %3729 = vmatpush.bf16.msra.mxu0 %v2673
        %3730 = vmatpush.bf16.msra.mxu0 %v2669
        %3731 = vmatpush.bf16.msra.mxu0 %v2665
        %3732 = vmatpush.bf16.msra.mxu0 %v2661
        %3733 = vmatpush.bf16.msra.mxu0 %v2657
        %3734 = vmatpush.bf16.msra.mxu0 %v2653
        %3735 = vmatpush.bf16.msra.mxu0 %v2649
        %3736 = vmatmul.bf16.gmra.mxu0 %v832
        %v3737 = vpop.f32.mrf.mxu0
        %v3738 = vadd.f32 %v3725, %v3737
        %v3739 = vpop.f32.mrf.mxu0
        %3740 = vdwg.mxu0
        %3741 = vmatpush.bf16.msra.mxu0 %v2709
        %3742 = vmatpush.bf16.msra.mxu0 %v2705
        %3743 = vmatpush.bf16.msra.mxu0 %v2701
        %3744 = vmatpush.bf16.msra.mxu0 %v2697
        %3745 = vmatpush.bf16.msra.mxu0 %v2693
        %3746 = vmatpush.bf16.msra.mxu0 %v2689
        %3747 = vmatpush.bf16.msra.mxu0 %v2685
        %3748 = vmatpush.bf16.msra.mxu0 %v2681
        %3749 = vmatmul.bf16.gmra.mxu0 %v833
        %v3750 = vpop.f32.mrf.mxu0
        %v3751 = vadd.f32 %v3738, %v3750
        %v3752 = vpop.f32.mrf.mxu0
        %3753 = vdwg.mxu0
        %3754 = vmatpush.bf16.msra.mxu0 %v2741
        %3755 = vmatpush.bf16.msra.mxu0 %v2737
        %3756 = vmatpush.bf16.msra.mxu0 %v2733
        %3757 = vmatpush.bf16.msra.mxu0 %v2729
        %3758 = vmatpush.bf16.msra.mxu0 %v2725
        %3759 = vmatpush.bf16.msra.mxu0 %v2721
        %3760 = vmatpush.bf16.msra.mxu0 %v2717
        %3761 = vmatpush.bf16.msra.mxu0 %v2713
        %3762 = vmatmul.bf16.gmra.mxu0 %v834
        %v3763 = vpop.f32.mrf.mxu0
        %v3764 = vadd.f32 %v3751, %v3763
        %v3765 = vpop.f32.mrf.mxu0
        %3766 = vdwg.mxu0
        %3767 = vmatpush.bf16.msra.mxu0 %v2773
        %3768 = vmatpush.bf16.msra.mxu0 %v2769
        %3769 = vmatpush.bf16.msra.mxu0 %v2765
        %3770 = vmatpush.bf16.msra.mxu0 %v2761
        %3771 = vmatpush.bf16.msra.mxu0 %v2757
        %3772 = vmatpush.bf16.msra.mxu0 %v2753
        %3773 = vmatpush.bf16.msra.mxu0 %v2749
        %3774 = vmatpush.bf16.msra.mxu0 %v2745
        %3775 = vmatmul.bf16.gmra.mxu0 %v835
        %v3776 = vpop.f32.mrf.mxu0
        %v3777 = vadd.f32 %v3764, %v3776
        %v3778 = vpop.f32.mrf.mxu0
        %3779 = vdwg.mxu0
        %3780 = vmatpush.bf16.msra.mxu0 %v2805
        %3781 = vmatpush.bf16.msra.mxu0 %v2801
        %3782 = vmatpush.bf16.msra.mxu0 %v2797
        %3783 = vmatpush.bf16.msra.mxu0 %v2793
        %3784 = vmatpush.bf16.msra.mxu0 %v2789
        %3785 = vmatpush.bf16.msra.mxu0 %v2785
        %3786 = vmatpush.bf16.msra.mxu0 %v2781
        %3787 = vmatpush.bf16.msra.mxu0 %v2777
        %3788 = vmatmul.bf16.gmra.mxu0 %v836
        %v3789 = vpop.f32.mrf.mxu0
        %v3790 = vadd.f32 %v3777, %v3789
        %v3791 = vpop.f32.mrf.mxu0
        %3792 = vdwg.mxu0
        %3793 = vmatpush.bf16.msra.mxu0 %v2837
        %3794 = vmatpush.bf16.msra.mxu0 %v2833
        %3795 = vmatpush.bf16.msra.mxu0 %v2829
        %3796 = vmatpush.bf16.msra.mxu0 %v2825
        %3797 = vmatpush.bf16.msra.mxu0 %v2821
        %3798 = vmatpush.bf16.msra.mxu0 %v2817
        %3799 = vmatpush.bf16.msra.mxu0 %v2813
        %3800 = vmatpush.bf16.msra.mxu0 %v2809
        %3801 = vmatmul.bf16.gmra.mxu0 %v837
        %v3802 = vpop.f32.mrf.mxu0
        %v3803 = vadd.f32 %v3790, %v3802
        %v3804 = vpop.f32.mrf.mxu0
        %3805 = vdwg.mxu0
        %3806 = vmatpush.bf16.msra.mxu0 %v2869
        %3807 = vmatpush.bf16.msra.mxu0 %v2865
        %3808 = vmatpush.bf16.msra.mxu0 %v2861
        %3809 = vmatpush.bf16.msra.mxu0 %v2857
        %3810 = vmatpush.bf16.msra.mxu0 %v2853
        %3811 = vmatpush.bf16.msra.mxu0 %v2849
        %3812 = vmatpush.bf16.msra.mxu0 %v2845
        %3813 = vmatpush.bf16.msra.mxu0 %v2841
        %3814 = vmatmul.bf16.gmra.mxu0 %v838
        %v3815 = vpop.f32.mrf.mxu0
        %v3816 = vadd.f32 %v3803, %v3815
        %v3817 = vpop.f32.mrf.mxu0
        %3818 = vdwg.mxu0
        %3819 = vmatpush.bf16.msra.mxu0 %v2901
        %3820 = vmatpush.bf16.msra.mxu0 %v2897
        %3821 = vmatpush.bf16.msra.mxu0 %v2893
        %3822 = vmatpush.bf16.msra.mxu0 %v2889
        %3823 = vmatpush.bf16.msra.mxu0 %v2885
        %3824 = vmatpush.bf16.msra.mxu0 %v2881
        %3825 = vmatpush.bf16.msra.mxu0 %v2877
        %3826 = vmatpush.bf16.msra.mxu0 %v2873
        %3827 = vmatmul.bf16.gmra.mxu0 %v839
        %v3828 = vpop.f32.mrf.mxu0
        %v3829 = vadd.f32 %v3816, %v3828
        %v3830 = vpop.f32.mrf.mxu0
        %3831 = vdwg.mxu0
        %3832 = vmatpush.bf16.msra.mxu0 %v2422
        %3833 = vmatpush.bf16.msra.mxu0 %v2418
        %3834 = vmatpush.bf16.msra.mxu0 %v2414
        %3835 = vmatpush.bf16.msra.mxu0 %v2410
        %3836 = vmatpush.bf16.msra.mxu0 %v2406
        %3837 = vmatpush.bf16.msra.mxu0 %v2402
        %3838 = vmatpush.bf16.msra.mxu0 %v2398
        %3839 = vmatpush.bf16.msra.mxu0 %v2394
        %3840 = vmatmul.bf16.gmra.mxu0 %v822
        %v3841 = vpop.f32.mrf.mxu0
        %v3842 = vadd.f32 0.0, %v3841
        %v3843 = vpop.f32.mrf.mxu0
        %3844 = vdwg.mxu0
        %3845 = vmatpush.bf16.msra.mxu0 %v2454
        %3846 = vmatpush.bf16.msra.mxu0 %v2450
        %3847 = vmatpush.bf16.msra.mxu0 %v2446
        %3848 = vmatpush.bf16.msra.mxu0 %v2442
        %3849 = vmatpush.bf16.msra.mxu0 %v2438
        %3850 = vmatpush.bf16.msra.mxu0 %v2434
        %3851 = vmatpush.bf16.msra.mxu0 %v2430
        %3852 = vmatpush.bf16.msra.mxu0 %v2426
        %3853 = vmatmul.bf16.gmra.mxu0 %v823
        %v3854 = vpop.f32.mrf.mxu0
        %v3855 = vadd.f32 %v3842, %v3854
        %v3856 = vpop.f32.mrf.mxu0
        %3857 = vdwg.mxu0
        %3858 = vmatpush.bf16.msra.mxu0 %v2486
        %3859 = vmatpush.bf16.msra.mxu0 %v2482
        %3860 = vmatpush.bf16.msra.mxu0 %v2478
        %3861 = vmatpush.bf16.msra.mxu0 %v2474
        %3862 = vmatpush.bf16.msra.mxu0 %v2470
        %3863 = vmatpush.bf16.msra.mxu0 %v2466
        %3864 = vmatpush.bf16.msra.mxu0 %v2462
        %3865 = vmatpush.bf16.msra.mxu0 %v2458
        %3866 = vmatmul.bf16.gmra.mxu0 %v824
        %v3867 = vpop.f32.mrf.mxu0
        %v3868 = vadd.f32 %v3855, %v3867
        %v3869 = vpop.f32.mrf.mxu0
        %3870 = vdwg.mxu0
        %3871 = vmatpush.bf16.msra.mxu0 %v2518
        %3872 = vmatpush.bf16.msra.mxu0 %v2514
        %3873 = vmatpush.bf16.msra.mxu0 %v2510
        %3874 = vmatpush.bf16.msra.mxu0 %v2506
        %3875 = vmatpush.bf16.msra.mxu0 %v2502
        %3876 = vmatpush.bf16.msra.mxu0 %v2498
        %3877 = vmatpush.bf16.msra.mxu0 %v2494
        %3878 = vmatpush.bf16.msra.mxu0 %v2490
        %3879 = vmatmul.bf16.gmra.mxu0 %v825
        %v3880 = vpop.f32.mrf.mxu0
        %v3881 = vadd.f32 %v3868, %v3880
        %v3882 = vpop.f32.mrf.mxu0
        %3883 = vdwg.mxu0
        %3884 = vmatpush.bf16.msra.mxu0 %v2550
        %3885 = vmatpush.bf16.msra.mxu0 %v2546
        %3886 = vmatpush.bf16.msra.mxu0 %v2542
        %3887 = vmatpush.bf16.msra.mxu0 %v2538
        %3888 = vmatpush.bf16.msra.mxu0 %v2534
        %3889 = vmatpush.bf16.msra.mxu0 %v2530
        %3890 = vmatpush.bf16.msra.mxu0 %v2526
        %3891 = vmatpush.bf16.msra.mxu0 %v2522
        %3892 = vmatmul.bf16.gmra.mxu0 %v826
        %v3893 = vpop.f32.mrf.mxu0
        %v3894 = vadd.f32 %v3881, %v3893
        %v3895 = vpop.f32.mrf.mxu0
        %3896 = vdwg.mxu0
        %3897 = vmatpush.bf16.msra.mxu0 %v2582
        %3898 = vmatpush.bf16.msra.mxu0 %v2578
        %3899 = vmatpush.bf16.msra.mxu0 %v2574
        %3900 = vmatpush.bf16.msra.mxu0 %v2570
        %3901 = vmatpush.bf16.msra.mxu0 %v2566
        %3902 = vmatpush.bf16.msra.mxu0 %v2562
        %3903 = vmatpush.bf16.msra.mxu0 %v2558
        %3904 = vmatpush.bf16.msra.mxu0 %v2554
        %3905 = vmatmul.bf16.gmra.mxu0 %v827
        %v3906 = vpop.f32.mrf.mxu0
        %v3907 = vadd.f32 %v3894, %v3906
        %v3908 = vpop.f32.mrf.mxu0
        %3909 = vdwg.mxu0
        %3910 = vmatpush.bf16.msra.mxu0 %v2614
        %3911 = vmatpush.bf16.msra.mxu0 %v2610
        %3912 = vmatpush.bf16.msra.mxu0 %v2606
        %3913 = vmatpush.bf16.msra.mxu0 %v2602
        %3914 = vmatpush.bf16.msra.mxu0 %v2598
        %3915 = vmatpush.bf16.msra.mxu0 %v2594
        %3916 = vmatpush.bf16.msra.mxu0 %v2590
        %3917 = vmatpush.bf16.msra.mxu0 %v2586
        %3918 = vmatmul.bf16.gmra.mxu0 %v828
        %v3919 = vpop.f32.mrf.mxu0
        %v3920 = vadd.f32 %v3907, %v3919
        %v3921 = vpop.f32.mrf.mxu0
        %3922 = vdwg.mxu0
        %3923 = vmatpush.bf16.msra.mxu0 %v2646
        %3924 = vmatpush.bf16.msra.mxu0 %v2642
        %3925 = vmatpush.bf16.msra.mxu0 %v2638
        %3926 = vmatpush.bf16.msra.mxu0 %v2634
        %3927 = vmatpush.bf16.msra.mxu0 %v2630
        %3928 = vmatpush.bf16.msra.mxu0 %v2626
        %3929 = vmatpush.bf16.msra.mxu0 %v2622
        %3930 = vmatpush.bf16.msra.mxu0 %v2618
        %3931 = vmatmul.bf16.gmra.mxu0 %v829
        %v3932 = vpop.f32.mrf.mxu0
        %v3933 = vadd.f32 %v3920, %v3932
        %v3934 = vpop.f32.mrf.mxu0
        %3935 = vdwg.mxu0
        %3936 = vmatpush.bf16.msra.mxu0 %v2678
        %3937 = vmatpush.bf16.msra.mxu0 %v2674
        %3938 = vmatpush.bf16.msra.mxu0 %v2670
        %3939 = vmatpush.bf16.msra.mxu0 %v2666
        %3940 = vmatpush.bf16.msra.mxu0 %v2662
        %3941 = vmatpush.bf16.msra.mxu0 %v2658
        %3942 = vmatpush.bf16.msra.mxu0 %v2654
        %3943 = vmatpush.bf16.msra.mxu0 %v2650
        %3944 = vmatmul.bf16.gmra.mxu0 %v832
        %v3945 = vpop.f32.mrf.mxu0
        %v3946 = vadd.f32 %v3933, %v3945
        %v3947 = vpop.f32.mrf.mxu0
        %3948 = vdwg.mxu0
        %3949 = vmatpush.bf16.msra.mxu0 %v2710
        %3950 = vmatpush.bf16.msra.mxu0 %v2706
        %3951 = vmatpush.bf16.msra.mxu0 %v2702
        %3952 = vmatpush.bf16.msra.mxu0 %v2698
        %3953 = vmatpush.bf16.msra.mxu0 %v2694
        %3954 = vmatpush.bf16.msra.mxu0 %v2690
        %3955 = vmatpush.bf16.msra.mxu0 %v2686
        %3956 = vmatpush.bf16.msra.mxu0 %v2682
        %3957 = vmatmul.bf16.gmra.mxu0 %v833
        %v3958 = vpop.f32.mrf.mxu0
        %v3959 = vadd.f32 %v3946, %v3958
        %v3960 = vpop.f32.mrf.mxu0
        %3961 = vdwg.mxu0
        %3962 = vmatpush.bf16.msra.mxu0 %v2742
        %3963 = vmatpush.bf16.msra.mxu0 %v2738
        %3964 = vmatpush.bf16.msra.mxu0 %v2734
        %3965 = vmatpush.bf16.msra.mxu0 %v2730
        %3966 = vmatpush.bf16.msra.mxu0 %v2726
        %3967 = vmatpush.bf16.msra.mxu0 %v2722
        %3968 = vmatpush.bf16.msra.mxu0 %v2718
        %3969 = vmatpush.bf16.msra.mxu0 %v2714
        %3970 = vmatmul.bf16.gmra.mxu0 %v834
        %v3971 = vpop.f32.mrf.mxu0
        %v3972 = vadd.f32 %v3959, %v3971
        %v3973 = vpop.f32.mrf.mxu0
        %3974 = vdwg.mxu0
        %3975 = vmatpush.bf16.msra.mxu0 %v2774
        %3976 = vmatpush.bf16.msra.mxu0 %v2770
        %3977 = vmatpush.bf16.msra.mxu0 %v2766
        %3978 = vmatpush.bf16.msra.mxu0 %v2762
        %3979 = vmatpush.bf16.msra.mxu0 %v2758
        %3980 = vmatpush.bf16.msra.mxu0 %v2754
        %3981 = vmatpush.bf16.msra.mxu0 %v2750
        %3982 = vmatpush.bf16.msra.mxu0 %v2746
        %3983 = vmatmul.bf16.gmra.mxu0 %v835
        %v3984 = vpop.f32.mrf.mxu0
        %v3985 = vadd.f32 %v3972, %v3984
        %v3986 = vpop.f32.mrf.mxu0
        %3987 = vdwg.mxu0
        %3988 = vmatpush.bf16.msra.mxu0 %v2806
        %3989 = vmatpush.bf16.msra.mxu0 %v2802
        %3990 = vmatpush.bf16.msra.mxu0 %v2798
        %3991 = vmatpush.bf16.msra.mxu0 %v2794
        %3992 = vmatpush.bf16.msra.mxu0 %v2790
        %3993 = vmatpush.bf16.msra.mxu0 %v2786
        %3994 = vmatpush.bf16.msra.mxu0 %v2782
        %3995 = vmatpush.bf16.msra.mxu0 %v2778
        %3996 = vmatmul.bf16.gmra.mxu0 %v836
        %v3997 = vpop.f32.mrf.mxu0
        %v3998 = vadd.f32 %v3985, %v3997
        %v3999 = vpop.f32.mrf.mxu0
        %4000 = vdwg.mxu0
        %4001 = vmatpush.bf16.msra.mxu0 %v2838
        %4002 = vmatpush.bf16.msra.mxu0 %v2834
        %4003 = vmatpush.bf16.msra.mxu0 %v2830
        %4004 = vmatpush.bf16.msra.mxu0 %v2826
        %4005 = vmatpush.bf16.msra.mxu0 %v2822
        %4006 = vmatpush.bf16.msra.mxu0 %v2818
        %4007 = vmatpush.bf16.msra.mxu0 %v2814
        %4008 = vmatpush.bf16.msra.mxu0 %v2810
        %4009 = vmatmul.bf16.gmra.mxu0 %v837
        %v4010 = vpop.f32.mrf.mxu0
        %v4011 = vadd.f32 %v3998, %v4010
        %v4012 = vpop.f32.mrf.mxu0
        %4013 = vdwg.mxu0
        %4014 = vmatpush.bf16.msra.mxu0 %v2870
        %4015 = vmatpush.bf16.msra.mxu0 %v2866
        %4016 = vmatpush.bf16.msra.mxu0 %v2862
        %4017 = vmatpush.bf16.msra.mxu0 %v2858
        %4018 = vmatpush.bf16.msra.mxu0 %v2854
        %4019 = vmatpush.bf16.msra.mxu0 %v2850
        %4020 = vmatpush.bf16.msra.mxu0 %v2846
        %4021 = vmatpush.bf16.msra.mxu0 %v2842
        %4022 = vmatmul.bf16.gmra.mxu0 %v838
        %v4023 = vpop.f32.mrf.mxu0
        %v4024 = vadd.f32 %v4011, %v4023
        %v4025 = vpop.f32.mrf.mxu0
        %4026 = vdwg.mxu0
        %4027 = vmatpush.bf16.msra.mxu0 %v2902
        %4028 = vmatpush.bf16.msra.mxu0 %v2898
        %4029 = vmatpush.bf16.msra.mxu0 %v2894
        %4030 = vmatpush.bf16.msra.mxu0 %v2890
        %4031 = vmatpush.bf16.msra.mxu0 %v2886
        %4032 = vmatpush.bf16.msra.mxu0 %v2882
        %4033 = vmatpush.bf16.msra.mxu0 %v2878
        %4034 = vmatpush.bf16.msra.mxu0 %v2874
        %4035 = vmatmul.bf16.gmra.mxu0 %v839
        %v4036 = vpop.f32.mrf.mxu0
        %v4037 = vadd.f32 %v4024, %v4036
        %v4038 = vpop.f32.mrf.mxu0
        %4039 = vdwg.mxu0
        %4040 = vmatpush.bf16.msra.mxu0 %v2423
        %4041 = vmatpush.bf16.msra.mxu0 %v2419
        %4042 = vmatpush.bf16.msra.mxu0 %v2415
        %4043 = vmatpush.bf16.msra.mxu0 %v2411
        %4044 = vmatpush.bf16.msra.mxu0 %v2407
        %4045 = vmatpush.bf16.msra.mxu0 %v2403
        %4046 = vmatpush.bf16.msra.mxu0 %v2399
        %4047 = vmatpush.bf16.msra.mxu0 %v2395
        %4048 = vmatmul.bf16.gmra.mxu0 %v822
        %v4049 = vpop.f32.mrf.mxu0
        %v4050 = vadd.f32 0.0, %v4049
        %v4051 = vpop.f32.mrf.mxu0
        %4052 = vdwg.mxu0
        %4053 = vmatpush.bf16.msra.mxu0 %v2455
        %4054 = vmatpush.bf16.msra.mxu0 %v2451
        %4055 = vmatpush.bf16.msra.mxu0 %v2447
        %4056 = vmatpush.bf16.msra.mxu0 %v2443
        %4057 = vmatpush.bf16.msra.mxu0 %v2439
        %4058 = vmatpush.bf16.msra.mxu0 %v2435
        %4059 = vmatpush.bf16.msra.mxu0 %v2431
        %4060 = vmatpush.bf16.msra.mxu0 %v2427
        %4061 = vmatmul.bf16.gmra.mxu0 %v823
        %v4062 = vpop.f32.mrf.mxu0
        %v4063 = vadd.f32 %v4050, %v4062
        %v4064 = vpop.f32.mrf.mxu0
        %4065 = vdwg.mxu0
        %4066 = vmatpush.bf16.msra.mxu0 %v2487
        %4067 = vmatpush.bf16.msra.mxu0 %v2483
        %4068 = vmatpush.bf16.msra.mxu0 %v2479
        %4069 = vmatpush.bf16.msra.mxu0 %v2475
        %4070 = vmatpush.bf16.msra.mxu0 %v2471
        %4071 = vmatpush.bf16.msra.mxu0 %v2467
        %4072 = vmatpush.bf16.msra.mxu0 %v2463
        %4073 = vmatpush.bf16.msra.mxu0 %v2459
        %4074 = vmatmul.bf16.gmra.mxu0 %v824
        %v4075 = vpop.f32.mrf.mxu0
        %v4076 = vadd.f32 %v4063, %v4075
        %v4077 = vpop.f32.mrf.mxu0
        %4078 = vdwg.mxu0
        %4079 = vmatpush.bf16.msra.mxu0 %v2519
        %4080 = vmatpush.bf16.msra.mxu0 %v2515
        %4081 = vmatpush.bf16.msra.mxu0 %v2511
        %4082 = vmatpush.bf16.msra.mxu0 %v2507
        %4083 = vmatpush.bf16.msra.mxu0 %v2503
        %4084 = vmatpush.bf16.msra.mxu0 %v2499
        %4085 = vmatpush.bf16.msra.mxu0 %v2495
        %4086 = vmatpush.bf16.msra.mxu0 %v2491
        %4087 = vmatmul.bf16.gmra.mxu0 %v825
        %v4088 = vpop.f32.mrf.mxu0
        %v4089 = vadd.f32 %v4076, %v4088
        %v4090 = vpop.f32.mrf.mxu0
        %4091 = vdwg.mxu0
        %4092 = vmatpush.bf16.msra.mxu0 %v2551
        %4093 = vmatpush.bf16.msra.mxu0 %v2547
        %4094 = vmatpush.bf16.msra.mxu0 %v2543
        %4095 = vmatpush.bf16.msra.mxu0 %v2539
        %4096 = vmatpush.bf16.msra.mxu0 %v2535
        %4097 = vmatpush.bf16.msra.mxu0 %v2531
        %4098 = vmatpush.bf16.msra.mxu0 %v2527
        %4099 = vmatpush.bf16.msra.mxu0 %v2523
        %4100 = vmatmul.bf16.gmra.mxu0 %v826
        %v4101 = vpop.f32.mrf.mxu0
        %v4102 = vadd.f32 %v4089, %v4101
        %v4103 = vpop.f32.mrf.mxu0
        %4104 = vdwg.mxu0
        %4105 = vmatpush.bf16.msra.mxu0 %v2583
        %4106 = vmatpush.bf16.msra.mxu0 %v2579
        %4107 = vmatpush.bf16.msra.mxu0 %v2575
        %4108 = vmatpush.bf16.msra.mxu0 %v2571
        %4109 = vmatpush.bf16.msra.mxu0 %v2567
        %4110 = vmatpush.bf16.msra.mxu0 %v2563
        %4111 = vmatpush.bf16.msra.mxu0 %v2559
        %4112 = vmatpush.bf16.msra.mxu0 %v2555
        %4113 = vmatmul.bf16.gmra.mxu0 %v827
        %v4114 = vpop.f32.mrf.mxu0
        %v4115 = vadd.f32 %v4102, %v4114
        %v4116 = vpop.f32.mrf.mxu0
        %4117 = vdwg.mxu0
        %4118 = vmatpush.bf16.msra.mxu0 %v2615
        %4119 = vmatpush.bf16.msra.mxu0 %v2611
        %4120 = vmatpush.bf16.msra.mxu0 %v2607
        %4121 = vmatpush.bf16.msra.mxu0 %v2603
        %4122 = vmatpush.bf16.msra.mxu0 %v2599
        %4123 = vmatpush.bf16.msra.mxu0 %v2595
        %4124 = vmatpush.bf16.msra.mxu0 %v2591
        %4125 = vmatpush.bf16.msra.mxu0 %v2587
        %4126 = vmatmul.bf16.gmra.mxu0 %v828
        %v4127 = vpop.f32.mrf.mxu0
        %v4128 = vadd.f32 %v4115, %v4127
        %v4129 = vpop.f32.mrf.mxu0
        %4130 = vdwg.mxu0
        %4131 = vmatpush.bf16.msra.mxu0 %v2647
        %4132 = vmatpush.bf16.msra.mxu0 %v2643
        %4133 = vmatpush.bf16.msra.mxu0 %v2639
        %4134 = vmatpush.bf16.msra.mxu0 %v2635
        %4135 = vmatpush.bf16.msra.mxu0 %v2631
        %4136 = vmatpush.bf16.msra.mxu0 %v2627
        %4137 = vmatpush.bf16.msra.mxu0 %v2623
        %4138 = vmatpush.bf16.msra.mxu0 %v2619
        %4139 = vmatmul.bf16.gmra.mxu0 %v829
        %v4140 = vpop.f32.mrf.mxu0
        %v4141 = vadd.f32 %v4128, %v4140
        %v4142 = vpop.f32.mrf.mxu0
        %4143 = vdwg.mxu0
        %4144 = vmatpush.bf16.msra.mxu0 %v2679
        %4145 = vmatpush.bf16.msra.mxu0 %v2675
        %4146 = vmatpush.bf16.msra.mxu0 %v2671
        %4147 = vmatpush.bf16.msra.mxu0 %v2667
        %4148 = vmatpush.bf16.msra.mxu0 %v2663
        %4149 = vmatpush.bf16.msra.mxu0 %v2659
        %4150 = vmatpush.bf16.msra.mxu0 %v2655
        %4151 = vmatpush.bf16.msra.mxu0 %v2651
        %4152 = vmatmul.bf16.gmra.mxu0 %v832
        %v4153 = vpop.f32.mrf.mxu0
        %v4154 = vadd.f32 %v4141, %v4153
        %v4155 = vpop.f32.mrf.mxu0
        %4156 = vdwg.mxu0
        %4157 = vmatpush.bf16.msra.mxu0 %v2711
        %4158 = vmatpush.bf16.msra.mxu0 %v2707
        %4159 = vmatpush.bf16.msra.mxu0 %v2703
        %4160 = vmatpush.bf16.msra.mxu0 %v2699
        %4161 = vmatpush.bf16.msra.mxu0 %v2695
        %4162 = vmatpush.bf16.msra.mxu0 %v2691
        %4163 = vmatpush.bf16.msra.mxu0 %v2687
        %4164 = vmatpush.bf16.msra.mxu0 %v2683
        %4165 = vmatmul.bf16.gmra.mxu0 %v833
        %v4166 = vpop.f32.mrf.mxu0
        %v4167 = vadd.f32 %v4154, %v4166
        %v4168 = vpop.f32.mrf.mxu0
        %4169 = vdwg.mxu0
        %4170 = vmatpush.bf16.msra.mxu0 %v2743
        %4171 = vmatpush.bf16.msra.mxu0 %v2739
        %4172 = vmatpush.bf16.msra.mxu0 %v2735
        %4173 = vmatpush.bf16.msra.mxu0 %v2731
        %4174 = vmatpush.bf16.msra.mxu0 %v2727
        %4175 = vmatpush.bf16.msra.mxu0 %v2723
        %4176 = vmatpush.bf16.msra.mxu0 %v2719
        %4177 = vmatpush.bf16.msra.mxu0 %v2715
        %4178 = vmatmul.bf16.gmra.mxu0 %v834
        %v4179 = vpop.f32.mrf.mxu0
        %v4180 = vadd.f32 %v4167, %v4179
        %v4181 = vpop.f32.mrf.mxu0
        %4182 = vdwg.mxu0
        %4183 = vmatpush.bf16.msra.mxu0 %v2775
        %4184 = vmatpush.bf16.msra.mxu0 %v2771
        %4185 = vmatpush.bf16.msra.mxu0 %v2767
        %4186 = vmatpush.bf16.msra.mxu0 %v2763
        %4187 = vmatpush.bf16.msra.mxu0 %v2759
        %4188 = vmatpush.bf16.msra.mxu0 %v2755
        %4189 = vmatpush.bf16.msra.mxu0 %v2751
        %4190 = vmatpush.bf16.msra.mxu0 %v2747
        %4191 = vmatmul.bf16.gmra.mxu0 %v835
        %v4192 = vpop.f32.mrf.mxu0
        %v4193 = vadd.f32 %v4180, %v4192
        %v4194 = vpop.f32.mrf.mxu0
        %4195 = vdwg.mxu0
        %4196 = vmatpush.bf16.msra.mxu0 %v2807
        %4197 = vmatpush.bf16.msra.mxu0 %v2803
        %4198 = vmatpush.bf16.msra.mxu0 %v2799
        %4199 = vmatpush.bf16.msra.mxu0 %v2795
        %4200 = vmatpush.bf16.msra.mxu0 %v2791
        %4201 = vmatpush.bf16.msra.mxu0 %v2787
        %4202 = vmatpush.bf16.msra.mxu0 %v2783
        %4203 = vmatpush.bf16.msra.mxu0 %v2779
        %4204 = vmatmul.bf16.gmra.mxu0 %v836
        %v4205 = vpop.f32.mrf.mxu0
        %v4206 = vadd.f32 %v4193, %v4205
        %v4207 = vpop.f32.mrf.mxu0
        %4208 = vdwg.mxu0
        %4209 = vmatpush.bf16.msra.mxu0 %v2839
        %4210 = vmatpush.bf16.msra.mxu0 %v2835
        %4211 = vmatpush.bf16.msra.mxu0 %v2831
        %4212 = vmatpush.bf16.msra.mxu0 %v2827
        %4213 = vmatpush.bf16.msra.mxu0 %v2823
        %4214 = vmatpush.bf16.msra.mxu0 %v2819
        %4215 = vmatpush.bf16.msra.mxu0 %v2815
        %4216 = vmatpush.bf16.msra.mxu0 %v2811
        %4217 = vmatmul.bf16.gmra.mxu0 %v837
        %v4218 = vpop.f32.mrf.mxu0
        %v4219 = vadd.f32 %v4206, %v4218
        %v4220 = vpop.f32.mrf.mxu0
        %4221 = vdwg.mxu0
        %4222 = vmatpush.bf16.msra.mxu0 %v2871
        %4223 = vmatpush.bf16.msra.mxu0 %v2867
        %4224 = vmatpush.bf16.msra.mxu0 %v2863
        %4225 = vmatpush.bf16.msra.mxu0 %v2859
        %4226 = vmatpush.bf16.msra.mxu0 %v2855
        %4227 = vmatpush.bf16.msra.mxu0 %v2851
        %4228 = vmatpush.bf16.msra.mxu0 %v2847
        %4229 = vmatpush.bf16.msra.mxu0 %v2843
        %4230 = vmatmul.bf16.gmra.mxu0 %v838
        %v4231 = vpop.f32.mrf.mxu0
        %v4232 = vadd.f32 %v4219, %v4231
        %v4233 = vpop.f32.mrf.mxu0
        %4234 = vdwg.mxu0
        %4235 = vmatpush.bf16.msra.mxu0 %v2903
        %4236 = vmatpush.bf16.msra.mxu0 %v2899
        %4237 = vmatpush.bf16.msra.mxu0 %v2895
        %4238 = vmatpush.bf16.msra.mxu0 %v2891
        %4239 = vmatpush.bf16.msra.mxu0 %v2887
        %4240 = vmatpush.bf16.msra.mxu0 %v2883
        %4241 = vmatpush.bf16.msra.mxu0 %v2879
        %4242 = vmatpush.bf16.msra.mxu0 %v2875
        %4243 = vmatmul.bf16.gmra.mxu0 %v839
        %v4244 = vpop.f32.mrf.mxu0
        %v4245 = vadd.f32 %v4232, %v4244
        %v4246 = vpop.f32.mrf.mxu0
        %4247 = vdwg.mxu0
        %v4252 = vrot.slane %v3829, 6
        %v4253 = vrot.slane %v4037, 4
        %v4254 = vrot.slane %v4245, 2
        %vm4255 = vcmask 1041408
        %v4256 = vsel %vm4255, %v3621, %v4252
        %vm4257 = vcmask 1045508
        %v4258 = vsel %vm4257, %v4253, %v4254
        %vm4259 = vcmask 1043456
        %v4260 = vsel %vm4259, %v4256, %v4258
        %v4262 = vadd.f32 %v305, %v4260
        %4263 = vst [vmem:[%s278] sm:$0xff] %v4262
        %s4264 = sand.u32 %s132, 1
        %s4265 = scalar_lea.sflag [#allocation4], %s4264
        %s4266 = sand.u32 %s132, 1
        %s4267 = smul.addr %s4266, 8
        %s4268 = scalar_lea.vmem [#allocation8], %s4267
        // Predicated region
        $region49: #{tpu_custom_call.1} parent=31 // pred_check
          %p4269 = pneg %p142
        $region50: #{tpu_custom_call.1} parent=31 // pred_check_branch
          %4271 = sbr.rel (%p4269) target = $region52
        $region51: #{tpu_custom_call.1} parent=31 // pred_region
          %s4272 = smul.u32 4, %s27
          %4274 = vsyncadd %s4265, 0
          %s4275 = smul.addr %s26, 8
          %s4276 = sadd.s32 %s4272, %s4275
          %s4277 = smul.addr %s4276, 2
          %s4278 = scalar_lea.hbm %s3, %s4277
          %s4280 = sshll.u32 %s4268, 4
          %s4281 = int_to_ptr.vmem [resolvable:$true] %s4280
          %s4282 = sshll.u32 %s4278, 4
          %s4283 = int_to_ptr.hbm [resolvable:$true] %s4282
          %4285 = dma.vmem_to_hbm [thread:$0]  %s4281, 128, %s4283, %s4265
        $region52: #{tpu_custom_call.1} parent=31 // pred_fallthru
          _
      $region32: #{tpu_custom_call.1} parent=5 // pred_fallthru
        _
      %p4286 = scmp.le.s32.totalorder 2, %s16
      // Predicated region
      $region53: #{tpu_custom_call.1} parent=5 // pred_check
        %p4287 = pneg %p4286
      $region54: #{tpu_custom_call.1} parent=5 // pred_check_branch
        %4289 = sbr.rel (%p4287) target = $region56
      $region55: #{tpu_custom_call.1} parent=5 // pred_region
        %s4290 = ssub.s32 %s16, 2
        // Predicated region
        $region57: #{tpu_custom_call.1} parent=55 // pred_check
          %p4291 = pneg %p148
        $region58: #{tpu_custom_call.1} parent=55 // pred_check_branch
          %4293 = sbr.rel (%p4291) target = $region60
        $region59: #{tpu_custom_call.1} parent=55 // pred_region
          %s4294 = sand.u32 %s133, 1
          %s4295 = scalar_lea.sflag [#allocation4], %s4294
          %s4296 = sand.u32 %s133, 1
          %s4297 = smul.addr %s4296, 8
          %s4298 = scalar_lea.vmem [#allocation8], %s4297
          %4300 = dma.done %s4295, 128
        $region60: #{tpu_custom_call.1} parent=55 // pred_fallthru
          _
      $region56: #{tpu_custom_call.1} parent=5 // pred_fallthru
        _
    $region6: #{tpu_custom_call.1} parent=1 // loop_footer
      %s20 = sadd.s32 1, %s16
    $region7: #{tpu_custom_call.1} parent=1 // loop_footer_branch
      %15 = sbr.rel target = $region3
    $region8: #{tpu_custom_call.1} parent=1 // loop_exit
      _
    %4301 = vsyncpa [#allocation3], 1
    %s4302 = scalar_lea.sflag [#allocation3], 1
    %4303 = vsyncpa %s4302, 1
    %4304 = vsyncpa [#allocation6], 1
    %s4305 = scalar_lea.sflag [#allocation6], 1
    %4306 = vsyncpa %s4305, 1
    %4307 = vsyncpa [#allocation4], 1
    %s4308 = scalar_lea.sflag [#allocation4], 1
    %4309 = vsyncpa %s4308, 1

</llo_original>
